<compile_context>
chip_gen: v7x
topology: tpu7x:2x2x1
jax: 0.10.0
libtpu: 0.0.40
codegen_flags: <defaults>
</compile_context>

<pallas_src>
import functools

import numpy as np
import jax
import jax.numpy as jnp
from jax.experimental import pallas as pl
from jax.experimental.pallas import tpu as pltpu

NUM_RES_BLOCKS = 15     # matches PIDN default
HIDDEN = 64             # matches PIDN hidden width
BN_EPS = 1e-5


# ---------------------------------------------------------------------------
# Pallas kernel
# ---------------------------------------------------------------------------
def pidn_kernel(x_ref, w_in_ref, b_in_ref, w_res_ref, b_res_ref,
                w_out_ref, b_out_ref, o_ref, *, L, split_dots):
    M, Cin = x_ref.shape            # M = B_TILE * L (batch-merged rows), Cin channels

    # Hoisted boundary masks (computed ONCE, reused by every conv in the kernel).
    pos = jax.lax.broadcasted_iota(jnp.int32, (M, 1), 0) % L
    keep_prev_col = pos != 0                    # row l==0   -> x[l-1] is zero padding
    keep_next_col = pos != (L - 1)              # row l==L-1 -> x[l+1] is zero padding
    # Full-width multiplicative masks for the 64-ch hidden path: a single broadcast each,
    # instead of 60+ un-CSE'd (M,1)->(M,64) broadcasts inside jnp.where per conv.
    mprev = jnp.broadcast_to(keep_prev_col.astype(jnp.float32), (M, HIDDEN))
    mnext = jnp.broadcast_to(keep_next_col.astype(jnp.float32), (M, HIDDEN))

    def taps64(h):
        """x[l-1], x[l+1] for a (M,64) f32 slab via sublane rolls; rows that wrapped across
        batch-segment boundaries are zeroed by the hoisted masks (preserves sample isolation)."""
        hp = pltpu.roll(h, shift=1, axis=0) * mprev
        hn = pltpu.roll(h, shift=M - 1, axis=0) * mnext
        return hp, hn

    def conv_k3(h, w_flat, b):
        """Conv1d(k=3,p=1), 64->64 on the MXU (bf16 inputs, f32 accumulation)."""
        hp, hn = taps64(h)
        hp = hp.astype(jnp.bfloat16)
        hc = h.astype(jnp.bfloat16)
        hn = hn.astype(jnp.bfloat16)
        if split_dots:
            # v7x: three accumulated 64x64 dots -> no (M,192) lane concat; MXU has huge slack.
            acc = jnp.dot(hp, w_flat[:HIDDEN], preferred_element_type=jnp.float32)
            acc = acc + jnp.dot(hc, w_flat[HIDDEN:2 * HIDDEN],
                                preferred_element_type=jnp.float32)
            acc = acc + jnp.dot(hn, w_flat[2 * HIDDEN:],
                                preferred_element_type=jnp.float32)
        else:
            # v5e/v6e: one fused (M,192)@(192,64) dot; concat done in bf16 (half the bytes).
            hcat = jnp.concatenate([hp, hc, hn], axis=-1)
            acc = jnp.dot(hcat, w_flat, preferred_element_type=jnp.float32)
        return acc + b

    # --- down_sampling: Conv1d(Cin -> 64) + ReLU, on the VPU (K=Cin is tiny) ----------
    x = x_ref[...]                                  # (M, Cin) f32
    xp = jnp.where(keep_prev_col, pltpu.roll(x, shift=1, axis=0), 0.0)
    xn = jnp.where(keep_next_col, pltpu.roll(x, shift=M - 1, axis=0), 0.0)
    w_in = w_in_ref[...]                            # (3, Cin, 64) f32
    acc = jnp.zeros((M, HIDDEN), jnp.float32)
    for ci in range(Cin):                           # outer products, broadcast over lanes
        acc = (acc
               + xp[:, ci:ci + 1] * w_in[0, ci]
               + x[:, ci:ci + 1] * w_in[1, ci]
               + xn[:, ci:ci + 1] * w_in[2, ci])
    h = jnp.maximum(acc + b_in_ref[...], 0.0)       # (M, 64) f32
    identity = h

    # --- res_blocks: 15 x [Conv -> (folded BN) -> ReLU -> Conv -> (folded BN)] --------
    # fori_loop bounds live ranges (no fully-unrolled 31-conv trace at large M); weights and
    # biases are dynamically indexed along the leading (non-tiled) axis of their VMEM refs.
    def block_body(i, h):
        i1 = 2 * i
        i2 = i1 + 1
        t = jnp.maximum(conv_k3(h, w_res_ref[i1], b_res_ref[i1]), 0.0)
        return conv_k3(t, w_res_ref[i2], b_res_ref[i2])

    h = jax.lax.fori_loop(0, NUM_RES_BLOCKS, block_body, h)

    h = h + identity                                # global residual (f32)

    # --- conv_out: Conv1d(64 -> Cin) + Sigmoid, VPU mul + lane reduction (Cin tiny) ---
    hp, hn = taps64(h)
    w_out = w_out_ref[...]                          # (3, Cin, 64) f32 (pre-transposed)
    cols = []
    for co in range(Cin):
        a = hp * w_out[0, co] + h * w_out[1, co] + hn * w_out[2, co]     # (M, 64)
        cols.append(jnp.sum(a, axis=-1, keepdims=True))                  # (M, 1)
    y = cols[0] if Cin == 1 else jnp.concatenate(cols, axis=-1)
    o_ref[...] = jax.nn.sigmoid(y + b_out_ref[...])


# ---------------------------------------------------------------------------
# Wrapper
# ---------------------------------------------------------------------------
def _auto_b_tile(N, L):
    """Target M = b_tile*L ~ 2048 rows; keep >= 2 grid steps when N >= 2 (v7x dual-TC).
    The extra grid step costs only ~0.35us on single-TC chips."""
    if L % 8 != 0:
        return N                       # single full-block step avoids the (8,128) constraint
    bt = max(1, min(N, 2048 // max(L, 1)))
    if N >= 2:
        bt = min(bt, (N + 1) // 2)     # ceil(N/2) -> at least 2 grid steps
    return max(1, bt)


def _auto_split_dots():
    """Use three MRB-accumulated 64x64 dots on v7x; fused (M,192) dot elsewhere."""
    try:
        kind = jax.devices()[0].device_kind.lower()
        return "7" in kind
    except Exception:
        return False


def pidn_forward(x_ncl, folded_params, b_tile=None, split_dots=None):
    """x_ncl: (N, Cin, L) float32 (PyTorch layout) -> (N, Cin, L) float32."""
    (w_in, b_in, w_res_flat, b_res, w_out_t, b_out) = folded_params
    N, Cin, L = x_ncl.shape

    if b_tile is None:
        b_tile = _auto_b_tile(N, L)
    b_tile = max(1, min(b_tile, N))
    if (b_tile * L) % 8 != 0:
        b_tile = N                     # fall back to a single full block
    if split_dots is None:
        split_dots = _auto_split_dots()

    pad = (-N) % b_tile
    Np = N + pad

    # Layout plumbing stays outside the kernel: NCL -> NLC -> flat (Np*L, Cin).
    x_nlc = jnp.transpose(x_ncl, (0, 2, 1))
    if pad:
        x_nlc = jnp.pad(x_nlc, ((0, pad), (0, 0), (0, 0)))
    x_flat = x_nlc.reshape(Np * L, Cin)

    # bf16 weights for the MXU path (accumulation stays f32 inside the kernel).
    w_res_bf16 = w_res_flat.astype(jnp.bfloat16)

    M = b_tile * L
    kernel = functools.partial(pidn_kernel, L=L, split_dots=bool(split_dots))

    def full_spec(a):
        nd = a.ndim
        return pl.BlockSpec(a.shape, lambda n, nd=nd: (0,) * nd)

    y_flat = pl.pallas_call(
        kernel,
        out_shape=jax.ShapeDtypeStruct((Np * L, Cin), jnp.float32),
        grid=(Np // b_tile,),
        in_specs=[
            pl.BlockSpec((M, Cin), lambda n: (n, 0)),        # batch-tile of activations
            full_spec(w_in), full_spec(b_in),
            full_spec(w_res_bf16), full_spec(b_res),
            full_spec(w_out_t), full_spec(b_out),
        ],
        out_specs=pl.BlockSpec((M, Cin), lambda n: (n, 0)),
        compiler_params=pltpu.CompilerParams(
            dimension_semantics=("parallel",),
            vmem_limit_bytes=48 * 1024 * 1024,               # safe on v5e/v6e/v7x
        ),
    )(x_flat, w_in, b_in, w_res_bf16, b_res, w_out_t, b_out)

    y = y_flat.reshape(Np, L, Cin)[:N]
    return jnp.transpose(y, (0, 2, 1))                       # back to PyTorch NCL


# ---------------------------------------------------------------------------
# Deterministic synthetic parameters (PyTorch-like uniform fan-in bounds)
# ---------------------------------------------------------------------------
def init_raw_params(key, in_channels=1):
    nconv = 2 * NUM_RES_BLOCKS
    ks = jax.random.split(key, 8)

    def u(k, shape, bound):
        return jax.random.uniform(k, shape, jnp.float32, -bound, bound)

    bi = 1.0 / np.sqrt(in_channels * 3)
    bh = 1.0 / np.sqrt(HIDDEN * 3)

    return dict(
        # conv weights stored as (tap, Cin, Cout); tap order [x[l-1], x[l], x[l+1]]
        w_in=u(ks[0], (3, in_channels, HIDDEN), bi),
        b_in=u(ks[1], (1, HIDDEN), bi),
        w_res=u(ks[2], (nconv, 3, HIDDEN, HIDDEN), bh),
        b_res=u(ks[3], (nconv, HIDDEN), bh),
        gamma=jax.random.uniform(ks[4], (nconv, HIDDEN), jnp.float32, 0.5, 1.5),
        beta=u(ks[5], (nconv, HIDDEN), 0.1),
        running_mean=jnp.zeros((nconv, HIDDEN), jnp.float32),
        running_var=jnp.ones((nconv, HIDDEN), jnp.float32),
        w_out=u(ks[6], (3, HIDDEN, in_channels), bh),
        b_out=u(ks[7], (1, in_channels), bh),
    )


def fold_params(raw):
    """Fold inference-mode BN into the conv weights/biases and flatten the 3 taps into
    a single (3*C, Cout) contraction axis (rows ordered [x[l-1] | x[l] | x[l+1]]).
    b_res stays (nconv, 1, 64): the (1,64) trailing tile pads 16x in VMEM (~120 KiB total)
    but keeps leading-dim dynamic indexing in the robust 3-D-ref case."""
    nconv = raw["w_res"].shape[0]
    scale = raw["gamma"] / jnp.sqrt(raw["running_var"] + BN_EPS)       # (nconv, 64)
    shift = raw["beta"] - raw["running_mean"] * scale
    w_fold = raw["w_res"] * scale[:, None, None, :]                    # scale Cout axis
    b_fold = raw["b_res"] * scale + shift
    w_res_flat = w_fold.reshape(nconv, 3 * HIDDEN, HIDDEN)             # (nconv, 192, 64)
    b_res = b_fold[:, None, :]                                         # (nconv, 1, 64)
    w_out_t = jnp.transpose(raw["w_out"], (0, 2, 1))                   # (3, Cin, 64)
    return (raw["w_in"], raw["b_in"], w_res_flat, b_res, w_out_t, raw["b_out"])


# ---------------------------------------------------------------------------
# Pure-JAX references
# ---------------------------------------------------------------------------
def ref_forward(x_ncl, folded_params, use_bf16=True):
    """use_bf16=True mirrors the kernel's bf16 matmul inputs; False = full-f32 semantics."""
    (w_in, b_in, w_res_flat, b_res, w_out_t, b_out) = folded_params
    cast = (lambda a: a.astype(jnp.bfloat16)) if use_bf16 else (lambda a: a)
    prec = None if use_bf16 else jax.lax.Precision.HIGHEST

    def conv_flat(h, w_flat, b):
        hp = jnp.pad(h, ((1, 1), (0, 0)))
        hcat = jnp.concatenate([hp[:-2], hp[1:-1], hp[2:]], axis=-1)
        return jnp.dot(cast(hcat), cast(w_flat),
                       preferred_element_type=jnp.float32, precision=prec) + b

    def one(x):                                    # x: (L, Cin)
        L, cin = x.shape
        xp = jnp.pad(x, ((1, 1), (0, 0)))
        taps = (xp[:-2], xp[1:-1], xp[2:])
        h = jnp.zeros((L, HIDDEN), jnp.float32)
        for ci in range(cin):
            h = (h + taps[0][:, ci:ci + 1] * w_in[0, ci]
                 + taps[1][:, ci:ci + 1] * w_in[1, ci]
                 + taps[2][:, ci:ci + 1] * w_in[2, ci])
        h = jnp.maximum(h + b_in, 0.0)
        identity = h
        for blk in range(NUM_RES_BLOCKS):
            i1, i2 = 2 * blk, 2 * blk + 1
            t = jnp.maximum(conv_flat(h, w_res_flat[i1], b_res[i1]), 0.0)
            h = conv_flat(t, w_res_flat[i2], b_res[i2])
        h = h + identity
        hp = jnp.pad(h, ((1, 1), (0, 0)))
        htaps = (hp[:-2], hp[1:-1], hp[2:])
        cols = []
        for co in range(cin):
            a = (htaps[0] * w_out_t[0, co] + htaps[1] * w_out_t[1, co]
                 + htaps[2] * w_out_t[2, co])
            cols.append(jnp.sum(a, axis=-1, keepdims=True))
        y = cols[0] if cin == 1 else jnp.concatenate(cols, axis=-1)
        return jax.nn.sigmoid(y + b_out)

    x_nlc = jnp.transpose(x_ncl, (0, 2, 1))
    y = jax.vmap(one)(x_nlc)
    return jnp.transpose(y, (0, 2, 1))


if __name__ == "__main__":
    key = jax.random.PRNGKey(0)
    k_x, k_p = jax.random.split(key)

    N, Cin, L = 4, 1, 128                        # PyTorch input layout: (N, Cin, L)
    x_ncl = jax.random.normal(k_x, (N, Cin, L), jnp.float32)

    raw = init_raw_params(k_p, in_channels=Cin)
    folded = fold_params(raw)

    out = pidn_forward(x_ncl, folded)            # auto b_tile / split_dots
    out = jax.block_until_ready(out)

    # Tight check vs a reference that mirrors the kernel's bf16 matmul inputs.
    ref_b = ref_forward(x_ncl, folded, use_bf16=True)
    np.testing.assert_allclose(np.asarray(out), np.asarray(ref_b), atol=2e-3, rtol=0)

    # Loose check vs full-f32 semantics (bounds bf16 drift over 31 chained convs).
    ref_f = ref_forward(x_ncl, folded, use_bf16=False)
    np.testing.assert_allclose(np.asarray(out), np.asarray(ref_f), atol=5e-2, rtol=0)

    assert out.shape == (N, Cin, L) and bool(jnp.all(jnp.isfinite(out)))
    print("KERNEL_OK")
</pallas_src>

<mosaic_0001>
module attributes {stable_mosaic.version = 11 : i64} {
  func.func @pidn_kernel(%arg0: i32, %arg1: memref<256x1xf32, #tpu.memory_space<vmem>>, %arg2: memref<3x1x64xf32, #tpu.memory_space<vmem>>, %arg3: memref<1x64xf32, #tpu.memory_space<vmem>>, %arg4: memref<30x192x64xbf16, #tpu.memory_space<vmem>>, %arg5: memref<30x1x64xf32, #tpu.memory_space<vmem>>, %arg6: memref<3x1x64xf32, #tpu.memory_space<vmem>>, %arg7: memref<1x1xf32, #tpu.memory_space<vmem>>, %arg8: memref<256x1xf32, #tpu.memory_space<vmem>>) attributes {dimension_semantics = [#tpu.dimension_semantics<parallel>], iteration_bounds = array<i64: 2>, scalar_prefetch = 0 : i64, scratch_operands = 0 : i64, tpu.core_type = #tpu.core_type<tc>, window_params = [{transform_indices = @transform_0, window_bounds = array<i64: 256, 1>}, {pipeline_mode = #tpu.pipeline_mode<synchronous>, transform_indices = @transform_1, window_bounds = array<i64: 3, 1, 64>}, {pipeline_mode = #tpu.pipeline_mode<synchronous>, transform_indices = @transform_2, window_bounds = array<i64: 1, 64>}, {pipeline_mode = #tpu.pipeline_mode<synchronous>, transform_indices = @transform_3, window_bounds = array<i64: 30, 192, 64>}, {pipeline_mode = #tpu.pipeline_mode<synchronous>, transform_indices = @transform_4, window_bounds = array<i64: 30, 1, 64>}, {pipeline_mode = #tpu.pipeline_mode<synchronous>, transform_indices = @transform_5, window_bounds = array<i64: 3, 1, 64>}, {pipeline_mode = #tpu.pipeline_mode<synchronous>, transform_indices = @transform_6, window_bounds = array<i64: 1, 1>}, {transform_indices = @transform_7, window_bounds = array<i64: 256, 1>}]} {
    %0 = tpu.iota {dimensions = array<i32: 0>} : vector<256x1xi32>
    %c128_i32 = arith.constant 128 : i32
    %c0_i32 = arith.constant 0 : i32
    %1 = arith.cmpi eq, %c128_i32, %c0_i32 : i32
    %c1_i32 = arith.constant 1 : i32
    %2 = arith.select %1, %c1_i32, %c128_i32 : i32
    %3 = vector.broadcast %2 : i32 to vector<256x1xi32>
    %4 = arith.remsi %0, %3 : vector<256x1xi32>
    %c0_i32_0 = arith.constant 0 : i32
    %5 = vector.broadcast %c0_i32_0 : i32 to vector<256x1xi32>
    %6 = arith.cmpi ne, %4, %5 : vector<256x1xi32>
    %c0_i32_1 = arith.constant 0 : i32
    %7 = vector.broadcast %c0_i32_1 : i32 to vector<256x1xi32>
    %8 = arith.cmpi slt, %4, %7 : vector<256x1xi32>
    %c0_i32_2 = arith.constant 0 : i32
    %9 = arith.cmpi slt, %2, %c0_i32_2 : i32
    %10 = vector.broadcast %9 : i1 to vector<256x1xi1>
    %11 = vector.broadcast %10 : vector<256x1xi1> to vector<256x1xi1>
    %12 = arith.xori %8, %11 : vector<256x1xi1>
    %13 = arith.andi %12, %6 : vector<256x1xi1>
    %14 = vector.broadcast %2 : i32 to vector<256x1xi32>
    %15 = arith.addi %4, %14 : vector<256x1xi32>
    %16 = arith.select %13, %15, %4 : vector<256x1xi1>, vector<256x1xi32>
    %c0_i32_3 = arith.constant 0 : i32
    %17 = vector.broadcast %c0_i32_3 : i32 to vector<256x1xi32>
    %18 = arith.cmpi ne, %16, %17 : vector<256x1xi32>
    %c127_i32 = arith.constant 127 : i32
    %19 = vector.broadcast %c127_i32 : i32 to vector<256x1xi32>
    %20 = arith.cmpi ne, %16, %19 : vector<256x1xi32>
    %21 = arith.extui %18 : vector<256x1xi1> to vector<256x1xi32>
    %22 = arith.sitofp %21 : vector<256x1xi32> to vector<256x1xf32>
    %23 = vector.shape_cast %22 : vector<256x1xf32> to vector<256x1xf32>
    %24 = vector.broadcast %23 : vector<256x1xf32> to vector<256x64xf32>
    %25 = arith.extui %20 : vector<256x1xi1> to vector<256x1xi32>
    %26 = arith.sitofp %25 : vector<256x1xi32> to vector<256x1xf32>
    %27 = vector.shape_cast %26 : vector<256x1xf32> to vector<256x1xf32>
    %28 = vector.broadcast %27 : vector<256x1xf32> to vector<256x64xf32>
    %c0 = arith.constant 0 : index
    %c0_4 = arith.constant 0 : index
    %29 = vector.load %arg1[%c0, %c0_4] : memref<256x1xf32, #tpu.memory_space<vmem>>, vector<256x1xf32>
    %c1_i32_5 = arith.constant 1 : i32
    %30 = tpu.dynamic_rotate %29 by %c1_i32_5 dim 0 : vector<256x1xf32>, i32 -> vector<256x1xf32>
    %cst = arith.constant 0.000000e+00 : f32
    %31 = vector.broadcast %cst : f32 to vector<256x1xf32>
    %32 = arith.select %18, %30, %31 : vector<256x1xi1>, vector<256x1xf32>
    %c255_i32 = arith.constant 255 : i32
    %33 = tpu.dynamic_rotate %29 by %c255_i32 dim 0 : vector<256x1xf32>, i32 -> vector<256x1xf32>
    %cst_6 = arith.constant 0.000000e+00 : f32
    %34 = vector.broadcast %cst_6 : f32 to vector<256x1xf32>
    %35 = arith.select %20, %33, %34 : vector<256x1xi1>, vector<256x1xf32>
    %c0_7 = arith.constant 0 : index
    %c0_8 = arith.constant 0 : index
    %c0_9 = arith.constant 0 : index
    %36 = vector.load %arg2[%c0_7, %c0_8, %c0_9] : memref<3x1x64xf32, #tpu.memory_space<vmem>>, vector<3x1x64xf32>
    %cst_10 = arith.constant 0.000000e+00 : f32
    %37 = vector.broadcast %cst_10 : f32 to vector<256x64xf32>
    %38 = vector.extract_strided_slice %36 {offsets = [0, 0, 0], sizes = [1, 1, 64], strides = [1, 1, 1]} : vector<3x1x64xf32> to vector<1x1x64xf32>
    %39 = vector.shape_cast %38 : vector<1x1x64xf32> to vector<64xf32>
    %40 = vector.shape_cast %39 : vector<64xf32> to vector<1x64xf32>
    %41 = vector.broadcast %32 : vector<256x1xf32> to vector<256x64xf32>
    %42 = vector.broadcast %40 : vector<1x64xf32> to vector<256x64xf32>
    %43 = arith.mulf %41, %42 : vector<256x64xf32>
    %44 = arith.addf %37, %43 : vector<256x64xf32>
    %45 = vector.extract_strided_slice %36 {offsets = [1, 0, 0], sizes = [1, 1, 64], strides = [1, 1, 1]} : vector<3x1x64xf32> to vector<1x1x64xf32>
    %46 = vector.shape_cast %45 : vector<1x1x64xf32> to vector<64xf32>
    %47 = vector.shape_cast %46 : vector<64xf32> to vector<1x64xf32>
    %48 = vector.broadcast %29 : vector<256x1xf32> to vector<256x64xf32>
    %49 = vector.broadcast %47 : vector<1x64xf32> to vector<256x64xf32>
    %50 = arith.mulf %48, %49 : vector<256x64xf32>
    %51 = arith.addf %44, %50 : vector<256x64xf32>
    %52 = vector.extract_strided_slice %36 {offsets = [2, 0, 0], sizes = [1, 1, 64], strides = [1, 1, 1]} : vector<3x1x64xf32> to vector<1x1x64xf32>
    %53 = vector.shape_cast %52 : vector<1x1x64xf32> to vector<64xf32>
    %54 = vector.shape_cast %53 : vector<64xf32> to vector<1x64xf32>
    %55 = vector.broadcast %35 : vector<256x1xf32> to vector<256x64xf32>
    %56 = vector.broadcast %54 : vector<1x64xf32> to vector<256x64xf32>
    %57 = arith.mulf %55, %56 : vector<256x64xf32>
    %58 = arith.addf %51, %57 : vector<256x64xf32>
    %c0_11 = arith.constant 0 : index
    %c0_12 = arith.constant 0 : index
    %59 = vector.load %arg3[%c0_11, %c0_12] : memref<1x64xf32, #tpu.memory_space<vmem>>, vector<1x64xf32>
    %60 = vector.broadcast %59 : vector<1x64xf32> to vector<256x64xf32>
    %61 = arith.addf %58, %60 : vector<256x64xf32>
    %cst_13 = arith.constant 0.000000e+00 : f32
    %62 = vector.broadcast %cst_13 : f32 to vector<256x64xf32>
    %63 = arith.maximumf %61, %62 : vector<256x64xf32>
    %c0_i32_14 = arith.constant 0 : i32
    %c15_i32 = arith.constant 15 : i32
    %64 = arith.addi %c0_i32_14, %c15_i32 : i32
    %c1_i32_15 = arith.constant 1 : i32
    %65 = scf.for %arg9 = %c0_i32_14 to %64 step %c1_i32_15 iter_args(%arg10 = %63) -> (vector<256x64xf32>)  : i32 {
      %c2_i32 = arith.constant 2 : i32
      %100 = arith.muli %c2_i32, %arg9 : i32
      %c1_i32_28 = arith.constant 1 : i32
      %101 = arith.addi %100, %c1_i32_28 : i32
      %102 = arith.index_cast %100 : i32 to index
      %c0_29 = arith.constant 0 : index
      %c0_30 = arith.constant 0 : index
      %103 = vector.load %arg4[%102, %c0_29, %c0_30] : memref<30x192x64xbf16, #tpu.memory_space<vmem>>, vector<1x192x64xbf16>
      %104 = vector.shape_cast %103 : vector<1x192x64xbf16> to vector<192x64xbf16>
      %105 = arith.index_cast %100 : i32 to index
      %c0_31 = arith.constant 0 : index
      %c0_32 = arith.constant 0 : index
      %106 = vector.load %arg5[%105, %c0_31, %c0_32] : memref<30x1x64xf32, #tpu.memory_space<vmem>>, vector<1x1x64xf32>
      %107 = vector.shape_cast %106 : vector<1x1x64xf32> to vector<1x64xf32>
      %c1_i32_33 = arith.constant 1 : i32
      %108 = tpu.dynamic_rotate %arg10 by %c1_i32_33 dim 0 : vector<256x64xf32>, i32 -> vector<256x64xf32>
      %109 = arith.mulf %108, %24 : vector<256x64xf32>
      %c255_i32_34 = arith.constant 255 : i32
      %110 = tpu.dynamic_rotate %arg10 by %c255_i32_34 dim 0 : vector<256x64xf32>, i32 -> vector<256x64xf32>
      %111 = arith.mulf %110, %28 : vector<256x64xf32>
      %112 = arith.truncf %109 : vector<256x64xf32> to vector<256x64xbf16>
      %113 = arith.truncf %arg10 : vector<256x64xf32> to vector<256x64xbf16>
      %114 = arith.truncf %111 : vector<256x64xf32> to vector<256x64xbf16>
      %115 = tpu.concatenate %112, %113, %114 in 1 : vector<256x64xbf16>, vector<256x64xbf16>, vector<256x64xbf16> -> vector<256x192xbf16>
      %cst_35 = arith.constant dense<0.000000e+00> : vector<256x64xf32>
      %116 = tpu.matmul %115, %104, %cst_35 {dimension_numbers = #tpu.dot_dimension_numbers<[1], [0], [0], [1], [0, 0, 1, 1], [], []>} : vector<256x192xbf16>, vector<192x64xbf16>, vector<256x64xf32> -> vector<256x64xf32>
      %117 = vector.broadcast %107 : vector<1x64xf32> to vector<256x64xf32>
      %118 = arith.addf %116, %117 : vector<256x64xf32>
      %cst_36 = arith.constant 0.000000e+00 : f32
      %119 = vector.broadcast %cst_36 : f32 to vector<256x64xf32>
      %120 = arith.maximumf %118, %119 : vector<256x64xf32>
      %121 = arith.index_cast %101 : i32 to index
      %c0_37 = arith.constant 0 : index
      %c0_38 = arith.constant 0 : index
      %122 = vector.load %arg4[%121, %c0_37, %c0_38] : memref<30x192x64xbf16, #tpu.memory_space<vmem>>, vector<1x192x64xbf16>
      %123 = vector.shape_cast %122 : vector<1x192x64xbf16> to vector<192x64xbf16>
      %124 = arith.index_cast %101 : i32 to index
      %c0_39 = arith.constant 0 : index
      %c0_40 = arith.constant 0 : index
      %125 = vector.load %arg5[%124, %c0_39, %c0_40] : memref<30x1x64xf32, #tpu.memory_space<vmem>>, vector<1x1x64xf32>
      %126 = vector.shape_cast %125 : vector<1x1x64xf32> to vector<1x64xf32>
      %c1_i32_41 = arith.constant 1 : i32
      %127 = tpu.dynamic_rotate %120 by %c1_i32_41 dim 0 : vector<256x64xf32>, i32 -> vector<256x64xf32>
      %128 = arith.mulf %127, %24 : vector<256x64xf32>
      %c255_i32_42 = arith.constant 255 : i32
      %129 = tpu.dynamic_rotate %120 by %c255_i32_42 dim 0 : vector<256x64xf32>, i32 -> vector<256x64xf32>
      %130 = arith.mulf %129, %28 : vector<256x64xf32>
      %131 = arith.truncf %128 : vector<256x64xf32> to vector<256x64xbf16>
      %132 = arith.truncf %120 : vector<256x64xf32> to vector<256x64xbf16>
      %133 = arith.truncf %130 : vector<256x64xf32> to vector<256x64xbf16>
      %134 = tpu.concatenate %131, %132, %133 in 1 : vector<256x64xbf16>, vector<256x64xbf16>, vector<256x64xbf16> -> vector<256x192xbf16>
      %cst_43 = arith.constant dense<0.000000e+00> : vector<256x64xf32>
      %135 = tpu.matmul %134, %123, %cst_43 {dimension_numbers = #tpu.dot_dimension_numbers<[1], [0], [0], [1], [0, 0, 1, 1], [], []>} : vector<256x192xbf16>, vector<192x64xbf16>, vector<256x64xf32> -> vector<256x64xf32>
      %136 = vector.broadcast %126 : vector<1x64xf32> to vector<256x64xf32>
      %137 = arith.addf %135, %136 : vector<256x64xf32>
      scf.yield %137 : vector<256x64xf32>
    }
    %c15_i32_16 = arith.constant 15 : i32
    %66 = arith.addf %65, %63 : vector<256x64xf32>
    %c1_i32_17 = arith.constant 1 : i32
    %67 = tpu.dynamic_rotate %66 by %c1_i32_17 dim 0 : vector<256x64xf32>, i32 -> vector<256x64xf32>
    %68 = arith.mulf %67, %24 : vector<256x64xf32>
    %c255_i32_18 = arith.constant 255 : i32
    %69 = tpu.dynamic_rotate %66 by %c255_i32_18 dim 0 : vector<256x64xf32>, i32 -> vector<256x64xf32>
    %70 = arith.mulf %69, %28 : vector<256x64xf32>
    %c0_19 = arith.constant 0 : index
    %c0_20 = arith.constant 0 : index
    %c0_21 = arith.constant 0 : index
    %71 = vector.load %arg6[%c0_19, %c0_20, %c0_21] : memref<3x1x64xf32, #tpu.memory_space<vmem>>, vector<3x1x64xf32>
    %72 = vector.extract_strided_slice %71 {offsets = [0, 0, 0], sizes = [1, 1, 64], strides = [1, 1, 1]} : vector<3x1x64xf32> to vector<1x1x64xf32>
    %73 = vector.shape_cast %72 : vector<1x1x64xf32> to vector<64xf32>
    %74 = vector.shape_cast %73 : vector<64xf32> to vector<1x64xf32>
    %75 = vector.broadcast %74 : vector<1x64xf32> to vector<256x64xf32>
    %76 = arith.mulf %68, %75 : vector<256x64xf32>
    %77 = vector.extract_strided_slice %71 {offsets = [1, 0, 0], sizes = [1, 1, 64], strides = [1, 1, 1]} : vector<3x1x64xf32> to vector<1x1x64xf32>
    %78 = vector.shape_cast %77 : vector<1x1x64xf32> to vector<64xf32>
    %79 = vector.shape_cast %78 : vector<64xf32> to vector<1x64xf32>
    %80 = vector.broadcast %79 : vector<1x64xf32> to vector<256x64xf32>
    %81 = arith.mulf %66, %80 : vector<256x64xf32>
    %82 = arith.addf %76, %81 : vector<256x64xf32>
    %83 = vector.extract_strided_slice %71 {offsets = [2, 0, 0], sizes = [1, 1, 64], strides = [1, 1, 1]} : vector<3x1x64xf32> to vector<1x1x64xf32>
    %84 = vector.shape_cast %83 : vector<1x1x64xf32> to vector<64xf32>
    %85 = vector.shape_cast %84 : vector<64xf32> to vector<1x64xf32>
    %86 = vector.broadcast %85 : vector<1x64xf32> to vector<256x64xf32>
    %87 = arith.mulf %70, %86 : vector<256x64xf32>
    %88 = arith.addf %82, %87 : vector<256x64xf32>
    %cst_22 = arith.constant dense<0.000000e+00> : vector<256xf32>
    %89 = vector.multi_reduction <add>, %88, %cst_22 [1] : vector<256x64xf32> to vector<256xf32>
    %90 = vector.shape_cast %89 : vector<256xf32> to vector<256x1xf32>
    %c0_23 = arith.constant 0 : index
    %c0_24 = arith.constant 0 : index
    %91 = vector.load %arg7[%c0_23, %c0_24] : memref<1x1xf32, #tpu.memory_space<vmem>>, vector<1x1xf32>
    %92 = vector.broadcast %91 : vector<1x1xf32> to vector<256x1xf32>
    %93 = arith.addf %90, %92 : vector<256x1xf32>
    %94 = arith.negf %93 : vector<256x1xf32>
    %95 = math.exp %94 : vector<256x1xf32>
    %cst_25 = arith.constant 1.000000e+00 : f32
    %96 = vector.broadcast %cst_25 : f32 to vector<256x1xf32>
    %97 = arith.addf %96, %95 : vector<256x1xf32>
    %98 = arith.divf %96, %97 : vector<256x1xf32>
    %c0_26 = arith.constant 0 : index
    %c0_27 = arith.constant 0 : index
    %99 = vector.load %arg8[%c0_26, %c0_27] : memref<256x1xf32, #tpu.memory_space<vmem>>, vector<256x1xf32>
    tpu.vector_store %arg8[%c0_26, %c0_27], %98 {strides = array<i32>} : memref<256x1xf32, #tpu.memory_space<vmem>>, vector<256x1xf32>,
    return
  }
  func.func @transform_0(%arg0: i32) -> (i32, i32) {
    %c0_i32 = arith.constant 0 : i32
    %c0_i32_0 = arith.constant 0 : i32
    return %arg0, %c0_i32 : i32, i32
  }
  func.func @transform_1(%arg0: i32) -> (i32, i32, i32) {
    %c0_i32 = arith.constant 0 : i32
    %c0_i32_0 = arith.constant 0 : i32
    %c0_i32_1 = arith.constant 0 : i32
    %c0_i32_2 = arith.constant 0 : i32
    return %c0_i32, %c0_i32_0, %c0_i32_1 : i32, i32, i32
  }
  func.func @transform_2(%arg0: i32) -> (i32, i32) {
    %c0_i32 = arith.constant 0 : i32
    %c0_i32_0 = arith.constant 0 : i32
    %c0_i32_1 = arith.constant 0 : i32
    return %c0_i32, %c0_i32_0 : i32, i32
  }
  func.func @transform_3(%arg0: i32) -> (i32, i32, i32) {
    %c0_i32 = arith.constant 0 : i32
    %c0_i32_0 = arith.constant 0 : i32
    %c0_i32_1 = arith.constant 0 : i32
    %c0_i32_2 = arith.constant 0 : i32
    return %c0_i32, %c0_i32_0, %c0_i32_1 : i32, i32, i32
  }
  func.func @transform_4(%arg0: i32) -> (i32, i32, i32) {
    %c0_i32 = arith.constant 0 : i32
    %c0_i32_0 = arith.constant 0 : i32
    %c0_i32_1 = arith.constant 0 : i32
    %c0_i32_2 = arith.constant 0 : i32
    return %c0_i32, %c0_i32_0, %c0_i32_1 : i32, i32, i32
  }
  func.func @transform_5(%arg0: i32) -> (i32, i32, i32) {
    %c0_i32 = arith.constant 0 : i32
    %c0_i32_0 = arith.constant 0 : i32
    %c0_i32_1 = arith.constant 0 : i32
    %c0_i32_2 = arith.constant 0 : i32
    return %c0_i32, %c0_i32_0, %c0_i32_1 : i32, i32, i32
  }
  func.func @transform_6(%arg0: i32) -> (i32, i32) {
    %c0_i32 = arith.constant 0 : i32
    %c0_i32_0 = arith.constant 0 : i32
    %c0_i32_1 = arith.constant 0 : i32
    return %c0_i32, %c0_i32_0 : i32, i32
  }
  func.func @transform_7(%arg0: i32) -> (i32, i32) {
    %c0_i32 = arith.constant 0 : i32
    %c0_i32_0 = arith.constant 0 : i32
    return %arg0, %c0_i32 : i32, i32
  }
}

</mosaic_0001>

<llo_original>
// kernel: tpu_custom_call.1
$region0: #{tpu_custom_call.1}
  #allocation0 [shape = 'u32[]', space=smem, size = 0x4, offset = 0x4, fixed_abs, tag = 'smem constant byte address 0x4 - core index']
  #allocation1 [shape = 'u32[144,128]{1,0:T(1,128)}', space=vmem, size = 0x12000, scoped, tag = 'internal scratch']
  #allocation2 [shape = 'f32[1,1]{1,0:T(1,128)S(1)}', space=vmem, size = 0x200, scoped, tag = 'scoped memory for tpu_custom_call.1']
  %s0 = inlined_call_operand.vmem [shape: f32[512,1], index: 0, kind: input, shape index: {}]
  %s1 = inlined_call_operand.vmem [shape: f32[3,1,64], index: 1, kind: input, shape index: {}]
  %s2 = inlined_call_operand.vmem [shape: f32[1,64], index: 2, kind: input, shape index: {}]
  %s3 = inlined_call_operand.vmem [shape: bf16[30,192,64], index: 3, kind: input, shape index: {}]
  %s4 = inlined_call_operand.vmem [shape: f32[30,1,64], index: 4, kind: input, shape index: {}]
  %s5 = inlined_call_operand.vmem [shape: f32[3,1,64], index: 5, kind: input, shape index: {}]
  %s6 = inlined_call_operand.<no memory space> [shape: f32[1,1], index: 6, kind: input, shape index: {}]
  %s7 = inlined_call_operand.vmem [shape: f32[512,1], index: 7, kind: output, shape index: {}]
  %s8 = sld [smem:[#allocation0]]
  $region68: #{tpu_custom_call.1} parent=0
    _
  %s10 = ssub.s32 1, %s8
  %s11 = scalar_select 0, %s10, %s8
  %v12 = vstv %s6
  %13 = vst [vmem:[#allocation2] sm:$0x1] %v12
  loop: start=0, step=1, limit=4
  $region2: #{tpu_custom_call.1} parent=0 // loop_pre_header
    _
  $region3: #{tpu_custom_call.1} parent=0 // loop_header
    %s15 = sphi 0, %s19
    %p16 = scmp.ge.s32.totalorder %s15, 4
    %s25 = sphi 0, %s27
    %s28 = sphi 0, %s25
    %s29 = sphi 0, %s28
    %s45 = sphi 0, %s29
    %s49 = sphi 0, %s49
    %s51 = sphi 0, %s49
    %s52 = sphi 0, %s51
    %s66 = sphi 0, %s52
    %s70 = sphi 0, %s70
    %s72 = sphi 0, %s70
    %s73 = sphi 0, %s72
    %s87 = sphi 0, %s73
    %s91 = sphi 0, %s91
    %s93 = sphi 0, %s91
    %s94 = sphi 0, %s93
    %s108 = sphi 0, %s94
    %s112 = sphi 0, %s112
    %s114 = sphi 0, %s112
    %s115 = sphi 0, %s114
    %s129 = sphi 0, %s115
    %s133 = sphi 0, %s133
    %s135 = sphi 0, %s133
    %s136 = sphi 0, %s135
    %s150 = sphi 0, %s136
    %s154 = sphi 0, %s154
    %s156 = sphi 0, %s154
    %s157 = sphi 0, %s156
    %s171 = sphi 0, %s157
    %s177 = sphi 0, %s179
    %s180 = sphi 0, %s177
    %s181 = sphi 0, %s180
    %s197 = sphi 0, %s181
  $region4: #{tpu_custom_call.1} parent=0 // loop_header_branch
    %18 = sbr.rel (%p16) target = $region8
  $region5: #{tpu_custom_call.1} parent=0 // loop_body
    %s20 = ssub.s32 %s15, 1
    %s21 = ssub.s32 %s15, 2
    %s22 = sadd.s32 %s15, 1
    %s23 = ssub.s32 %s15, %s22
    %p24 = scmp.eq.s32.totalorder %s23, 0
    %s26 = sadd.s32 %s25, 1
    %s27 = scalar_select %p24, %s25, %s26
    %p30 = pneg %p24
    %p31 = scmp.eq.s32.totalorder %s15, 1
    %p32 = por %p30, %p31
    %p33 = scmp.ne.s32.totalorder %s25, %s28
    %p34 = scmp.eq.s32.totalorder %s15, 0
    %p35 = por %p33, %p34
    %p36 = scmp.ne.s32.totalorder %s25, %s28
    %p37 = scmp.eq.s32.totalorder %s20, 1
    %p38 = por %p36, %p37
    %p39 = scmp.ne.s32.totalorder %s28, %s29
    %p40 = scmp.eq.s32.totalorder %s20, 0
    %p41 = por %p39, %p40
    %p42 = scmp.ne.s32.totalorder %s28, %s29
    %p43 = scmp.eq.s32.totalorder %s21, 1
    %p44 = por %p42, %p43
    %p46 = scmp.ne.s32.totalorder %s29, %s45
    %p47 = scmp.eq.s32.totalorder %s21, 0
    %p48 = por %p46, %p47
    %s50 = sadd.s32 %s49, 1
    %p53 = scmp.eq.s32.totalorder %s15, 1
    %p54 = scmp.ne.s32.totalorder %s49, %s51
    %p55 = scmp.eq.s32.totalorder %s15, 0
    %p56 = por %p54, %p55
    %p57 = scmp.ne.s32.totalorder %s49, %s51
    %p58 = scmp.eq.s32.totalorder %s20, 1
    %p59 = por %p57, %p58
    %p60 = scmp.ne.s32.totalorder %s51, %s52
    %p61 = scmp.eq.s32.totalorder %s20, 0
    %p62 = por %p60, %p61
    %p63 = scmp.ne.s32.totalorder %s51, %s52
    %p64 = scmp.eq.s32.totalorder %s21, 1
    %p65 = por %p63, %p64
    %p67 = scmp.ne.s32.totalorder %s52, %s66
    %p68 = scmp.eq.s32.totalorder %s21, 0
    %p69 = por %p67, %p68
    %s71 = sadd.s32 %s70, 1
    %p74 = scmp.eq.s32.totalorder %s15, 1
    %p75 = scmp.ne.s32.totalorder %s70, %s72
    %p76 = scmp.eq.s32.totalorder %s15, 0
    %p77 = por %p75, %p76
    %p78 = scmp.ne.s32.totalorder %s70, %s72
    %p79 = scmp.eq.s32.totalorder %s20, 1
    %p80 = por %p78, %p79
    %p81 = scmp.ne.s32.totalorder %s72, %s73
    %p82 = scmp.eq.s32.totalorder %s20, 0
    %p83 = por %p81, %p82
    %p84 = scmp.ne.s32.totalorder %s72, %s73
    %p85 = scmp.eq.s32.totalorder %s21, 1
    %p86 = por %p84, %p85
    %p88 = scmp.ne.s32.totalorder %s73, %s87
    %p89 = scmp.eq.s32.totalorder %s21, 0
    %p90 = por %p88, %p89
    %s92 = sadd.s32 %s91, 1
    %p95 = scmp.eq.s32.totalorder %s15, 1
    %p96 = scmp.ne.s32.totalorder %s91, %s93
    %p97 = scmp.eq.s32.totalorder %s15, 0
    %p98 = por %p96, %p97
    %p99 = scmp.ne.s32.totalorder %s91, %s93
    %p100 = scmp.eq.s32.totalorder %s20, 1
    %p101 = por %p99, %p100
    %p102 = scmp.ne.s32.totalorder %s93, %s94
    %p103 = scmp.eq.s32.totalorder %s20, 0
    %p104 = por %p102, %p103
    %p105 = scmp.ne.s32.totalorder %s93, %s94
    %p106 = scmp.eq.s32.totalorder %s21, 1
    %p107 = por %p105, %p106
    %p109 = scmp.ne.s32.totalorder %s94, %s108
    %p110 = scmp.eq.s32.totalorder %s21, 0
    %p111 = por %p109, %p110
    %s113 = sadd.s32 %s112, 1
    %p116 = scmp.eq.s32.totalorder %s15, 1
    %p117 = scmp.ne.s32.totalorder %s112, %s114
    %p118 = scmp.eq.s32.totalorder %s15, 0
    %p119 = por %p117, %p118
    %p120 = scmp.ne.s32.totalorder %s112, %s114
    %p121 = scmp.eq.s32.totalorder %s20, 1
    %p122 = por %p120, %p121
    %p123 = scmp.ne.s32.totalorder %s114, %s115
    %p124 = scmp.eq.s32.totalorder %s20, 0
    %p125 = por %p123, %p124
    %p126 = scmp.ne.s32.totalorder %s114, %s115
    %p127 = scmp.eq.s32.totalorder %s21, 1
    %p128 = por %p126, %p127
    %p130 = scmp.ne.s32.totalorder %s115, %s129
    %p131 = scmp.eq.s32.totalorder %s21, 0
    %p132 = por %p130, %p131
    %s134 = sadd.s32 %s133, 1
    %p137 = scmp.eq.s32.totalorder %s15, 1
    %p138 = scmp.ne.s32.totalorder %s133, %s135
    %p139 = scmp.eq.s32.totalorder %s15, 0
    %p140 = por %p138, %p139
    %p141 = scmp.ne.s32.totalorder %s133, %s135
    %p142 = scmp.eq.s32.totalorder %s20, 1
    %p143 = por %p141, %p142
    %p144 = scmp.ne.s32.totalorder %s135, %s136
    %p145 = scmp.eq.s32.totalorder %s20, 0
    %p146 = por %p144, %p145
    %p147 = scmp.ne.s32.totalorder %s135, %s136
    %p148 = scmp.eq.s32.totalorder %s21, 1
    %p149 = por %p147, %p148
    %p151 = scmp.ne.s32.totalorder %s136, %s150
    %p152 = scmp.eq.s32.totalorder %s21, 0
    %p153 = por %p151, %p152
    %s155 = sadd.s32 %s154, 1
    %p158 = scmp.eq.s32.totalorder %s15, 1
    %p159 = scmp.ne.s32.totalorder %s154, %s156
    %p160 = scmp.eq.s32.totalorder %s15, 0
    %p161 = por %p159, %p160
    %p162 = scmp.ne.s32.totalorder %s154, %s156
    %p163 = scmp.eq.s32.totalorder %s20, 1
    %p164 = por %p162, %p163
    %p165 = scmp.ne.s32.totalorder %s156, %s157
    %p166 = scmp.eq.s32.totalorder %s20, 0
    %p167 = por %p165, %p166
    %p168 = scmp.ne.s32.totalorder %s156, %s157
    %p169 = scmp.eq.s32.totalorder %s21, 1
    %p170 = por %p168, %p169
    %p172 = scmp.ne.s32.totalorder %s157, %s171
    %p173 = scmp.eq.s32.totalorder %s21, 0
    %p174 = por %p172, %p173
    %s175 = ssub.s32 %s15, %s22
    %p176 = scmp.eq.s32.totalorder %s175, 0
    %s178 = sadd.s32 %s177, 1
    %s179 = scalar_select %p176, %s177, %s178
    %p182 = pneg %p176
    %p183 = scmp.eq.s32.totalorder %s15, 1
    %p184 = por %p182, %p183
    %p185 = scmp.ne.s32.totalorder %s177, %s180
    %p186 = scmp.eq.s32.totalorder %s15, 0
    %p187 = por %p185, %p186
    %p188 = scmp.ne.s32.totalorder %s177, %s180
    %p189 = scmp.eq.s32.totalorder %s20, 1
    %p190 = por %p188, %p189
    %p191 = scmp.ne.s32.totalorder %s180, %s181
    %p192 = scmp.eq.s32.totalorder %s20, 0
    %p193 = por %p191, %p192
    %p194 = scmp.ne.s32.totalorder %s180, %s181
    %p195 = scmp.eq.s32.totalorder %s21, 1
    %p196 = por %p194, %p195
    %p198 = scmp.ne.s32.totalorder %s181, %s197
    %p199 = scmp.eq.s32.totalorder %s21, 0
    %p200 = por %p198, %p199
    %p201 = scmp.le.s32.totalorder 1, %s15
    %p202 = scmp.lt.s32.totalorder %s15, 3
    %p203 = pnand %p201, %p202
    %p204 = pneg %p203
    // Predicated region
    $region9: #{tpu_custom_call.1} parent=5 // pred_check
      _
    $region10: #{tpu_custom_call.1} parent=5 // pred_check_branch
      %206 = sbr.rel (%p203) target = $region12
    $region11: #{tpu_custom_call.1} parent=5 // pred_region
      %s207 = ssub.s32 %s15, 1
      // Predicated region
      $region13: #{tpu_custom_call.1} parent=11 // pred_check
        %p208 = pneg %p62
      $region14: #{tpu_custom_call.1} parent=11 // pred_check_branch
        %210 = sbr.rel (%p208) target = $region16
      $region15: #{tpu_custom_call.1} parent=11 // pred_region
        _
      $region16: #{tpu_custom_call.1} parent=11 // pred_fallthru
        _
      // Predicated region
      $region17: #{tpu_custom_call.1} parent=11 // pred_check
        %p211 = pneg %p83
      $region18: #{tpu_custom_call.1} parent=11 // pred_check_branch
        %213 = sbr.rel (%p211) target = $region20
      $region19: #{tpu_custom_call.1} parent=11 // pred_region
        _
      $region20: #{tpu_custom_call.1} parent=11 // pred_fallthru
        _
      // Predicated region
      $region21: #{tpu_custom_call.1} parent=11 // pred_check
        %p214 = pneg %p104
      $region22: #{tpu_custom_call.1} parent=11 // pred_check_branch
        %216 = sbr.rel (%p214) target = $region24
      $region23: #{tpu_custom_call.1} parent=11 // pred_region
        _
      $region24: #{tpu_custom_call.1} parent=11 // pred_fallthru
        _
      // Predicated region
      $region25: #{tpu_custom_call.1} parent=11 // pred_check
        %p217 = pneg %p125
      $region26: #{tpu_custom_call.1} parent=11 // pred_check_branch
        %219 = sbr.rel (%p217) target = $region28
      $region27: #{tpu_custom_call.1} parent=11 // pred_region
        _
      $region28: #{tpu_custom_call.1} parent=11 // pred_fallthru
        _
      // Predicated region
      $region29: #{tpu_custom_call.1} parent=11 // pred_check
        %p220 = pneg %p146
      $region30: #{tpu_custom_call.1} parent=11 // pred_check_branch
        %222 = sbr.rel (%p220) target = $region32
      $region31: #{tpu_custom_call.1} parent=11 // pred_region
        _
      $region32: #{tpu_custom_call.1} parent=11 // pred_fallthru
        _
      // Predicated region
      $region33: #{tpu_custom_call.1} parent=11 // pred_check
        %p223 = pneg %p167
      $region34: #{tpu_custom_call.1} parent=11 // pred_check_branch
        %225 = sbr.rel (%p223) target = $region36
      $region35: #{tpu_custom_call.1} parent=11 // pred_region
        _
      $region36: #{tpu_custom_call.1} parent=11 // pred_fallthru
        _
    $region12: #{tpu_custom_call.1} parent=5 // pred_fallthru
      _
    %p226 = scmp.lt.s32.totalorder %s15, 2
    // Predicated region
    $region37: #{tpu_custom_call.1} parent=5 // pred_check
      %p227 = pneg %p226
    $region38: #{tpu_custom_call.1} parent=5 // pred_check_branch
      %229 = sbr.rel (%p227) target = $region40
    $region39: #{tpu_custom_call.1} parent=5 // pred_region
      // Predicated region
      $region41: #{tpu_custom_call.1} parent=39 // pred_check
        %p230 = pneg %p35
      $region42: #{tpu_custom_call.1} parent=39 // pred_check_branch
        %232 = sbr.rel (%p230) target = $region44
      $region43: #{tpu_custom_call.1} parent=39 // pred_region
        %s233 = smul.u32 32, %s15
        %p234 = scmp.lt.s32.totalorder %s233, 63
        %s235 = scalar_select %p234, %s233, 63
        %s236 = smul.addr %s235, 8
        %s237 = scalar_lea.vmem %s0, %s236
        %s238 = smul.u32 32, %s15
      $region44: #{tpu_custom_call.1} parent=39 // pred_fallthru
        _
    $region40: #{tpu_custom_call.1} parent=5 // pred_fallthru
      _
    %p239 = scmp.le.s32.totalorder 1, %s15
    %p240 = scmp.lt.s32.totalorder %s15, 3
    %p241 = pnand %p239, %p240
    %p242 = pneg %p241
    // Predicated region
    $region45: #{tpu_custom_call.1} parent=5 // pred_check
      _
    $region46: #{tpu_custom_call.1} parent=5 // pred_check_branch
      %244 = sbr.rel (%p241) target = $region48
    $region47: #{tpu_custom_call.1} parent=5 // pred_region
      %s245 = ssub.s32 %s15, 1
      %s246 = smul.u32 32, %s20
      %p247 = scmp.lt.s32.totalorder %s246, 63
      %s248 = scalar_select %p247, %s246, 63
      %s249 = smul.addr %s248, 8
      %s250 = scalar_lea.vmem %s0, %s249
      %p251 = pneg %p41
      %p252 = pneg %p38
      %p253 = pneg %p62
      %p254 = pneg %p59
      %p255 = pneg %p83
      %p256 = pneg %p80
      %p257 = pneg %p104
      %p258 = pneg %p101
      %p259 = pneg %p125
      %p260 = pneg %p122
      %p261 = pneg %p146
      %p262 = pneg %p143
      %p263 = pneg %p167
      %p264 = pneg %p164
      %p265 = pneg %p193
      %p266 = pneg %p190
      %s267 = smul.u32 32, %s20
      %p268 = scmp.lt.s32.totalorder %s267, 63
      %s269 = scalar_select %p268, %s267, 63
      %s270 = smul.addr %s269, 8
      %s271 = scalar_lea.vmem %s7, %s270
      %s272 = smul.u32 32, %s20
      %p273 = scmp.lt.s32.totalorder %s272, 63
      %s274 = scalar_select %p273, %s272, 63
      %s275 = smul.addr %s274, 8
      %s276 = scalar_lea.vmem %s0, %s275
      %s277 = smul.u32 32, %s20
      %s278 = smul.u32 32, %s20
      %p279 = scmp.lt.s32.totalorder %s278, 63
      %s280 = scalar_select %p279, %s278, 63
      %s281 = smul.addr %s280, 8
      %s282 = scalar_lea.vmem %s7, %s281
      %s283 = smul.u32 32, %s20
      %v285 = vlaneseq
      %v286 = vshrl.u32 %v285, 7
      %v287 = vadd.s32 %v286, 8
      %v288 = vadd.s32 %v286, 16
      %v289 = vadd.s32 %v286, 24
      %v290 = vadd.s32 %v286, 32
      %v291 = vadd.s32 %v286, 40
      %v292 = vadd.s32 %v286, 48
      %v293 = vadd.s32 %v286, 56
      %v294 = vadd.s32 %v286, 64
      %v295 = vadd.s32 %v286, 72
      %v296 = vadd.s32 %v286, 80
      %v297 = vadd.s32 %v286, 88
      %v298 = vadd.s32 %v286, 96
      %v299 = vadd.s32 %v286, 104
      %v300 = vadd.s32 %v286, 112
      %v301 = vadd.s32 %v286, 120
      %v302 = vadd.s32 %v286, 128
      %v303 = vadd.s32 %v286, 136
      %v304 = vadd.s32 %v286, 144
      %v305 = vadd.s32 %v286, 152
      %v306 = vadd.s32 %v286, 160
      %v307 = vadd.s32 %v286, 168
      %v308 = vadd.s32 %v286, 176
      %v309 = vadd.s32 %v286, 184
      %v310 = vadd.s32 %v286, 192
      %v311 = vadd.s32 %v286, 200
      %v312 = vadd.s32 %v286, 208
      %v313 = vadd.s32 %v286, 216
      %v314 = vadd.s32 %v286, 224
      %v315 = vadd.s32 %v286, 232
      %v316 = vadd.s32 %v286, 240
      %v317 = vadd.s32 %v286, 248
      %vm318 = vcmp.lt.s32.totalorder %v286, 0
      %v319 = vsub.s32 0, %v286
      %v320 = vsel %vm318, %v319, %v286
      %v321 = vshrl.u32 %v320, 7
      %v322 = vand.u32 %v320, 127
      %v323 = vsub.s32 0, %v322
      %v324 = vsel %vm318, %v323, %v322
      %vm325 = vcmp.lt.s32.totalorder %v287, 0
      %v326 = vsub.s32 0, %v287
      %v327 = vsel %vm325, %v326, %v287
      %v328 = vshrl.u32 %v327, 7
      %v329 = vand.u32 %v327, 127
      %v330 = vsub.s32 0, %v329
      %v331 = vsel %vm325, %v330, %v329
      %vm332 = vcmp.lt.s32.totalorder %v288, 0
      %v333 = vsub.s32 0, %v288
      %v334 = vsel %vm332, %v333, %v288
      %v335 = vshrl.u32 %v334, 7
      %v336 = vand.u32 %v334, 127
      %v337 = vsub.s32 0, %v336
      %v338 = vsel %vm332, %v337, %v336
      %vm339 = vcmp.lt.s32.totalorder %v289, 0
      %v340 = vsub.s32 0, %v289
      %v341 = vsel %vm339, %v340, %v289
      %v342 = vshrl.u32 %v341, 7
      %v343 = vand.u32 %v341, 127
      %v344 = vsub.s32 0, %v343
      %v345 = vsel %vm339, %v344, %v343
      %vm346 = vcmp.lt.s32.totalorder %v290, 0
      %v347 = vsub.s32 0, %v290
      %v348 = vsel %vm346, %v347, %v290
      %v349 = vshrl.u32 %v348, 7
      %v350 = vand.u32 %v348, 127
      %v351 = vsub.s32 0, %v350
      %v352 = vsel %vm346, %v351, %v350
      %vm353 = vcmp.lt.s32.totalorder %v291, 0
      %v354 = vsub.s32 0, %v291
      %v355 = vsel %vm353, %v354, %v291
      %v356 = vshrl.u32 %v355, 7
      %v357 = vand.u32 %v355, 127
      %v358 = vsub.s32 0, %v357
      %v359 = vsel %vm353, %v358, %v357
      %vm360 = vcmp.lt.s32.totalorder %v292, 0
      %v361 = vsub.s32 0, %v292
      %v362 = vsel %vm360, %v361, %v292
      %v363 = vshrl.u32 %v362, 7
      %v364 = vand.u32 %v362, 127
      %v365 = vsub.s32 0, %v364
      %v366 = vsel %vm360, %v365, %v364
      %vm367 = vcmp.lt.s32.totalorder %v293, 0
      %v368 = vsub.s32 0, %v293
      %v369 = vsel %vm367, %v368, %v293
      %v370 = vshrl.u32 %v369, 7
      %v371 = vand.u32 %v369, 127
      %v372 = vsub.s32 0, %v371
      %v373 = vsel %vm367, %v372, %v371
      %vm374 = vcmp.lt.s32.totalorder %v294, 0
      %v375 = vsub.s32 0, %v294
      %v376 = vsel %vm374, %v375, %v294
      %v377 = vshrl.u32 %v376, 7
      %v378 = vand.u32 %v376, 127
      %v379 = vsub.s32 0, %v378
      %v380 = vsel %vm374, %v379, %v378
      %vm381 = vcmp.lt.s32.totalorder %v295, 0
      %v382 = vsub.s32 0, %v295
      %v383 = vsel %vm381, %v382, %v295
      %v384 = vshrl.u32 %v383, 7
      %v385 = vand.u32 %v383, 127
      %v386 = vsub.s32 0, %v385
      %v387 = vsel %vm381, %v386, %v385
      %vm388 = vcmp.lt.s32.totalorder %v296, 0
      %v389 = vsub.s32 0, %v296
      %v390 = vsel %vm388, %v389, %v296
      %v391 = vshrl.u32 %v390, 7
      %v392 = vand.u32 %v390, 127
      %v393 = vsub.s32 0, %v392
      %v394 = vsel %vm388, %v393, %v392
      %vm395 = vcmp.lt.s32.totalorder %v297, 0
      %v396 = vsub.s32 0, %v297
      %v397 = vsel %vm395, %v396, %v297
      %v398 = vshrl.u32 %v397, 7
      %v399 = vand.u32 %v397, 127
      %v400 = vsub.s32 0, %v399
      %v401 = vsel %vm395, %v400, %v399
      %vm402 = vcmp.lt.s32.totalorder %v298, 0
      %v403 = vsub.s32 0, %v298
      %v404 = vsel %vm402, %v403, %v298
      %v405 = vshrl.u32 %v404, 7
      %v406 = vand.u32 %v404, 127
      %v407 = vsub.s32 0, %v406
      %v408 = vsel %vm402, %v407, %v406
      %vm409 = vcmp.lt.s32.totalorder %v299, 0
      %v410 = vsub.s32 0, %v299
      %v411 = vsel %vm409, %v410, %v299
      %v412 = vshrl.u32 %v411, 7
      %v413 = vand.u32 %v411, 127
      %v414 = vsub.s32 0, %v413
      %v415 = vsel %vm409, %v414, %v413
      %vm416 = vcmp.lt.s32.totalorder %v300, 0
      %v417 = vsub.s32 0, %v300
      %v418 = vsel %vm416, %v417, %v300
      %v419 = vshrl.u32 %v418, 7
      %v420 = vand.u32 %v418, 127
      %v421 = vsub.s32 0, %v420
      %v422 = vsel %vm416, %v421, %v420
      %vm423 = vcmp.lt.s32.totalorder %v301, 0
      %v424 = vsub.s32 0, %v301
      %v425 = vsel %vm423, %v424, %v301
      %v426 = vshrl.u32 %v425, 7
      %v427 = vand.u32 %v425, 127
      %v428 = vsub.s32 0, %v427
      %v429 = vsel %vm423, %v428, %v427
      %vm430 = vcmp.lt.s32.totalorder %v302, 0
      %v431 = vsub.s32 0, %v302
      %v432 = vsel %vm430, %v431, %v302
      %v433 = vshrl.u32 %v432, 7
      %v434 = vand.u32 %v432, 127
      %v435 = vsub.s32 0, %v434
      %v436 = vsel %vm430, %v435, %v434
      %vm437 = vcmp.lt.s32.totalorder %v303, 0
      %v438 = vsub.s32 0, %v303
      %v439 = vsel %vm437, %v438, %v303
      %v440 = vshrl.u32 %v439, 7
      %v441 = vand.u32 %v439, 127
      %v442 = vsub.s32 0, %v441
      %v443 = vsel %vm437, %v442, %v441
      %vm444 = vcmp.lt.s32.totalorder %v304, 0
      %v445 = vsub.s32 0, %v304
      %v446 = vsel %vm444, %v445, %v304
      %v447 = vshrl.u32 %v446, 7
      %v448 = vand.u32 %v446, 127
      %v449 = vsub.s32 0, %v448
      %v450 = vsel %vm444, %v449, %v448
      %vm451 = vcmp.lt.s32.totalorder %v305, 0
      %v452 = vsub.s32 0, %v305
      %v453 = vsel %vm451, %v452, %v305
      %v454 = vshrl.u32 %v453, 7
      %v455 = vand.u32 %v453, 127
      %v456 = vsub.s32 0, %v455
      %v457 = vsel %vm451, %v456, %v455
      %vm458 = vcmp.lt.s32.totalorder %v306, 0
      %v459 = vsub.s32 0, %v306
      %v460 = vsel %vm458, %v459, %v306
      %v461 = vshrl.u32 %v460, 7
      %v462 = vand.u32 %v460, 127
      %v463 = vsub.s32 0, %v462
      %v464 = vsel %vm458, %v463, %v462
      %vm465 = vcmp.lt.s32.totalorder %v307, 0
      %v466 = vsub.s32 0, %v307
      %v467 = vsel %vm465, %v466, %v307
      %v468 = vshrl.u32 %v467, 7
      %v469 = vand.u32 %v467, 127
      %v470 = vsub.s32 0, %v469
      %v471 = vsel %vm465, %v470, %v469
      %vm472 = vcmp.lt.s32.totalorder %v308, 0
      %v473 = vsub.s32 0, %v308
      %v474 = vsel %vm472, %v473, %v308
      %v475 = vshrl.u32 %v474, 7
      %v476 = vand.u32 %v474, 127
      %v477 = vsub.s32 0, %v476
      %v478 = vsel %vm472, %v477, %v476
      %vm479 = vcmp.lt.s32.totalorder %v309, 0
      %v480 = vsub.s32 0, %v309
      %v481 = vsel %vm479, %v480, %v309
      %v482 = vshrl.u32 %v481, 7
      %v483 = vand.u32 %v481, 127
      %v484 = vsub.s32 0, %v483
      %v485 = vsel %vm479, %v484, %v483
      %vm486 = vcmp.lt.s32.totalorder %v310, 0
      %v487 = vsub.s32 0, %v310
      %v488 = vsel %vm486, %v487, %v310
      %v489 = vshrl.u32 %v488, 7
      %v490 = vand.u32 %v488, 127
      %v491 = vsub.s32 0, %v490
      %v492 = vsel %vm486, %v491, %v490
      %vm493 = vcmp.lt.s32.totalorder %v311, 0
      %v494 = vsub.s32 0, %v311
      %v495 = vsel %vm493, %v494, %v311
      %v496 = vshrl.u32 %v495, 7
      %v497 = vand.u32 %v495, 127
      %v498 = vsub.s32 0, %v497
      %v499 = vsel %vm493, %v498, %v497
      %vm500 = vcmp.lt.s32.totalorder %v312, 0
      %v501 = vsub.s32 0, %v312
      %v502 = vsel %vm500, %v501, %v312
      %v503 = vshrl.u32 %v502, 7
      %v504 = vand.u32 %v502, 127
      %v505 = vsub.s32 0, %v504
      %v506 = vsel %vm500, %v505, %v504
      %vm507 = vcmp.lt.s32.totalorder %v313, 0
      %v508 = vsub.s32 0, %v313
      %v509 = vsel %vm507, %v508, %v313
      %v510 = vshrl.u32 %v509, 7
      %v511 = vand.u32 %v509, 127
      %v512 = vsub.s32 0, %v511
      %v513 = vsel %vm507, %v512, %v511
      %vm514 = vcmp.lt.s32.totalorder %v314, 0
      %v515 = vsub.s32 0, %v314
      %v516 = vsel %vm514, %v515, %v314
      %v517 = vshrl.u32 %v516, 7
      %v518 = vand.u32 %v516, 127
      %v519 = vsub.s32 0, %v518
      %v520 = vsel %vm514, %v519, %v518
      %vm521 = vcmp.lt.s32.totalorder %v315, 0
      %v522 = vsub.s32 0, %v315
      %v523 = vsel %vm521, %v522, %v315
      %v524 = vshrl.u32 %v523, 7
      %v525 = vand.u32 %v523, 127
      %v526 = vsub.s32 0, %v525
      %v527 = vsel %vm521, %v526, %v525
      %vm528 = vcmp.lt.s32.totalorder %v316, 0
      %v529 = vsub.s32 0, %v316
      %v530 = vsel %vm528, %v529, %v316
      %v531 = vshrl.u32 %v530, 7
      %v532 = vand.u32 %v530, 127
      %v533 = vsub.s32 0, %v532
      %v534 = vsel %vm528, %v533, %v532
      %vm535 = vcmp.lt.s32.totalorder %v317, 0
      %v536 = vsub.s32 0, %v317
      %v537 = vsel %vm535, %v536, %v317
      %v538 = vshrl.u32 %v537, 7
      %v539 = vand.u32 %v537, 127
      %v540 = vsub.s32 0, %v539
      %v541 = vsel %vm535, %v540, %v539
      %vm542 = vcmp.ne.s32.totalorder %v324, 0
      %vm543 = vcmp.ne.s32.totalorder %v331, 0
      %vm544 = vcmp.ne.s32.totalorder %v338, 0
      %vm545 = vcmp.ne.s32.totalorder %v345, 0
      %vm546 = vcmp.ne.s32.totalorder %v352, 0
      %vm547 = vcmp.ne.s32.totalorder %v359, 0
      %vm548 = vcmp.ne.s32.totalorder %v366, 0
      %vm549 = vcmp.ne.s32.totalorder %v373, 0
      %vm550 = vcmp.ne.s32.totalorder %v380, 0
      %vm551 = vcmp.ne.s32.totalorder %v387, 0
      %vm552 = vcmp.ne.s32.totalorder %v394, 0
      %vm553 = vcmp.ne.s32.totalorder %v401, 0
      %vm554 = vcmp.ne.s32.totalorder %v408, 0
      %vm555 = vcmp.ne.s32.totalorder %v415, 0
      %vm556 = vcmp.ne.s32.totalorder %v422, 0
      %vm557 = vcmp.ne.s32.totalorder %v429, 0
      %vm558 = vcmp.ne.s32.totalorder %v436, 0
      %vm559 = vcmp.ne.s32.totalorder %v443, 0
      %vm560 = vcmp.ne.s32.totalorder %v450, 0
      %vm561 = vcmp.ne.s32.totalorder %v457, 0
      %vm562 = vcmp.ne.s32.totalorder %v464, 0
      %vm563 = vcmp.ne.s32.totalorder %v471, 0
      %vm564 = vcmp.ne.s32.totalorder %v478, 0
      %vm565 = vcmp.ne.s32.totalorder %v485, 0
      %vm566 = vcmp.ne.s32.totalorder %v492, 0
      %vm567 = vcmp.ne.s32.totalorder %v499, 0
      %vm568 = vcmp.ne.s32.totalorder %v506, 0
      %vm569 = vcmp.ne.s32.totalorder %v513, 0
      %vm570 = vcmp.ne.s32.totalorder %v520, 0
      %vm571 = vcmp.ne.s32.totalorder %v527, 0
      %vm572 = vcmp.ne.s32.totalorder %v534, 0
      %vm573 = vcmp.ne.s32.totalorder %v541, 0
      %vm574 = vcmp.lt.s32.totalorder %v324, 0
      %vm575 = vcmp.lt.s32.totalorder %v331, 0
      %vm576 = vcmp.lt.s32.totalorder %v338, 0
      %vm577 = vcmp.lt.s32.totalorder %v345, 0
      %vm578 = vcmp.lt.s32.totalorder %v352, 0
      %vm579 = vcmp.lt.s32.totalorder %v359, 0
      %vm580 = vcmp.lt.s32.totalorder %v366, 0
      %vm581 = vcmp.lt.s32.totalorder %v373, 0
      %vm582 = vcmp.lt.s32.totalorder %v380, 0
      %vm583 = vcmp.lt.s32.totalorder %v387, 0
      %vm584 = vcmp.lt.s32.totalorder %v394, 0
      %vm585 = vcmp.lt.s32.totalorder %v401, 0
      %vm586 = vcmp.lt.s32.totalorder %v408, 0
      %vm587 = vcmp.lt.s32.totalorder %v415, 0
      %vm588 = vcmp.lt.s32.totalorder %v422, 0
      %vm589 = vcmp.lt.s32.totalorder %v429, 0
      %vm590 = vcmp.lt.s32.totalorder %v436, 0
      %vm591 = vcmp.lt.s32.totalorder %v443, 0
      %vm592 = vcmp.lt.s32.totalorder %v450, 0
      %vm593 = vcmp.lt.s32.totalorder %v457, 0
      %vm594 = vcmp.lt.s32.totalorder %v464, 0
      %vm595 = vcmp.lt.s32.totalorder %v471, 0
      %vm596 = vcmp.lt.s32.totalorder %v478, 0
      %vm597 = vcmp.lt.s32.totalorder %v485, 0
      %vm598 = vcmp.lt.s32.totalorder %v492, 0
      %vm599 = vcmp.lt.s32.totalorder %v499, 0
      %vm600 = vcmp.lt.s32.totalorder %v506, 0
      %vm601 = vcmp.lt.s32.totalorder %v513, 0
      %vm602 = vcmp.lt.s32.totalorder %v520, 0
      %vm603 = vcmp.lt.s32.totalorder %v527, 0
      %vm604 = vcmp.lt.s32.totalorder %v534, 0
      %vm605 = vcmp.lt.s32.totalorder %v541, 0
      %vm606 = vmand %vm574, %vm542
      %vm607 = vmand %vm575, %vm543
      %vm608 = vmand %vm576, %vm544
      %vm609 = vmand %vm577, %vm545
      %vm610 = vmand %vm578, %vm546
      %vm611 = vmand %vm579, %vm547
      %vm612 = vmand %vm580, %vm548
      %vm613 = vmand %vm581, %vm549
      %vm614 = vmand %vm582, %vm550
      %vm615 = vmand %vm583, %vm551
      %vm616 = vmand %vm584, %vm552
      %vm617 = vmand %vm585, %vm553
      %vm618 = vmand %vm586, %vm554
      %vm619 = vmand %vm587, %vm555
      %vm620 = vmand %vm588, %vm556
      %vm621 = vmand %vm589, %vm557
      %vm622 = vmand %vm590, %vm558
      %vm623 = vmand %vm591, %vm559
      %vm624 = vmand %vm592, %vm560
      %vm625 = vmand %vm593, %vm561
      %vm626 = vmand %vm594, %vm562
      %vm627 = vmand %vm595, %vm563
      %vm628 = vmand %vm596, %vm564
      %vm629 = vmand %vm597, %vm565
      %vm630 = vmand %vm598, %vm566
      %vm631 = vmand %vm599, %vm567
      %vm632 = vmand %vm600, %vm568
      %vm633 = vmand %vm601, %vm569
      %vm634 = vmand %vm602, %vm570
      %vm635 = vmand %vm603, %vm571
      %vm636 = vmand %vm604, %vm572
      %vm637 = vmand %vm605, %vm573
      %v638 = vadd.s32 %v324, 128
      %v639 = vadd.s32 %v331, 128
      %v640 = vadd.s32 %v338, 128
      %v641 = vadd.s32 %v345, 128
      %v642 = vadd.s32 %v352, 128
      %v643 = vadd.s32 %v359, 128
      %v644 = vadd.s32 %v366, 128
      %v645 = vadd.s32 %v373, 128
      %v646 = vadd.s32 %v380, 128
      %v647 = vadd.s32 %v387, 128
      %v648 = vadd.s32 %v394, 128
      %v649 = vadd.s32 %v401, 128
      %v650 = vadd.s32 %v408, 128
      %v651 = vadd.s32 %v415, 128
      %v652 = vadd.s32 %v422, 128
      %v653 = vadd.s32 %v429, 128
      %v654 = vadd.s32 %v436, 128
      %v655 = vadd.s32 %v443, 128
      %v656 = vadd.s32 %v450, 128
      %v657 = vadd.s32 %v457, 128
      %v658 = vadd.s32 %v464, 128
      %v659 = vadd.s32 %v471, 128
      %v660 = vadd.s32 %v478, 128
      %v661 = vadd.s32 %v485, 128
      %v662 = vadd.s32 %v492, 128
      %v663 = vadd.s32 %v499, 128
      %v664 = vadd.s32 %v506, 128
      %v665 = vadd.s32 %v513, 128
      %v666 = vadd.s32 %v520, 128
      %v667 = vadd.s32 %v527, 128
      %v668 = vadd.s32 %v534, 128
      %v669 = vadd.s32 %v541, 128
      %v670 = vsel %vm606, %v638, %v324
      %v671 = vsel %vm607, %v639, %v331
      %v672 = vsel %vm608, %v640, %v338
      %v673 = vsel %vm609, %v641, %v345
      %v674 = vsel %vm610, %v642, %v352
      %v675 = vsel %vm611, %v643, %v359
      %v676 = vsel %vm612, %v644, %v366
      %v677 = vsel %vm613, %v645, %v373
      %v678 = vsel %vm614, %v646, %v380
      %v679 = vsel %vm615, %v647, %v387
      %v680 = vsel %vm616, %v648, %v394
      %v681 = vsel %vm617, %v649, %v401
      %v682 = vsel %vm618, %v650, %v408
      %v683 = vsel %vm619, %v651, %v415
      %v684 = vsel %vm620, %v652, %v422
      %v685 = vsel %vm621, %v653, %v429
      %v686 = vsel %vm622, %v654, %v436
      %v687 = vsel %vm623, %v655, %v443
      %v688 = vsel %vm624, %v656, %v450
      %v689 = vsel %vm625, %v657, %v457
      %v690 = vsel %vm626, %v658, %v464
      %v691 = vsel %vm627, %v659, %v471
      %v692 = vsel %vm628, %v660, %v478
      %v693 = vsel %vm629, %v661, %v485
      %v694 = vsel %vm630, %v662, %v492
      %v695 = vsel %vm631, %v663, %v499
      %v696 = vsel %vm632, %v664, %v506
      %v697 = vsel %vm633, %v665, %v513
      %v698 = vsel %vm634, %v666, %v520
      %v699 = vsel %vm635, %v667, %v527
      %v700 = vsel %vm636, %v668, %v534
      %v701 = vsel %vm637, %v669, %v541
      %vm702 = vcmp.ne.s32.totalorder %v670, 0
      %vm703 = vcmp.ne.s32.totalorder %v671, 0
      %vm704 = vcmp.ne.s32.totalorder %v672, 0
      %vm705 = vcmp.ne.s32.totalorder %v673, 0
      %vm706 = vcmp.ne.s32.totalorder %v674, 0
      %vm707 = vcmp.ne.s32.totalorder %v675, 0
      %vm708 = vcmp.ne.s32.totalorder %v676, 0
      %vm709 = vcmp.ne.s32.totalorder %v677, 0
      %vm710 = vcmp.ne.s32.totalorder %v678, 0
      %vm711 = vcmp.ne.s32.totalorder %v679, 0
      %vm712 = vcmp.ne.s32.totalorder %v680, 0
      %vm713 = vcmp.ne.s32.totalorder %v681, 0
      %vm714 = vcmp.ne.s32.totalorder %v682, 0
      %vm715 = vcmp.ne.s32.totalorder %v683, 0
      %vm716 = vcmp.ne.s32.totalorder %v684, 0
      %vm717 = vcmp.ne.s32.totalorder %v685, 0
      %vm718 = vcmp.ne.s32.totalorder %v686, 0
      %vm719 = vcmp.ne.s32.totalorder %v687, 0
      %vm720 = vcmp.ne.s32.totalorder %v688, 0
      %vm721 = vcmp.ne.s32.totalorder %v689, 0
      %vm722 = vcmp.ne.s32.totalorder %v690, 0
      %vm723 = vcmp.ne.s32.totalorder %v691, 0
      %vm724 = vcmp.ne.s32.totalorder %v692, 0
      %vm725 = vcmp.ne.s32.totalorder %v693, 0
      %vm726 = vcmp.ne.s32.totalorder %v694, 0
      %vm727 = vcmp.ne.s32.totalorder %v695, 0
      %vm728 = vcmp.ne.s32.totalorder %v696, 0
      %vm729 = vcmp.ne.s32.totalorder %v697, 0
      %vm730 = vcmp.ne.s32.totalorder %v698, 0
      %vm731 = vcmp.ne.s32.totalorder %v699, 0
      %vm732 = vcmp.ne.s32.totalorder %v700, 0
      %vm733 = vcmp.ne.s32.totalorder %v701, 0
      %vm734 = vcmp.ne.s32.totalorder %v670, 127
      %vm735 = vcmp.ne.s32.totalorder %v671, 127
      %vm736 = vcmp.ne.s32.totalorder %v672, 127
      %vm737 = vcmp.ne.s32.totalorder %v673, 127
      %vm738 = vcmp.ne.s32.totalorder %v674, 127
      %vm739 = vcmp.ne.s32.totalorder %v675, 127
      %vm740 = vcmp.ne.s32.totalorder %v676, 127
      %vm741 = vcmp.ne.s32.totalorder %v677, 127
      %vm742 = vcmp.ne.s32.totalorder %v678, 127
      %vm743 = vcmp.ne.s32.totalorder %v679, 127
      %vm744 = vcmp.ne.s32.totalorder %v680, 127
      %vm745 = vcmp.ne.s32.totalorder %v681, 127
      %vm746 = vcmp.ne.s32.totalorder %v682, 127
      %vm747 = vcmp.ne.s32.totalorder %v683, 127
      %vm748 = vcmp.ne.s32.totalorder %v684, 127
      %vm749 = vcmp.ne.s32.totalorder %v685, 127
      %vm750 = vcmp.ne.s32.totalorder %v686, 127
      %vm751 = vcmp.ne.s32.totalorder %v687, 127
      %vm752 = vcmp.ne.s32.totalorder %v688, 127
      %vm753 = vcmp.ne.s32.totalorder %v689, 127
      %vm754 = vcmp.ne.s32.totalorder %v690, 127
      %vm755 = vcmp.ne.s32.totalorder %v691, 127
      %vm756 = vcmp.ne.s32.totalorder %v692, 127
      %vm757 = vcmp.ne.s32.totalorder %v693, 127
      %vm758 = vcmp.ne.s32.totalorder %v694, 127
      %vm759 = vcmp.ne.s32.totalorder %v695, 127
      %vm760 = vcmp.ne.s32.totalorder %v696, 127
      %vm761 = vcmp.ne.s32.totalorder %v697, 127
      %vm762 = vcmp.ne.s32.totalorder %v698, 127
      %vm763 = vcmp.ne.s32.totalorder %v699, 127
      %vm764 = vcmp.ne.s32.totalorder %v700, 127
      %vm765 = vcmp.ne.s32.totalorder %v701, 127
      %v766 = vsel %vm702, 1, 0
      %v767 = vsel %vm703, 1, 0
      %v768 = vsel %vm704, 1, 0
      %v769 = vsel %vm705, 1, 0
      %v770 = vsel %vm706, 1, 0
      %v771 = vsel %vm707, 1, 0
      %v772 = vsel %vm708, 1, 0
      %v773 = vsel %vm709, 1, 0
      %v774 = vsel %vm710, 1, 0
      %v775 = vsel %vm711, 1, 0
      %v776 = vsel %vm712, 1, 0
      %v777 = vsel %vm713, 1, 0
      %v778 = vsel %vm714, 1, 0
      %v779 = vsel %vm715, 1, 0
      %v780 = vsel %vm716, 1, 0
      %v781 = vsel %vm717, 1, 0
      %v782 = vsel %vm718, 1, 0
      %v783 = vsel %vm719, 1, 0
      %v784 = vsel %vm720, 1, 0
      %v785 = vsel %vm721, 1, 0
      %v786 = vsel %vm722, 1, 0
      %v787 = vsel %vm723, 1, 0
      %v788 = vsel %vm724, 1, 0
      %v789 = vsel %vm725, 1, 0
      %v790 = vsel %vm726, 1, 0
      %v791 = vsel %vm727, 1, 0
      %v792 = vsel %vm728, 1, 0
      %v793 = vsel %vm729, 1, 0
      %v794 = vsel %vm730, 1, 0
      %v795 = vsel %vm731, 1, 0
      %v796 = vsel %vm732, 1, 0
      %v797 = vsel %vm733, 1, 0
      %v798 = vcvt.s32.f32 %v766
      %v799 = vcvt.s32.f32 %v767
      %v800 = vcvt.s32.f32 %v768
      %v801 = vcvt.s32.f32 %v769
      %v802 = vcvt.s32.f32 %v770
      %v803 = vcvt.s32.f32 %v771
      %v804 = vcvt.s32.f32 %v772
      %v805 = vcvt.s32.f32 %v773
      %v806 = vcvt.s32.f32 %v774
      %v807 = vcvt.s32.f32 %v775
      %v808 = vcvt.s32.f32 %v776
      %v809 = vcvt.s32.f32 %v777
      %v810 = vcvt.s32.f32 %v778
      %v811 = vcvt.s32.f32 %v779
      %v812 = vcvt.s32.f32 %v780
      %v813 = vcvt.s32.f32 %v781
      %v814 = vcvt.s32.f32 %v782
      %v815 = vcvt.s32.f32 %v783
      %v816 = vcvt.s32.f32 %v784
      %v817 = vcvt.s32.f32 %v785
      %v818 = vcvt.s32.f32 %v786
      %v819 = vcvt.s32.f32 %v787
      %v820 = vcvt.s32.f32 %v788
      %v821 = vcvt.s32.f32 %v789
      %v822 = vcvt.s32.f32 %v790
      %v823 = vcvt.s32.f32 %v791
      %v824 = vcvt.s32.f32 %v792
      %v825 = vcvt.s32.f32 %v793
      %v826 = vcvt.s32.f32 %v794
      %v827 = vcvt.s32.f32 %v795
      %v828 = vcvt.s32.f32 %v796
      %v829 = vcvt.s32.f32 %v797
      %v830 = vsel %vm734, 1, 0
      %v831 = vsel %vm735, 1, 0
      %v832 = vsel %vm736, 1, 0
      %v833 = vsel %vm737, 1, 0
      %v834 = vsel %vm738, 1, 0
      %v835 = vsel %vm739, 1, 0
      %v836 = vsel %vm740, 1, 0
      %v837 = vsel %vm741, 1, 0
      %v838 = vsel %vm742, 1, 0
      %v839 = vsel %vm743, 1, 0
      %v840 = vsel %vm744, 1, 0
      %v841 = vsel %vm745, 1, 0
      %v842 = vsel %vm746, 1, 0
      %v843 = vsel %vm747, 1, 0
      %v844 = vsel %vm748, 1, 0
      %v845 = vsel %vm749, 1, 0
      %v846 = vsel %vm750, 1, 0
      %v847 = vsel %vm751, 1, 0
      %v848 = vsel %vm752, 1, 0
      %v849 = vsel %vm753, 1, 0
      %v850 = vsel %vm754, 1, 0
      %v851 = vsel %vm755, 1, 0
      %v852 = vsel %vm756, 1, 0
      %v853 = vsel %vm757, 1, 0
      %v854 = vsel %vm758, 1, 0
      %v855 = vsel %vm759, 1, 0
      %v856 = vsel %vm760, 1, 0
      %v857 = vsel %vm761, 1, 0
      %v858 = vsel %vm762, 1, 0
      %v859 = vsel %vm763, 1, 0
      %v860 = vsel %vm764, 1, 0
      %v861 = vsel %vm765, 1, 0
      %v862 = vcvt.s32.f32 %v830
      %v863 = vcvt.s32.f32 %v831
      %v864 = vcvt.s32.f32 %v832
      %v865 = vcvt.s32.f32 %v833
      %v866 = vcvt.s32.f32 %v834
      %v867 = vcvt.s32.f32 %v835
      %v868 = vcvt.s32.f32 %v836
      %v869 = vcvt.s32.f32 %v837
      %v870 = vcvt.s32.f32 %v838
      %v871 = vcvt.s32.f32 %v839
      %v872 = vcvt.s32.f32 %v840
      %v873 = vcvt.s32.f32 %v841
      %v874 = vcvt.s32.f32 %v842
      %v875 = vcvt.s32.f32 %v843
      %v876 = vcvt.s32.f32 %v844
      %v877 = vcvt.s32.f32 %v845
      %v878 = vcvt.s32.f32 %v846
      %v879 = vcvt.s32.f32 %v847
      %v880 = vcvt.s32.f32 %v848
      %v881 = vcvt.s32.f32 %v849
      %v882 = vcvt.s32.f32 %v850
      %v883 = vcvt.s32.f32 %v851
      %v884 = vcvt.s32.f32 %v852
      %v885 = vcvt.s32.f32 %v853
      %v886 = vcvt.s32.f32 %v854
      %v887 = vcvt.s32.f32 %v855
      %v888 = vcvt.s32.f32 %v856
      %v889 = vcvt.s32.f32 %v857
      %v890 = vcvt.s32.f32 %v858
      %v891 = vcvt.s32.f32 %v859
      %v892 = vcvt.s32.f32 %v860
      %v893 = vcvt.s32.f32 %v861
      %v894 = vld [vmem:[%s276] sm:$0xff]
      %v895 = vld [vmem:[%s276 + $0x8] sm:$0xff]
      %v896 = vld [vmem:[%s276 + $0x10] sm:$0xff]
      %v897 = vld [vmem:[%s276 + $0x18] sm:$0xff]
      %v898 = vld [vmem:[%s276 + $0x20] sm:$0xff]
      %v899 = vld [vmem:[%s276 + $0x28] sm:$0xff]
      %v900 = vld [vmem:[%s276 + $0x30] sm:$0xff]
      %v901 = vld [vmem:[%s276 + $0x38] sm:$0xff]
      %v902 = vld [vmem:[%s276 + $0x40] sm:$0xff]
      %v903 = vld [vmem:[%s276 + $0x48] sm:$0xff]
      %v904 = vld [vmem:[%s276 + $0x50] sm:$0xff]
      %v905 = vld [vmem:[%s276 + $0x58] sm:$0xff]
      %v906 = vld [vmem:[%s276 + $0x60] sm:$0xff]
      %v907 = vld [vmem:[%s276 + $0x68] sm:$0xff]
      %v908 = vld [vmem:[%s276 + $0x70] sm:$0xff]
      %v909 = vld [vmem:[%s276 + $0x78] sm:$0xff]
      %v910 = vld [vmem:[%s276 + $0x80] sm:$0xff]
      %v911 = vld [vmem:[%s276 + $0x88] sm:$0xff]
      %v912 = vld [vmem:[%s276 + $0x90] sm:$0xff]
      %v913 = vld [vmem:[%s276 + $0x98] sm:$0xff]
      %v914 = vld [vmem:[%s276 + $0xa0] sm:$0xff]
      %v915 = vld [vmem:[%s276 + $0xa8] sm:$0xff]
      %v916 = vld [vmem:[%s276 + $0xb0] sm:$0xff]
      %v917 = vld [vmem:[%s276 + $0xb8] sm:$0xff]
      %v918 = vld [vmem:[%s276 + $0xc0] sm:$0xff]
      %v919 = vld [vmem:[%s276 + $0xc8] sm:$0xff]
      %v920 = vld [vmem:[%s276 + $0xd0] sm:$0xff]
      %v921 = vld [vmem:[%s276 + $0xd8] sm:$0xff]
      %v922 = vld [vmem:[%s276 + $0xe0] sm:$0xff]
      %v923 = vld [vmem:[%s276 + $0xe8] sm:$0xff]
      %v924 = vld [vmem:[%s276 + $0xf0] sm:$0xff]
      %v925 = vld [vmem:[%s276 + $0xf8] sm:$0xff]
      %v926 = vrot.slane %v894, 7
      %v927 = vrot.slane %v895, 7
      %v928 = vrot.slane %v896, 7
      %v929 = vrot.slane %v897, 7
      %v930 = vrot.slane %v898, 7
      %v931 = vrot.slane %v899, 7
      %v932 = vrot.slane %v900, 7
      %v933 = vrot.slane %v901, 7
      %v934 = vrot.slane %v902, 7
      %v935 = vrot.slane %v903, 7
      %v936 = vrot.slane %v904, 7
      %v937 = vrot.slane %v905, 7
      %v938 = vrot.slane %v906, 7
      %v939 = vrot.slane %v907, 7
      %v940 = vrot.slane %v908, 7
      %v941 = vrot.slane %v909, 7
      %v942 = vrot.slane %v910, 7
      %v943 = vrot.slane %v911, 7
      %v944 = vrot.slane %v912, 7
      %v945 = vrot.slane %v913, 7
      %v946 = vrot.slane %v914, 7
      %v947 = vrot.slane %v915, 7
      %v948 = vrot.slane %v916, 7
      %v949 = vrot.slane %v917, 7
      %v950 = vrot.slane %v918, 7
      %v951 = vrot.slane %v919, 7
      %v952 = vrot.slane %v920, 7
      %v953 = vrot.slane %v921, 7
      %v954 = vrot.slane %v922, 7
      %v955 = vrot.slane %v923, 7
      %v956 = vrot.slane %v924, 7
      %v957 = vrot.slane %v925, 7
      %vm958 = vcmp.lt.s32.totalorder %v286, 1
      %v959 = vsel %vm958, %v956, %v957
      %v960 = vsel %vm958, %v955, %v956
      %v961 = vsel %vm958, %v954, %v955
      %v962 = vsel %vm958, %v953, %v954
      %v963 = vsel %vm958, %v952, %v953
      %v964 = vsel %vm958, %v951, %v952
      %v965 = vsel %vm958, %v950, %v951
      %v966 = vsel %vm958, %v949, %v950
      %v967 = vsel %vm958, %v948, %v949
      %v968 = vsel %vm958, %v947, %v948
      %v969 = vsel %vm958, %v946, %v947
      %v970 = vsel %vm958, %v945, %v946
      %v971 = vsel %vm958, %v944, %v945
      %v972 = vsel %vm958, %v943, %v944
      %v973 = vsel %vm958, %v942, %v943
      %v974 = vsel %vm958, %v941, %v942
      %v975 = vsel %vm958, %v940, %v941
      %v976 = vsel %vm958, %v939, %v940
      %v977 = vsel %vm958, %v938, %v939
      %v978 = vsel %vm958, %v937, %v938
      %v979 = vsel %vm958, %v936, %v937
      %v980 = vsel %vm958, %v935, %v936
      %v981 = vsel %vm958, %v934, %v935
      %v982 = vsel %vm958, %v933, %v934
      %v983 = vsel %vm958, %v932, %v933
      %v984 = vsel %vm958, %v931, %v932
      %v985 = vsel %vm958, %v930, %v931
      %v986 = vsel %vm958, %v929, %v930
      %v987 = vsel %vm958, %v928, %v929
      %v988 = vsel %vm958, %v927, %v928
      %v989 = vsel %vm958, %v926, %v927
      %v990 = vsel %vm958, %v957, %v926
      %v991 = vsel %vm702, %v990, 0.0
      %v992 = vsel %vm703, %v989, 0.0
      %v993 = vsel %vm704, %v988, 0.0
      %v994 = vsel %vm705, %v987, 0.0
      %v995 = vsel %vm706, %v986, 0.0
      %v996 = vsel %vm707, %v985, 0.0
      %v997 = vsel %vm708, %v984, 0.0
      %v998 = vsel %vm709, %v983, 0.0
      %v999 = vsel %vm710, %v982, 0.0
      %v1000 = vsel %vm711, %v981, 0.0
      %v1001 = vsel %vm712, %v980, 0.0
      %v1002 = vsel %vm713, %v979, 0.0
      %v1003 = vsel %vm714, %v978, 0.0
      %v1004 = vsel %vm715, %v977, 0.0
      %v1005 = vsel %vm716, %v976, 0.0
      %v1006 = vsel %vm717, %v975, 0.0
      %v1007 = vsel %vm718, %v974, 0.0
      %v1008 = vsel %vm719, %v973, 0.0
      %v1009 = vsel %vm720, %v972, 0.0
      %v1010 = vsel %vm721, %v971, 0.0
      %v1011 = vsel %vm722, %v970, 0.0
      %v1012 = vsel %vm723, %v969, 0.0
      %v1013 = vsel %vm724, %v968, 0.0
      %v1014 = vsel %vm725, %v967, 0.0
      %v1015 = vsel %vm726, %v966, 0.0
      %v1016 = vsel %vm727, %v965, 0.0
      %v1017 = vsel %vm728, %v964, 0.0
      %v1018 = vsel %vm729, %v963, 0.0
      %v1019 = vsel %vm730, %v962, 0.0
      %v1020 = vsel %vm731, %v961, 0.0
      %v1021 = vsel %vm732, %v960, 0.0
      %v1022 = vsel %vm733, %v959, 0.0
      %v1023 = vrot.slane %v894, 1
      %v1024 = vrot.slane %v895, 1
      %v1025 = vrot.slane %v896, 1
      %v1026 = vrot.slane %v897, 1
      %v1027 = vrot.slane %v898, 1
      %v1028 = vrot.slane %v899, 1
      %v1029 = vrot.slane %v900, 1
      %v1030 = vrot.slane %v901, 1
      %v1031 = vrot.slane %v902, 1
      %v1032 = vrot.slane %v903, 1
      %v1033 = vrot.slane %v904, 1
      %v1034 = vrot.slane %v905, 1
      %v1035 = vrot.slane %v906, 1
      %v1036 = vrot.slane %v907, 1
      %v1037 = vrot.slane %v908, 1
      %v1038 = vrot.slane %v909, 1
      %v1039 = vrot.slane %v910, 1
      %v1040 = vrot.slane %v911, 1
      %v1041 = vrot.slane %v912, 1
      %v1042 = vrot.slane %v913, 1
      %v1043 = vrot.slane %v914, 1
      %v1044 = vrot.slane %v915, 1
      %v1045 = vrot.slane %v916, 1
      %v1046 = vrot.slane %v917, 1
      %v1047 = vrot.slane %v918, 1
      %v1048 = vrot.slane %v919, 1
      %v1049 = vrot.slane %v920, 1
      %v1050 = vrot.slane %v921, 1
      %v1051 = vrot.slane %v922, 1
      %v1052 = vrot.slane %v923, 1
      %v1053 = vrot.slane %v924, 1
      %v1054 = vrot.slane %v925, 1
      %vm1055 = vcmp.lt.s32.totalorder %v286, 7
      %v1056 = vsel %vm1055, %v1053, %v1054
      %v1057 = vsel %vm1055, %v1052, %v1053
      %v1058 = vsel %vm1055, %v1051, %v1052
      %v1059 = vsel %vm1055, %v1050, %v1051
      %v1060 = vsel %vm1055, %v1049, %v1050
      %v1061 = vsel %vm1055, %v1048, %v1049
      %v1062 = vsel %vm1055, %v1047, %v1048
      %v1063 = vsel %vm1055, %v1046, %v1047
      %v1064 = vsel %vm1055, %v1045, %v1046
      %v1065 = vsel %vm1055, %v1044, %v1045
      %v1066 = vsel %vm1055, %v1043, %v1044
      %v1067 = vsel %vm1055, %v1042, %v1043
      %v1068 = vsel %vm1055, %v1041, %v1042
      %v1069 = vsel %vm1055, %v1040, %v1041
      %v1070 = vsel %vm1055, %v1039, %v1040
      %v1071 = vsel %vm1055, %v1038, %v1039
      %v1072 = vsel %vm1055, %v1037, %v1038
      %v1073 = vsel %vm1055, %v1036, %v1037
      %v1074 = vsel %vm1055, %v1035, %v1036
      %v1075 = vsel %vm1055, %v1034, %v1035
      %v1076 = vsel %vm1055, %v1033, %v1034
      %v1077 = vsel %vm1055, %v1032, %v1033
      %v1078 = vsel %vm1055, %v1031, %v1032
      %v1079 = vsel %vm1055, %v1030, %v1031
      %v1080 = vsel %vm1055, %v1029, %v1030
      %v1081 = vsel %vm1055, %v1028, %v1029
      %v1082 = vsel %vm1055, %v1027, %v1028
      %v1083 = vsel %vm1055, %v1026, %v1027
      %v1084 = vsel %vm1055, %v1025, %v1026
      %v1085 = vsel %vm1055, %v1024, %v1025
      %v1086 = vsel %vm1055, %v1023, %v1024
      %v1087 = vsel %vm1055, %v1054, %v1023
      %v1088 = vsel %vm734, %v1086, 0.0
      %v1089 = vsel %vm735, %v1085, 0.0
      %v1090 = vsel %vm736, %v1084, 0.0
      %v1091 = vsel %vm737, %v1083, 0.0
      %v1092 = vsel %vm738, %v1082, 0.0
      %v1093 = vsel %vm739, %v1081, 0.0
      %v1094 = vsel %vm740, %v1080, 0.0
      %v1095 = vsel %vm741, %v1079, 0.0
      %v1096 = vsel %vm742, %v1078, 0.0
      %v1097 = vsel %vm743, %v1077, 0.0
      %v1098 = vsel %vm744, %v1076, 0.0
      %v1099 = vsel %vm745, %v1075, 0.0
      %v1100 = vsel %vm746, %v1074, 0.0
      %v1101 = vsel %vm747, %v1073, 0.0
      %v1102 = vsel %vm748, %v1072, 0.0
      %v1103 = vsel %vm749, %v1071, 0.0
      %v1104 = vsel %vm750, %v1070, 0.0
      %v1105 = vsel %vm751, %v1069, 0.0
      %v1106 = vsel %vm752, %v1068, 0.0
      %v1107 = vsel %vm753, %v1067, 0.0
      %v1108 = vsel %vm754, %v1066, 0.0
      %v1109 = vsel %vm755, %v1065, 0.0
      %v1110 = vsel %vm756, %v1064, 0.0
      %v1111 = vsel %vm757, %v1063, 0.0
      %v1112 = vsel %vm758, %v1062, 0.0
      %v1113 = vsel %vm759, %v1061, 0.0
      %v1114 = vsel %vm760, %v1060, 0.0
      %v1115 = vsel %vm761, %v1059, 0.0
      %v1116 = vsel %vm762, %v1058, 0.0
      %v1117 = vsel %vm763, %v1057, 0.0
      %v1118 = vsel %vm764, %v1056, 0.0
      %v1119 = vsel %vm765, %v1087, 0.0
      %v1120 = vld [vmem:[%s1] sm:$0x1]
      %v1121 = vld [vmem:[%s1 + $0x1] sm:$0x1]
      %v1122 = vld [vmem:[%s1 + $0x2] sm:$0x1]
      %1124 = vset.pattern.permute.xlu0 0
      %1125 = vperm.xlu0 %1124, %v991
      %v1126 = vpop.permute.xlu0 %1125
      %1129 = vset.pattern.permute.xlu0 0
      %1130 = vperm.xlu0 %1129, %v992
      %v1131 = vpop.permute.xlu0 %1130
      %1134 = vset.pattern.permute.xlu0 0
      %1135 = vperm.xlu0 %1134, %v993
      %v1136 = vpop.permute.xlu0 %1135
      %1139 = vset.pattern.permute.xlu0 0
      %1140 = vperm.xlu0 %1139, %v994
      %v1141 = vpop.permute.xlu0 %1140
      %1144 = vset.pattern.permute.xlu0 0
      %1145 = vperm.xlu0 %1144, %v995
      %v1146 = vpop.permute.xlu0 %1145
      %1149 = vset.pattern.permute.xlu0 0
      %1150 = vperm.xlu0 %1149, %v996
      %v1151 = vpop.permute.xlu0 %1150
      %1154 = vset.pattern.permute.xlu0 0
      %1155 = vperm.xlu0 %1154, %v997
      %v1156 = vpop.permute.xlu0 %1155
      %1159 = vset.pattern.permute.xlu0 0
      %1160 = vperm.xlu0 %1159, %v998
      %v1161 = vpop.permute.xlu0 %1160
      %1164 = vset.pattern.permute.xlu0 0
      %1165 = vperm.xlu0 %1164, %v999
      %v1166 = vpop.permute.xlu0 %1165
      %1169 = vset.pattern.permute.xlu0 0
      %1170 = vperm.xlu0 %1169, %v1000
      %v1171 = vpop.permute.xlu0 %1170
      %1174 = vset.pattern.permute.xlu0 0
      %1175 = vperm.xlu0 %1174, %v1001
      %v1176 = vpop.permute.xlu0 %1175
      %1179 = vset.pattern.permute.xlu0 0
      %1180 = vperm.xlu0 %1179, %v1002
      %v1181 = vpop.permute.xlu0 %1180
      %1184 = vset.pattern.permute.xlu0 0
      %1185 = vperm.xlu0 %1184, %v1003
      %v1186 = vpop.permute.xlu0 %1185
      %1189 = vset.pattern.permute.xlu0 0
      %1190 = vperm.xlu0 %1189, %v1004
      %v1191 = vpop.permute.xlu0 %1190
      %1194 = vset.pattern.permute.xlu0 0
      %1195 = vperm.xlu0 %1194, %v1005
      %v1196 = vpop.permute.xlu0 %1195
      %1199 = vset.pattern.permute.xlu0 0
      %1200 = vperm.xlu0 %1199, %v1006
      %v1201 = vpop.permute.xlu0 %1200
      %1204 = vset.pattern.permute.xlu0 0
      %1205 = vperm.xlu0 %1204, %v1007
      %v1206 = vpop.permute.xlu0 %1205
      %1209 = vset.pattern.permute.xlu0 0
      %1210 = vperm.xlu0 %1209, %v1008
      %v1211 = vpop.permute.xlu0 %1210
      %1214 = vset.pattern.permute.xlu0 0
      %1215 = vperm.xlu0 %1214, %v1009
      %v1216 = vpop.permute.xlu0 %1215
      %1219 = vset.pattern.permute.xlu0 0
      %1220 = vperm.xlu0 %1219, %v1010
      %v1221 = vpop.permute.xlu0 %1220
      %1224 = vset.pattern.permute.xlu0 0
      %1225 = vperm.xlu0 %1224, %v1011
      %v1226 = vpop.permute.xlu0 %1225
      %1229 = vset.pattern.permute.xlu0 0
      %1230 = vperm.xlu0 %1229, %v1012
      %v1231 = vpop.permute.xlu0 %1230
      %1234 = vset.pattern.permute.xlu0 0
      %1235 = vperm.xlu0 %1234, %v1013
      %v1236 = vpop.permute.xlu0 %1235
      %1239 = vset.pattern.permute.xlu0 0
      %1240 = vperm.xlu0 %1239, %v1014
      %v1241 = vpop.permute.xlu0 %1240
      %1244 = vset.pattern.permute.xlu0 0
      %1245 = vperm.xlu0 %1244, %v1015
      %v1246 = vpop.permute.xlu0 %1245
      %1249 = vset.pattern.permute.xlu0 0
      %1250 = vperm.xlu0 %1249, %v1016
      %v1251 = vpop.permute.xlu0 %1250
      %1254 = vset.pattern.permute.xlu0 0
      %1255 = vperm.xlu0 %1254, %v1017
      %v1256 = vpop.permute.xlu0 %1255
      %1259 = vset.pattern.permute.xlu0 0
      %1260 = vperm.xlu0 %1259, %v1018
      %v1261 = vpop.permute.xlu0 %1260
      %1264 = vset.pattern.permute.xlu0 0
      %1265 = vperm.xlu0 %1264, %v1019
      %v1266 = vpop.permute.xlu0 %1265
      %1269 = vset.pattern.permute.xlu0 0
      %1270 = vperm.xlu0 %1269, %v1020
      %v1271 = vpop.permute.xlu0 %1270
      %1274 = vset.pattern.permute.xlu0 0
      %1275 = vperm.xlu0 %1274, %v1021
      %v1276 = vpop.permute.xlu0 %1275
      %1279 = vset.pattern.permute.xlu0 0
      %1280 = vperm.xlu0 %1279, %v1022
      %v1281 = vpop.permute.xlu0 %1280
      %v1284 = vlaneseq
      %v1285 = vshrl.u32 %v1284, 7
      %v1286 = vsub.s32 0, %v1285
      %v1287 = vrot.slane %v1120, %v1286
      %v1289 = vmul.f32 %v1126, %v1287
      %v1290 = vmul.f32 %v1131, %v1287
      %v1291 = vmul.f32 %v1136, %v1287
      %v1292 = vmul.f32 %v1141, %v1287
      %v1293 = vmul.f32 %v1146, %v1287
      %v1294 = vmul.f32 %v1151, %v1287
      %v1295 = vmul.f32 %v1156, %v1287
      %v1296 = vmul.f32 %v1161, %v1287
      %v1297 = vmul.f32 %v1166, %v1287
      %v1298 = vmul.f32 %v1171, %v1287
      %v1299 = vmul.f32 %v1176, %v1287
      %v1300 = vmul.f32 %v1181, %v1287
      %v1301 = vmul.f32 %v1186, %v1287
      %v1302 = vmul.f32 %v1191, %v1287
      %v1303 = vmul.f32 %v1196, %v1287
      %v1304 = vmul.f32 %v1201, %v1287
      %v1305 = vmul.f32 %v1206, %v1287
      %v1306 = vmul.f32 %v1211, %v1287
      %v1307 = vmul.f32 %v1216, %v1287
      %v1308 = vmul.f32 %v1221, %v1287
      %v1309 = vmul.f32 %v1226, %v1287
      %v1310 = vmul.f32 %v1231, %v1287
      %v1311 = vmul.f32 %v1236, %v1287
      %v1312 = vmul.f32 %v1241, %v1287
      %v1313 = vmul.f32 %v1246, %v1287
      %v1314 = vmul.f32 %v1251, %v1287
      %v1315 = vmul.f32 %v1256, %v1287
      %v1316 = vmul.f32 %v1261, %v1287
      %v1317 = vmul.f32 %v1266, %v1287
      %v1318 = vmul.f32 %v1271, %v1287
      %v1319 = vmul.f32 %v1276, %v1287
      %v1320 = vmul.f32 %v1281, %v1287
      %v1321 = vadd.f32 %v1289, 0.0
      %v1322 = vadd.f32 %v1290, 0.0
      %v1323 = vadd.f32 %v1291, 0.0
      %v1324 = vadd.f32 %v1292, 0.0
      %v1325 = vadd.f32 %v1293, 0.0
      %v1326 = vadd.f32 %v1294, 0.0
      %v1327 = vadd.f32 %v1295, 0.0
      %v1328 = vadd.f32 %v1296, 0.0
      %v1329 = vadd.f32 %v1297, 0.0
      %v1330 = vadd.f32 %v1298, 0.0
      %v1331 = vadd.f32 %v1299, 0.0
      %v1332 = vadd.f32 %v1300, 0.0
      %v1333 = vadd.f32 %v1301, 0.0
      %v1334 = vadd.f32 %v1302, 0.0
      %v1335 = vadd.f32 %v1303, 0.0
      %v1336 = vadd.f32 %v1304, 0.0
      %v1337 = vadd.f32 %v1305, 0.0
      %v1338 = vadd.f32 %v1306, 0.0
      %v1339 = vadd.f32 %v1307, 0.0
      %v1340 = vadd.f32 %v1308, 0.0
      %v1341 = vadd.f32 %v1309, 0.0
      %v1342 = vadd.f32 %v1310, 0.0
      %v1343 = vadd.f32 %v1311, 0.0
      %v1344 = vadd.f32 %v1312, 0.0
      %v1345 = vadd.f32 %v1313, 0.0
      %v1346 = vadd.f32 %v1314, 0.0
      %v1347 = vadd.f32 %v1315, 0.0
      %v1348 = vadd.f32 %v1316, 0.0
      %v1349 = vadd.f32 %v1317, 0.0
      %v1350 = vadd.f32 %v1318, 0.0
      %v1351 = vadd.f32 %v1319, 0.0
      %v1352 = vadd.f32 %v1320, 0.0
      %1354 = vset.pattern.permute.xlu0 0
      %1355 = vperm.xlu0 %1354, %v894
      %v1356 = vpop.permute.xlu0 %1355
      %1359 = vset.pattern.permute.xlu0 0
      %1360 = vperm.xlu0 %1359, %v895
      %v1361 = vpop.permute.xlu0 %1360
      %1364 = vset.pattern.permute.xlu0 0
      %1365 = vperm.xlu0 %1364, %v896
      %v1366 = vpop.permute.xlu0 %1365
      %1369 = vset.pattern.permute.xlu0 0
      %1370 = vperm.xlu0 %1369, %v897
      %v1371 = vpop.permute.xlu0 %1370
      %1374 = vset.pattern.permute.xlu0 0
      %1375 = vperm.xlu0 %1374, %v898
      %v1376 = vpop.permute.xlu0 %1375
      %1379 = vset.pattern.permute.xlu0 0
      %1380 = vperm.xlu0 %1379, %v899
      %v1381 = vpop.permute.xlu0 %1380
      %1384 = vset.pattern.permute.xlu0 0
      %1385 = vperm.xlu0 %1384, %v900
      %v1386 = vpop.permute.xlu0 %1385
      %1389 = vset.pattern.permute.xlu0 0
      %1390 = vperm.xlu0 %1389, %v901
      %v1391 = vpop.permute.xlu0 %1390
      %1394 = vset.pattern.permute.xlu0 0
      %1395 = vperm.xlu0 %1394, %v902
      %v1396 = vpop.permute.xlu0 %1395
      %1399 = vset.pattern.permute.xlu0 0
      %1400 = vperm.xlu0 %1399, %v903
      %v1401 = vpop.permute.xlu0 %1400
      %1404 = vset.pattern.permute.xlu0 0
      %1405 = vperm.xlu0 %1404, %v904
      %v1406 = vpop.permute.xlu0 %1405
      %1409 = vset.pattern.permute.xlu0 0
      %1410 = vperm.xlu0 %1409, %v905
      %v1411 = vpop.permute.xlu0 %1410
      %1414 = vset.pattern.permute.xlu0 0
      %1415 = vperm.xlu0 %1414, %v906
      %v1416 = vpop.permute.xlu0 %1415
      %1419 = vset.pattern.permute.xlu0 0
      %1420 = vperm.xlu0 %1419, %v907
      %v1421 = vpop.permute.xlu0 %1420
      %1424 = vset.pattern.permute.xlu0 0
      %1425 = vperm.xlu0 %1424, %v908
      %v1426 = vpop.permute.xlu0 %1425
      %1429 = vset.pattern.permute.xlu0 0
      %1430 = vperm.xlu0 %1429, %v909
      %v1431 = vpop.permute.xlu0 %1430
      %1434 = vset.pattern.permute.xlu0 0
      %1435 = vperm.xlu0 %1434, %v910
      %v1436 = vpop.permute.xlu0 %1435
      %1439 = vset.pattern.permute.xlu0 0
      %1440 = vperm.xlu0 %1439, %v911
      %v1441 = vpop.permute.xlu0 %1440
      %1444 = vset.pattern.permute.xlu0 0
      %1445 = vperm.xlu0 %1444, %v912
      %v1446 = vpop.permute.xlu0 %1445
      %1449 = vset.pattern.permute.xlu0 0
      %1450 = vperm.xlu0 %1449, %v913
      %v1451 = vpop.permute.xlu0 %1450
      %1454 = vset.pattern.permute.xlu0 0
      %1455 = vperm.xlu0 %1454, %v914
      %v1456 = vpop.permute.xlu0 %1455
      %1459 = vset.pattern.permute.xlu0 0
      %1460 = vperm.xlu0 %1459, %v915
      %v1461 = vpop.permute.xlu0 %1460
      %1464 = vset.pattern.permute.xlu0 0
      %1465 = vperm.xlu0 %1464, %v916
      %v1466 = vpop.permute.xlu0 %1465
      %1469 = vset.pattern.permute.xlu0 0
      %1470 = vperm.xlu0 %1469, %v917
      %v1471 = vpop.permute.xlu0 %1470
      %1474 = vset.pattern.permute.xlu0 0
      %1475 = vperm.xlu0 %1474, %v918
      %v1476 = vpop.permute.xlu0 %1475
      %1479 = vset.pattern.permute.xlu0 0
      %1480 = vperm.xlu0 %1479, %v919
      %v1481 = vpop.permute.xlu0 %1480
      %1484 = vset.pattern.permute.xlu0 0
      %1485 = vperm.xlu0 %1484, %v920
      %v1486 = vpop.permute.xlu0 %1485
      %1489 = vset.pattern.permute.xlu0 0
      %1490 = vperm.xlu0 %1489, %v921
      %v1491 = vpop.permute.xlu0 %1490
      %1494 = vset.pattern.permute.xlu0 0
      %1495 = vperm.xlu0 %1494, %v922
      %v1496 = vpop.permute.xlu0 %1495
      %1499 = vset.pattern.permute.xlu0 0
      %1500 = vperm.xlu0 %1499, %v923
      %v1501 = vpop.permute.xlu0 %1500
      %1504 = vset.pattern.permute.xlu0 0
      %1505 = vperm.xlu0 %1504, %v924
      %v1506 = vpop.permute.xlu0 %1505
      %1509 = vset.pattern.permute.xlu0 0
      %1510 = vperm.xlu0 %1509, %v925
      %v1511 = vpop.permute.xlu0 %1510
      %v1514 = vlaneseq
      %v1515 = vshrl.u32 %v1514, 7
      %v1516 = vsub.s32 0, %v1515
      %v1517 = vrot.slane %v1121, %v1516
      %v1519 = vmul.f32 %v1356, %v1517
      %v1520 = vmul.f32 %v1361, %v1517
      %v1521 = vmul.f32 %v1366, %v1517
      %v1522 = vmul.f32 %v1371, %v1517
      %v1523 = vmul.f32 %v1376, %v1517
      %v1524 = vmul.f32 %v1381, %v1517
      %v1525 = vmul.f32 %v1386, %v1517
      %v1526 = vmul.f32 %v1391, %v1517
      %v1527 = vmul.f32 %v1396, %v1517
      %v1528 = vmul.f32 %v1401, %v1517
      %v1529 = vmul.f32 %v1406, %v1517
      %v1530 = vmul.f32 %v1411, %v1517
      %v1531 = vmul.f32 %v1416, %v1517
      %v1532 = vmul.f32 %v1421, %v1517
      %v1533 = vmul.f32 %v1426, %v1517
      %v1534 = vmul.f32 %v1431, %v1517
      %v1535 = vmul.f32 %v1436, %v1517
      %v1536 = vmul.f32 %v1441, %v1517
      %v1537 = vmul.f32 %v1446, %v1517
      %v1538 = vmul.f32 %v1451, %v1517
      %v1539 = vmul.f32 %v1456, %v1517
      %v1540 = vmul.f32 %v1461, %v1517
      %v1541 = vmul.f32 %v1466, %v1517
      %v1542 = vmul.f32 %v1471, %v1517
      %v1543 = vmul.f32 %v1476, %v1517
      %v1544 = vmul.f32 %v1481, %v1517
      %v1545 = vmul.f32 %v1486, %v1517
      %v1546 = vmul.f32 %v1491, %v1517
      %v1547 = vmul.f32 %v1496, %v1517
      %v1548 = vmul.f32 %v1501, %v1517
      %v1549 = vmul.f32 %v1506, %v1517
      %v1550 = vmul.f32 %v1511, %v1517
      %v1551 = vadd.f32 %v1321, %v1519
      %v1552 = vadd.f32 %v1322, %v1520
      %v1553 = vadd.f32 %v1323, %v1521
      %v1554 = vadd.f32 %v1324, %v1522
      %v1555 = vadd.f32 %v1325, %v1523
      %v1556 = vadd.f32 %v1326, %v1524
      %v1557 = vadd.f32 %v1327, %v1525
      %v1558 = vadd.f32 %v1328, %v1526
      %v1559 = vadd.f32 %v1329, %v1527
      %v1560 = vadd.f32 %v1330, %v1528
      %v1561 = vadd.f32 %v1331, %v1529
      %v1562 = vadd.f32 %v1332, %v1530
      %v1563 = vadd.f32 %v1333, %v1531
      %v1564 = vadd.f32 %v1334, %v1532
      %v1565 = vadd.f32 %v1335, %v1533
      %v1566 = vadd.f32 %v1336, %v1534
      %v1567 = vadd.f32 %v1337, %v1535
      %v1568 = vadd.f32 %v1338, %v1536
      %v1569 = vadd.f32 %v1339, %v1537
      %v1570 = vadd.f32 %v1340, %v1538
      %v1571 = vadd.f32 %v1341, %v1539
      %v1572 = vadd.f32 %v1342, %v1540
      %v1573 = vadd.f32 %v1343, %v1541
      %v1574 = vadd.f32 %v1344, %v1542
      %v1575 = vadd.f32 %v1345, %v1543
      %v1576 = vadd.f32 %v1346, %v1544
      %v1577 = vadd.f32 %v1347, %v1545
      %v1578 = vadd.f32 %v1348, %v1546
      %v1579 = vadd.f32 %v1349, %v1547
      %v1580 = vadd.f32 %v1350, %v1548
      %v1581 = vadd.f32 %v1351, %v1549
      %v1582 = vadd.f32 %v1352, %v1550
      %1584 = vset.pattern.permute.xlu0 0
      %1585 = vperm.xlu0 %1584, %v1088
      %v1586 = vpop.permute.xlu0 %1585
      %1589 = vset.pattern.permute.xlu0 0
      %1590 = vperm.xlu0 %1589, %v1089
      %v1591 = vpop.permute.xlu0 %1590
      %1594 = vset.pattern.permute.xlu0 0
      %1595 = vperm.xlu0 %1594, %v1090
      %v1596 = vpop.permute.xlu0 %1595
      %1599 = vset.pattern.permute.xlu0 0
      %1600 = vperm.xlu0 %1599, %v1091
      %v1601 = vpop.permute.xlu0 %1600
      %1604 = vset.pattern.permute.xlu0 0
      %1605 = vperm.xlu0 %1604, %v1092
      %v1606 = vpop.permute.xlu0 %1605
      %1609 = vset.pattern.permute.xlu0 0
      %1610 = vperm.xlu0 %1609, %v1093
      %v1611 = vpop.permute.xlu0 %1610
      %1614 = vset.pattern.permute.xlu0 0
      %1615 = vperm.xlu0 %1614, %v1094
      %v1616 = vpop.permute.xlu0 %1615
      %1619 = vset.pattern.permute.xlu0 0
      %1620 = vperm.xlu0 %1619, %v1095
      %v1621 = vpop.permute.xlu0 %1620
      %1624 = vset.pattern.permute.xlu0 0
      %1625 = vperm.xlu0 %1624, %v1096
      %v1626 = vpop.permute.xlu0 %1625
      %1629 = vset.pattern.permute.xlu0 0
      %1630 = vperm.xlu0 %1629, %v1097
      %v1631 = vpop.permute.xlu0 %1630
      %1634 = vset.pattern.permute.xlu0 0
      %1635 = vperm.xlu0 %1634, %v1098
      %v1636 = vpop.permute.xlu0 %1635
      %1639 = vset.pattern.permute.xlu0 0
      %1640 = vperm.xlu0 %1639, %v1099
      %v1641 = vpop.permute.xlu0 %1640
      %1644 = vset.pattern.permute.xlu0 0
      %1645 = vperm.xlu0 %1644, %v1100
      %v1646 = vpop.permute.xlu0 %1645
      %1649 = vset.pattern.permute.xlu0 0
      %1650 = vperm.xlu0 %1649, %v1101
      %v1651 = vpop.permute.xlu0 %1650
      %1654 = vset.pattern.permute.xlu0 0
      %1655 = vperm.xlu0 %1654, %v1102
      %v1656 = vpop.permute.xlu0 %1655
      %1659 = vset.pattern.permute.xlu0 0
      %1660 = vperm.xlu0 %1659, %v1103
      %v1661 = vpop.permute.xlu0 %1660
      %1664 = vset.pattern.permute.xlu0 0
      %1665 = vperm.xlu0 %1664, %v1104
      %v1666 = vpop.permute.xlu0 %1665
      %1669 = vset.pattern.permute.xlu0 0
      %1670 = vperm.xlu0 %1669, %v1105
      %v1671 = vpop.permute.xlu0 %1670
      %1674 = vset.pattern.permute.xlu0 0
      %1675 = vperm.xlu0 %1674, %v1106
      %v1676 = vpop.permute.xlu0 %1675
      %1679 = vset.pattern.permute.xlu0 0
      %1680 = vperm.xlu0 %1679, %v1107
      %v1681 = vpop.permute.xlu0 %1680
      %1684 = vset.pattern.permute.xlu0 0
      %1685 = vperm.xlu0 %1684, %v1108
      %v1686 = vpop.permute.xlu0 %1685
      %1689 = vset.pattern.permute.xlu0 0
      %1690 = vperm.xlu0 %1689, %v1109
      %v1691 = vpop.permute.xlu0 %1690
      %1694 = vset.pattern.permute.xlu0 0
      %1695 = vperm.xlu0 %1694, %v1110
      %v1696 = vpop.permute.xlu0 %1695
      %1699 = vset.pattern.permute.xlu0 0
      %1700 = vperm.xlu0 %1699, %v1111
      %v1701 = vpop.permute.xlu0 %1700
      %1704 = vset.pattern.permute.xlu0 0
      %1705 = vperm.xlu0 %1704, %v1112
      %v1706 = vpop.permute.xlu0 %1705
      %1709 = vset.pattern.permute.xlu0 0
      %1710 = vperm.xlu0 %1709, %v1113
      %v1711 = vpop.permute.xlu0 %1710
      %1714 = vset.pattern.permute.xlu0 0
      %1715 = vperm.xlu0 %1714, %v1114
      %v1716 = vpop.permute.xlu0 %1715
      %1719 = vset.pattern.permute.xlu0 0
      %1720 = vperm.xlu0 %1719, %v1115
      %v1721 = vpop.permute.xlu0 %1720
      %1724 = vset.pattern.permute.xlu0 0
      %1725 = vperm.xlu0 %1724, %v1116
      %v1726 = vpop.permute.xlu0 %1725
      %1729 = vset.pattern.permute.xlu0 0
      %1730 = vperm.xlu0 %1729, %v1117
      %v1731 = vpop.permute.xlu0 %1730
      %1734 = vset.pattern.permute.xlu0 0
      %1735 = vperm.xlu0 %1734, %v1118
      %v1736 = vpop.permute.xlu0 %1735
      %1739 = vset.pattern.permute.xlu0 0
      %1740 = vperm.xlu0 %1739, %v1119
      %v1741 = vpop.permute.xlu0 %1740
      %v1744 = vlaneseq
      %v1745 = vshrl.u32 %v1744, 7
      %v1746 = vsub.s32 0, %v1745
      %v1747 = vrot.slane %v1122, %v1746
      %v1749 = vmul.f32 %v1586, %v1747
      %v1750 = vmul.f32 %v1591, %v1747
      %v1751 = vmul.f32 %v1596, %v1747
      %v1752 = vmul.f32 %v1601, %v1747
      %v1753 = vmul.f32 %v1606, %v1747
      %v1754 = vmul.f32 %v1611, %v1747
      %v1755 = vmul.f32 %v1616, %v1747
      %v1756 = vmul.f32 %v1621, %v1747
      %v1757 = vmul.f32 %v1626, %v1747
      %v1758 = vmul.f32 %v1631, %v1747
      %v1759 = vmul.f32 %v1636, %v1747
      %v1760 = vmul.f32 %v1641, %v1747
      %v1761 = vmul.f32 %v1646, %v1747
      %v1762 = vmul.f32 %v1651, %v1747
      %v1763 = vmul.f32 %v1656, %v1747
      %v1764 = vmul.f32 %v1661, %v1747
      %v1765 = vmul.f32 %v1666, %v1747
      %v1766 = vmul.f32 %v1671, %v1747
      %v1767 = vmul.f32 %v1676, %v1747
      %v1768 = vmul.f32 %v1681, %v1747
      %v1769 = vmul.f32 %v1686, %v1747
      %v1770 = vmul.f32 %v1691, %v1747
      %v1771 = vmul.f32 %v1696, %v1747
      %v1772 = vmul.f32 %v1701, %v1747
      %v1773 = vmul.f32 %v1706, %v1747
      %v1774 = vmul.f32 %v1711, %v1747
      %v1775 = vmul.f32 %v1716, %v1747
      %v1776 = vmul.f32 %v1721, %v1747
      %v1777 = vmul.f32 %v1726, %v1747
      %v1778 = vmul.f32 %v1731, %v1747
      %v1779 = vmul.f32 %v1736, %v1747
      %v1780 = vmul.f32 %v1741, %v1747
      %v1781 = vadd.f32 %v1551, %v1749
      %v1782 = vadd.f32 %v1552, %v1750
      %v1783 = vadd.f32 %v1553, %v1751
      %v1784 = vadd.f32 %v1554, %v1752
      %v1785 = vadd.f32 %v1555, %v1753
      %v1786 = vadd.f32 %v1556, %v1754
      %v1787 = vadd.f32 %v1557, %v1755
      %v1788 = vadd.f32 %v1558, %v1756
      %v1789 = vadd.f32 %v1559, %v1757
      %v1790 = vadd.f32 %v1560, %v1758
      %v1791 = vadd.f32 %v1561, %v1759
      %v1792 = vadd.f32 %v1562, %v1760
      %v1793 = vadd.f32 %v1563, %v1761
      %v1794 = vadd.f32 %v1564, %v1762
      %v1795 = vadd.f32 %v1565, %v1763
      %v1796 = vadd.f32 %v1566, %v1764
      %v1797 = vadd.f32 %v1567, %v1765
      %v1798 = vadd.f32 %v1568, %v1766
      %v1799 = vadd.f32 %v1569, %v1767
      %v1800 = vadd.f32 %v1570, %v1768
      %v1801 = vadd.f32 %v1571, %v1769
      %v1802 = vadd.f32 %v1572, %v1770
      %v1803 = vadd.f32 %v1573, %v1771
      %v1804 = vadd.f32 %v1574, %v1772
      %v1805 = vadd.f32 %v1575, %v1773
      %v1806 = vadd.f32 %v1576, %v1774
      %v1807 = vadd.f32 %v1577, %v1775
      %v1808 = vadd.f32 %v1578, %v1776
      %v1809 = vadd.f32 %v1579, %v1777
      %v1810 = vadd.f32 %v1580, %v1778
      %v1811 = vadd.f32 %v1581, %v1779
      %v1812 = vadd.f32 %v1582, %v1780
      %v1813 = vld [vmem:[%s2] sm:$0x1]
      %v1815 = vlaneseq
      %v1816 = vshrl.u32 %v1815, 7
      %v1817 = vsub.s32 0, %v1816
      %v1818 = vrot.slane %v1813, %v1817
      %v1820 = vadd.f32 %v1781, %v1818
      %v1821 = vadd.f32 %v1782, %v1818
      %v1822 = vadd.f32 %v1783, %v1818
      %v1823 = vadd.f32 %v1784, %v1818
      %v1824 = vadd.f32 %v1785, %v1818
      %v1825 = vadd.f32 %v1786, %v1818
      %v1826 = vadd.f32 %v1787, %v1818
      %v1827 = vadd.f32 %v1788, %v1818
      %v1828 = vadd.f32 %v1789, %v1818
      %v1829 = vadd.f32 %v1790, %v1818
      %v1830 = vadd.f32 %v1791, %v1818
      %v1831 = vadd.f32 %v1792, %v1818
      %v1832 = vadd.f32 %v1793, %v1818
      %v1833 = vadd.f32 %v1794, %v1818
      %v1834 = vadd.f32 %v1795, %v1818
      %v1835 = vadd.f32 %v1796, %v1818
      %v1836 = vadd.f32 %v1797, %v1818
      %v1837 = vadd.f32 %v1798, %v1818
      %v1838 = vadd.f32 %v1799, %v1818
      %v1839 = vadd.f32 %v1800, %v1818
      %v1840 = vadd.f32 %v1801, %v1818
      %v1841 = vadd.f32 %v1802, %v1818
      %v1842 = vadd.f32 %v1803, %v1818
      %v1843 = vadd.f32 %v1804, %v1818
      %v1844 = vadd.f32 %v1805, %v1818
      %v1845 = vadd.f32 %v1806, %v1818
      %v1846 = vadd.f32 %v1807, %v1818
      %v1847 = vadd.f32 %v1808, %v1818
      %v1848 = vadd.f32 %v1809, %v1818
      %v1849 = vadd.f32 %v1810, %v1818
      %v1850 = vadd.f32 %v1811, %v1818
      %v1851 = vadd.f32 %v1812, %v1818
      %v1852 = vmax.f32 %v1820, 0.0
      %v1853 = vmax.f32 %v1821, 0.0
      %v1854 = vmax.f32 %v1822, 0.0
      %v1855 = vmax.f32 %v1823, 0.0
      %v1856 = vmax.f32 %v1824, 0.0
      %v1857 = vmax.f32 %v1825, 0.0
      %v1858 = vmax.f32 %v1826, 0.0
      %v1859 = vmax.f32 %v1827, 0.0
      %v1860 = vmax.f32 %v1828, 0.0
      %v1861 = vmax.f32 %v1829, 0.0
      %v1862 = vmax.f32 %v1830, 0.0
      %v1863 = vmax.f32 %v1831, 0.0
      %v1864 = vmax.f32 %v1832, 0.0
      %v1865 = vmax.f32 %v1833, 0.0
      %v1866 = vmax.f32 %v1834, 0.0
      %v1867 = vmax.f32 %v1835, 0.0
      %v1868 = vmax.f32 %v1836, 0.0
      %v1869 = vmax.f32 %v1837, 0.0
      %v1870 = vmax.f32 %v1838, 0.0
      %v1871 = vmax.f32 %v1839, 0.0
      %v1872 = vmax.f32 %v1840, 0.0
      %v1873 = vmax.f32 %v1841, 0.0
      %v1874 = vmax.f32 %v1842, 0.0
      %v1875 = vmax.f32 %v1843, 0.0
      %v1876 = vmax.f32 %v1844, 0.0
      %v1877 = vmax.f32 %v1845, 0.0
      %v1878 = vmax.f32 %v1846, 0.0
      %v1879 = vmax.f32 %v1847, 0.0
      %v1880 = vmax.f32 %v1848, 0.0
      %v1881 = vmax.f32 %v1849, 0.0
      %v1882 = vmax.f32 %v1850, 0.0
      %v1883 = vmax.f32 %v1851, 0.0
      loop: start=0, step=1, limit=15
      $region49: #{tpu_custom_call.1} parent=47 // loop_pre_header
        _
      $region50: #{tpu_custom_call.1} parent=47 // loop_header
        %s1885 = sphi 0, %s1889
        %p1886 = scmp.ge.s32.totalorder %s1885, 15
        %v1890 = vphi %v1852, %v3167
        %v1891 = vphi %v1853, %v3170
        %v1892 = vphi %v1854, %v3175
        %v1893 = vphi %v1855, %v3178
        %v1894 = vphi %v1856, %v3183
        %v1895 = vphi %v1857, %v3186
        %v1896 = vphi %v1858, %v3191
        %v1897 = vphi %v1859, %v3194
        %v1898 = vphi %v1860, %v3199
        %v1899 = vphi %v1861, %v3202
        %v1900 = vphi %v1862, %v3207
        %v1901 = vphi %v1863, %v3210
        %v1902 = vphi %v1864, %v3215
        %v1903 = vphi %v1865, %v3218
        %v1904 = vphi %v1866, %v3223
        %v1905 = vphi %v1867, %v3226
        %v1906 = vphi %v1868, %v3231
        %v1907 = vphi %v1869, %v3234
        %v1908 = vphi %v1870, %v3239
        %v1909 = vphi %v1871, %v3242
        %v1910 = vphi %v1872, %v3247
        %v1911 = vphi %v1873, %v3250
        %v1912 = vphi %v1874, %v3255
        %v1913 = vphi %v1875, %v3258
        %v1914 = vphi %v1876, %v3263
        %v1915 = vphi %v1877, %v3266
        %v1916 = vphi %v1878, %v3271
        %v1917 = vphi %v1879, %v3274
        %v1918 = vphi %v1880, %v3279
        %v1919 = vphi %v1881, %v3282
        %v1920 = vphi %v1882, %v3287
        %v1921 = vphi %v1883, %v3290
      $region51: #{tpu_custom_call.1} parent=47 // loop_header_branch
        %1888 = sbr.rel (%p1886) target = $region55
      $region52: #{tpu_custom_call.1} parent=47 // loop_body
        %s1922 = smul.u32 %s1885, 2
        %s1923 = sadd.s32 %s1922, 1
        %s1924 = smul.u32 %s1922, 24
        %s1925 = smul.addr %s1924, 4
        %s1926 = scalar_lea.vmem %s3, %s1925
        %v1927 = vld [vmem:[%s1926] sm:$0xf]
        %v1928 = vld [vmem:[%s1926 + $0x4] sm:$0xf]
        %v1929 = vld [vmem:[%s1926 + $0x8] sm:$0xf]
        %v1930 = vld [vmem:[%s1926 + $0xc] sm:$0xf]
        %v1931 = vld [vmem:[%s1926 + $0x10] sm:$0xf]
        %v1932 = vld [vmem:[%s1926 + $0x14] sm:$0xf]
        %v1933 = vld [vmem:[%s1926 + $0x18] sm:$0xf]
        %v1934 = vld [vmem:[%s1926 + $0x1c] sm:$0xf]
        %v1935 = vld [vmem:[%s1926 + $0x20] sm:$0xf]
        %v1936 = vld [vmem:[%s1926 + $0x24] sm:$0xf]
        %v1937 = vld [vmem:[%s1926 + $0x28] sm:$0xf]
        %v1938 = vld [vmem:[%s1926 + $0x2c] sm:$0xf]
        %v1939 = vld [vmem:[%s1926 + $0x30] sm:$0xf]
        %v1940 = vld [vmem:[%s1926 + $0x34] sm:$0xf]
        %v1941 = vld [vmem:[%s1926 + $0x38] sm:$0xf]
        %v1942 = vld [vmem:[%s1926 + $0x3c] sm:$0xf]
        %v1943 = vld [vmem:[%s1926 + $0x40] sm:$0xf]
        %v1944 = vld [vmem:[%s1926 + $0x44] sm:$0xf]
        %v1945 = vld [vmem:[%s1926 + $0x48] sm:$0xf]
        %v1946 = vld [vmem:[%s1926 + $0x4c] sm:$0xf]
        %v1947 = vld [vmem:[%s1926 + $0x50] sm:$0xf]
        %v1948 = vld [vmem:[%s1926 + $0x54] sm:$0xf]
        %v1949 = vld [vmem:[%s1926 + $0x58] sm:$0xf]
        %v1950 = vld [vmem:[%s1926 + $0x5c] sm:$0xf]
        %s1951 = scalar_lea.vmem %s4, %s1922
        %v1952 = vld [vmem:[%s1951] sm:$0x1]
        %v1953 = vrot.slane %v1890, 7
        %v1954 = vrot.slane %v1891, 7
        %v1955 = vrot.slane %v1892, 7
        %v1956 = vrot.slane %v1893, 7
        %v1957 = vrot.slane %v1894, 7
        %v1958 = vrot.slane %v1895, 7
        %v1959 = vrot.slane %v1896, 7
        %v1960 = vrot.slane %v1897, 7
        %v1961 = vrot.slane %v1898, 7
        %v1962 = vrot.slane %v1899, 7
        %v1963 = vrot.slane %v1900, 7
        %v1964 = vrot.slane %v1901, 7
        %v1965 = vrot.slane %v1902, 7
        %v1966 = vrot.slane %v1903, 7
        %v1967 = vrot.slane %v1904, 7
        %v1968 = vrot.slane %v1905, 7
        %v1969 = vrot.slane %v1906, 7
        %v1970 = vrot.slane %v1907, 7
        %v1971 = vrot.slane %v1908, 7
        %v1972 = vrot.slane %v1909, 7
        %v1973 = vrot.slane %v1910, 7
        %v1974 = vrot.slane %v1911, 7
        %v1975 = vrot.slane %v1912, 7
        %v1976 = vrot.slane %v1913, 7
        %v1977 = vrot.slane %v1914, 7
        %v1978 = vrot.slane %v1915, 7
        %v1979 = vrot.slane %v1916, 7
        %v1980 = vrot.slane %v1917, 7
        %v1981 = vrot.slane %v1918, 7
        %v1982 = vrot.slane %v1919, 7
        %v1983 = vrot.slane %v1920, 7
        %v1984 = vrot.slane %v1921, 7
        %v1985 = vsel %vm958, %v1983, %v1984
        %v1986 = vsel %vm958, %v1982, %v1983
        %v1987 = vsel %vm958, %v1981, %v1982
        %v1988 = vsel %vm958, %v1980, %v1981
        %v1989 = vsel %vm958, %v1979, %v1980
        %v1990 = vsel %vm958, %v1978, %v1979
        %v1991 = vsel %vm958, %v1977, %v1978
        %v1992 = vsel %vm958, %v1976, %v1977
        %v1993 = vsel %vm958, %v1975, %v1976
        %v1994 = vsel %vm958, %v1974, %v1975
        %v1995 = vsel %vm958, %v1973, %v1974
        %v1996 = vsel %vm958, %v1972, %v1973
        %v1997 = vsel %vm958, %v1971, %v1972
        %v1998 = vsel %vm958, %v1970, %v1971
        %v1999 = vsel %vm958, %v1969, %v1970
        %v2000 = vsel %vm958, %v1968, %v1969
        %v2001 = vsel %vm958, %v1967, %v1968
        %v2002 = vsel %vm958, %v1966, %v1967
        %v2003 = vsel %vm958, %v1965, %v1966
        %v2004 = vsel %vm958, %v1964, %v1965
        %v2005 = vsel %vm958, %v1963, %v1964
        %v2006 = vsel %vm958, %v1962, %v1963
        %v2007 = vsel %vm958, %v1961, %v1962
        %v2008 = vsel %vm958, %v1960, %v1961
        %v2009 = vsel %vm958, %v1959, %v1960
        %v2010 = vsel %vm958, %v1958, %v1959
        %v2011 = vsel %vm958, %v1957, %v1958
        %v2012 = vsel %vm958, %v1956, %v1957
        %v2013 = vsel %vm958, %v1955, %v1956
        %v2014 = vsel %vm958, %v1954, %v1955
        %v2015 = vsel %vm958, %v1953, %v1954
        %v2016 = vsel %vm958, %v1984, %v1953
        %v2017 = vmul.f32 %v2016, %v798
        %v2018 = vmul.f32 %v2015, %v799
        %v2019 = vmul.f32 %v2014, %v800
        %v2020 = vmul.f32 %v2013, %v801
        %v2021 = vmul.f32 %v2012, %v802
        %v2022 = vmul.f32 %v2011, %v803
        %v2023 = vmul.f32 %v2010, %v804
        %v2024 = vmul.f32 %v2009, %v805
        %v2025 = vmul.f32 %v2008, %v806
        %v2026 = vmul.f32 %v2007, %v807
        %v2027 = vmul.f32 %v2006, %v808
        %v2028 = vmul.f32 %v2005, %v809
        %v2029 = vmul.f32 %v2004, %v810
        %v2030 = vmul.f32 %v2003, %v811
        %v2031 = vmul.f32 %v2002, %v812
        %v2032 = vmul.f32 %v2001, %v813
        %v2033 = vmul.f32 %v2000, %v814
        %v2034 = vmul.f32 %v1999, %v815
        %v2035 = vmul.f32 %v1998, %v816
        %v2036 = vmul.f32 %v1997, %v817
        %v2037 = vmul.f32 %v1996, %v818
        %v2038 = vmul.f32 %v1995, %v819
        %v2039 = vmul.f32 %v1994, %v820
        %v2040 = vmul.f32 %v1993, %v821
        %v2041 = vmul.f32 %v1992, %v822
        %v2042 = vmul.f32 %v1991, %v823
        %v2043 = vmul.f32 %v1990, %v824
        %v2044 = vmul.f32 %v1989, %v825
        %v2045 = vmul.f32 %v1988, %v826
        %v2046 = vmul.f32 %v1987, %v827
        %v2047 = vmul.f32 %v1986, %v828
        %v2048 = vmul.f32 %v1985, %v829
        %v2049 = vrot.slane %v1890, 1
        %v2050 = vrot.slane %v1891, 1
        %v2051 = vrot.slane %v1892, 1
        %v2052 = vrot.slane %v1893, 1
        %v2053 = vrot.slane %v1894, 1
        %v2054 = vrot.slane %v1895, 1
        %v2055 = vrot.slane %v1896, 1
        %v2056 = vrot.slane %v1897, 1
        %v2057 = vrot.slane %v1898, 1
        %v2058 = vrot.slane %v1899, 1
        %v2059 = vrot.slane %v1900, 1
        %v2060 = vrot.slane %v1901, 1
        %v2061 = vrot.slane %v1902, 1
        %v2062 = vrot.slane %v1903, 1
        %v2063 = vrot.slane %v1904, 1
        %v2064 = vrot.slane %v1905, 1
        %v2065 = vrot.slane %v1906, 1
        %v2066 = vrot.slane %v1907, 1
        %v2067 = vrot.slane %v1908, 1
        %v2068 = vrot.slane %v1909, 1
        %v2069 = vrot.slane %v1910, 1
        %v2070 = vrot.slane %v1911, 1
        %v2071 = vrot.slane %v1912, 1
        %v2072 = vrot.slane %v1913, 1
        %v2073 = vrot.slane %v1914, 1
        %v2074 = vrot.slane %v1915, 1
        %v2075 = vrot.slane %v1916, 1
        %v2076 = vrot.slane %v1917, 1
        %v2077 = vrot.slane %v1918, 1
        %v2078 = vrot.slane %v1919, 1
        %v2079 = vrot.slane %v1920, 1
        %v2080 = vrot.slane %v1921, 1
        %v2081 = vsel %vm1055, %v2079, %v2080
        %v2082 = vsel %vm1055, %v2078, %v2079
        %v2083 = vsel %vm1055, %v2077, %v2078
        %v2084 = vsel %vm1055, %v2076, %v2077
        %v2085 = vsel %vm1055, %v2075, %v2076
        %v2086 = vsel %vm1055, %v2074, %v2075
        %v2087 = vsel %vm1055, %v2073, %v2074
        %v2088 = vsel %vm1055, %v2072, %v2073
        %v2089 = vsel %vm1055, %v2071, %v2072
        %v2090 = vsel %vm1055, %v2070, %v2071
        %v2091 = vsel %vm1055, %v2069, %v2070
        %v2092 = vsel %vm1055, %v2068, %v2069
        %v2093 = vsel %vm1055, %v2067, %v2068
        %v2094 = vsel %vm1055, %v2066, %v2067
        %v2095 = vsel %vm1055, %v2065, %v2066
        %v2096 = vsel %vm1055, %v2064, %v2065
        %v2097 = vsel %vm1055, %v2063, %v2064
        %v2098 = vsel %vm1055, %v2062, %v2063
        %v2099 = vsel %vm1055, %v2061, %v2062
        %v2100 = vsel %vm1055, %v2060, %v2061
        %v2101 = vsel %vm1055, %v2059, %v2060
        %v2102 = vsel %vm1055, %v2058, %v2059
        %v2103 = vsel %vm1055, %v2057, %v2058
        %v2104 = vsel %vm1055, %v2056, %v2057
        %v2105 = vsel %vm1055, %v2055, %v2056
        %v2106 = vsel %vm1055, %v2054, %v2055
        %v2107 = vsel %vm1055, %v2053, %v2054
        %v2108 = vsel %vm1055, %v2052, %v2053
        %v2109 = vsel %vm1055, %v2051, %v2052
        %v2110 = vsel %vm1055, %v2050, %v2051
        %v2111 = vsel %vm1055, %v2049, %v2050
        %v2112 = vsel %vm1055, %v2080, %v2049
        %v2113 = vmul.f32 %v2111, %v862
        %v2114 = vmul.f32 %v2110, %v863
        %v2115 = vmul.f32 %v2109, %v864
        %v2116 = vmul.f32 %v2108, %v865
        %v2117 = vmul.f32 %v2107, %v866
        %v2118 = vmul.f32 %v2106, %v867
        %v2119 = vmul.f32 %v2105, %v868
        %v2120 = vmul.f32 %v2104, %v869
        %v2121 = vmul.f32 %v2103, %v870
        %v2122 = vmul.f32 %v2102, %v871
        %v2123 = vmul.f32 %v2101, %v872
        %v2124 = vmul.f32 %v2100, %v873
        %v2125 = vmul.f32 %v2099, %v874
        %v2126 = vmul.f32 %v2098, %v875
        %v2127 = vmul.f32 %v2097, %v876
        %v2128 = vmul.f32 %v2096, %v877
        %v2129 = vmul.f32 %v2095, %v878
        %v2130 = vmul.f32 %v2094, %v879
        %v2131 = vmul.f32 %v2093, %v880
        %v2132 = vmul.f32 %v2092, %v881
        %v2133 = vmul.f32 %v2091, %v882
        %v2134 = vmul.f32 %v2090, %v883
        %v2135 = vmul.f32 %v2089, %v884
        %v2136 = vmul.f32 %v2088, %v885
        %v2137 = vmul.f32 %v2087, %v886
        %v2138 = vmul.f32 %v2086, %v887
        %v2139 = vmul.f32 %v2085, %v888
        %v2140 = vmul.f32 %v2084, %v889
        %v2141 = vmul.f32 %v2083, %v890
        %v2142 = vmul.f32 %v2082, %v891
        %v2143 = vmul.f32 %v2081, %v892
        %v2144 = vmul.f32 %v2112, %v893
        %v2145 = vpack.c.bf16 %v2018, %v2017
        %v2146 = vpack.c.bf16 %v2020, %v2019
        %v2147 = vpack.c.bf16 %v2022, %v2021
        %v2148 = vpack.c.bf16 %v2024, %v2023
        %v2149 = vpack.c.bf16 %v2026, %v2025
        %v2150 = vpack.c.bf16 %v2028, %v2027
        %v2151 = vpack.c.bf16 %v2030, %v2029
        %v2152 = vpack.c.bf16 %v2032, %v2031
        %v2153 = vpack.c.bf16 %v2034, %v2033
        %v2154 = vpack.c.bf16 %v2036, %v2035
        %v2155 = vpack.c.bf16 %v2038, %v2037
        %v2156 = vpack.c.bf16 %v2040, %v2039
        %v2157 = vpack.c.bf16 %v2042, %v2041
        %v2158 = vpack.c.bf16 %v2044, %v2043
        %v2159 = vpack.c.bf16 %v2046, %v2045
        %v2160 = vpack.c.bf16 %v2048, %v2047
        %v2161 = vpack.c.bf16 %v1891, %v1890
        %v2162 = vpack.c.bf16 %v1893, %v1892
        %v2163 = vpack.c.bf16 %v1895, %v1894
        %v2164 = vpack.c.bf16 %v1897, %v1896
        %v2165 = vpack.c.bf16 %v1899, %v1898
        %v2166 = vpack.c.bf16 %v1901, %v1900
        %v2167 = vpack.c.bf16 %v1903, %v1902
        %v2168 = vpack.c.bf16 %v1905, %v1904
        %v2169 = vpack.c.bf16 %v1907, %v1906
        %v2170 = vpack.c.bf16 %v1909, %v1908
        %v2171 = vpack.c.bf16 %v1911, %v1910
        %v2172 = vpack.c.bf16 %v1913, %v1912
        %v2173 = vpack.c.bf16 %v1915, %v1914
        %v2174 = vpack.c.bf16 %v1917, %v1916
        %v2175 = vpack.c.bf16 %v1919, %v1918
        %v2176 = vpack.c.bf16 %v1921, %v1920
        %v2177 = vpack.c.bf16 %v2114, %v2113
        %v2178 = vpack.c.bf16 %v2116, %v2115
        %v2179 = vpack.c.bf16 %v2118, %v2117
        %v2180 = vpack.c.bf16 %v2120, %v2119
        %v2181 = vpack.c.bf16 %v2122, %v2121
        %v2182 = vpack.c.bf16 %v2124, %v2123
        %v2183 = vpack.c.bf16 %v2126, %v2125
        %v2184 = vpack.c.bf16 %v2128, %v2127
        %v2185 = vpack.c.bf16 %v2130, %v2129
        %v2186 = vpack.c.bf16 %v2132, %v2131
        %v2187 = vpack.c.bf16 %v2134, %v2133
        %v2188 = vpack.c.bf16 %v2136, %v2135
        %v2189 = vpack.c.bf16 %v2138, %v2137
        %v2190 = vpack.c.bf16 %v2140, %v2139
        %v2191 = vpack.c.bf16 %v2142, %v2141
        %v2192 = vpack.c.bf16 %v2144, %v2143
        %2209 = vrot.lane.b32.xlu0 %v2161, 64
        %v2210 = vpop.permute.xlu0 %2209
        %2211 = vrot.lane.b32.xlu0 %v2162, 64
        %v2212 = vpop.permute.xlu0 %2211
        %2213 = vrot.lane.b32.xlu0 %v2163, 64
        %v2214 = vpop.permute.xlu0 %2213
        %2215 = vrot.lane.b32.xlu0 %v2164, 64
        %v2216 = vpop.permute.xlu0 %2215
        %2217 = vrot.lane.b32.xlu0 %v2165, 64
        %v2218 = vpop.permute.xlu0 %2217
        %2219 = vrot.lane.b32.xlu0 %v2166, 64
        %v2220 = vpop.permute.xlu0 %2219
        %2221 = vrot.lane.b32.xlu0 %v2167, 64
        %v2222 = vpop.permute.xlu0 %2221
        %2223 = vrot.lane.b32.xlu0 %v2168, 64
        %v2224 = vpop.permute.xlu0 %2223
        %2225 = vrot.lane.b32.xlu0 %v2169, 64
        %v2226 = vpop.permute.xlu0 %2225
        %2227 = vrot.lane.b32.xlu0 %v2170, 64
        %v2228 = vpop.permute.xlu0 %2227
        %2229 = vrot.lane.b32.xlu0 %v2171, 64
        %v2230 = vpop.permute.xlu0 %2229
        %2231 = vrot.lane.b32.xlu0 %v2172, 64
        %v2232 = vpop.permute.xlu0 %2231
        %2233 = vrot.lane.b32.xlu0 %v2173, 64
        %v2234 = vpop.permute.xlu0 %2233
        %2235 = vrot.lane.b32.xlu0 %v2174, 64
        %v2236 = vpop.permute.xlu0 %2235
        %2237 = vrot.lane.b32.xlu0 %v2175, 64
        %v2238 = vpop.permute.xlu0 %2237
        %2239 = vrot.lane.b32.xlu0 %v2176, 64
        %v2240 = vpop.permute.xlu0 %2239
        %vm2241 = vcmask 523264
        %v2244 = vsel %vm2241, %v2145, %v2210
        %v2248 = vsel %vm2241, %v2146, %v2212
        %v2252 = vsel %vm2241, %v2147, %v2214
        %v2256 = vsel %vm2241, %v2148, %v2216
        %v2260 = vsel %vm2241, %v2149, %v2218
        %v2264 = vsel %vm2241, %v2150, %v2220
        %v2268 = vsel %vm2241, %v2151, %v2222
        %v2272 = vsel %vm2241, %v2152, %v2224
        %v2276 = vsel %vm2241, %v2153, %v2226
        %v2280 = vsel %vm2241, %v2154, %v2228
        %v2284 = vsel %vm2241, %v2155, %v2230
        %v2288 = vsel %vm2241, %v2156, %v2232
        %v2292 = vsel %vm2241, %v2157, %v2234
        %v2296 = vsel %vm2241, %v2158, %v2236
        %v2300 = vsel %vm2241, %v2159, %v2238
        %v2304 = vsel %vm2241, %v2160, %v2240
        %v2307 = vlaneseq
        %v2308 = vshrl.u32 %v2307, 7
        %v2309 = vsub.s32 0, %v2308
        %v2310 = vrot.slane %v1952, %v2309
        %v2336 = vunpack.c.l.b16 %v1927
        %v2337 = vunpack.c.l.b16 %v1928
        %v2338 = vunpack.c.l.b16 %v1929
        %v2339 = vunpack.c.l.b16 %v1930
        %v2340 = vunpack.c.l.b16 %v1931
        %v2341 = vunpack.c.l.b16 %v1932
        %v2342 = vunpack.c.l.b16 %v1933
        %v2343 = vunpack.c.l.b16 %v1934
        %v2344 = vunpack.c.l.b16 %v1935
        %v2345 = vunpack.c.l.b16 %v1936
        %v2346 = vunpack.c.l.b16 %v1937
        %v2347 = vunpack.c.l.b16 %v1938
        %v2348 = vunpack.c.l.b16 %v1939
        %v2349 = vunpack.c.l.b16 %v1940
        %v2350 = vunpack.c.l.b16 %v1941
        %v2351 = vunpack.c.l.b16 %v1942
        %v2352 = vunpack.c.l.b16 %v1943
        %v2353 = vunpack.c.l.b16 %v1944
        %v2354 = vunpack.c.l.b16 %v1945
        %v2355 = vunpack.c.l.b16 %v1946
        %v2356 = vunpack.c.l.b16 %v1947
        %v2357 = vunpack.c.l.b16 %v1948
        %v2358 = vunpack.c.l.b16 %v1949
        %v2359 = vunpack.c.l.b16 %v1950
        %v2360 = vpack.c.b16 %v2337, %v2336
        %v2361 = vpack.c.b16 %v2339, %v2338
        %v2362 = vpack.c.b16 %v2341, %v2340
        %v2363 = vpack.c.b16 %v2343, %v2342
        %v2364 = vpack.c.b16 %v2345, %v2344
        %v2365 = vpack.c.b16 %v2347, %v2346
        %v2366 = vpack.c.b16 %v2349, %v2348
        %v2367 = vpack.c.b16 %v2351, %v2350
        %v2368 = vpack.c.b16 %v2353, %v2352
        %v2369 = vpack.c.b16 %v2355, %v2354
        %v2370 = vpack.c.b16 %v2357, %v2356
        %v2371 = vpack.c.b16 %v2359, %v2358
        %v2385 = vsel %vm2241, %v2177, 0
        %v2388 = vsel %vm2241, %v2178, 0
        %v2391 = vsel %vm2241, %v2179, 0
        %v2394 = vsel %vm2241, %v2180, 0
        %v2397 = vsel %vm2241, %v2181, 0
        %v2400 = vsel %vm2241, %v2182, 0
        %v2403 = vsel %vm2241, %v2183, 0
        %v2406 = vsel %vm2241, %v2184, 0
        %v2409 = vsel %vm2241, %v2185, 0
        %v2412 = vsel %vm2241, %v2186, 0
        %v2415 = vsel %vm2241, %v2187, 0
        %v2418 = vsel %vm2241, %v2188, 0
        %v2421 = vsel %vm2241, %v2189, 0
        %v2424 = vsel %vm2241, %v2190, 0
        %v2427 = vsel %vm2241, %v2191, 0
        %v2430 = vsel %vm2241, %v2192, 0
        %2432 = vmatprep.subr.bf16.mxu0 0
        %2433 = vmatpush1.bf16.msra.mxu0 %v2360
        %2434 = vmatprep.subr.bf16.mxu0 0
        %2435 = vmatpush1.bf16.msra.mxu0 %v2361
        %2436 = vmatprep.subr.bf16.mxu0 0
        %2437 = vmatpush1.bf16.msra.mxu0 %v2362
        %2438 = vmatprep.subr.bf16.mxu0 0
        %2439 = vmatpush1.bf16.msra.mxu0 %v2363
        %2440 = vmatprep.subr.bf16.mxu0 0
        %2441 = vmatpush1.bf16.msra.mxu0 %v2364
        %2442 = vmatprep.subr.bf16.mxu0 0
        %2443 = vmatpush1.bf16.msra.mxu0 %v2365
        %2444 = vmatprep.subr.bf16.mxu0 0
        %2445 = vmatpush1.bf16.msra.mxu0 %v2366
        %2446 = vmatprep.subr.bf16.mxu0 0
        %2447 = vmatpush1.bf16.msra.mxu0 %v2367
        %2448 = vmatprep.subr.bf16.mxu0 0
        %2449 = vmatpush1.bf16.msra.mxu0 %v2368
        %2450 = vmatprep.subr.bf16.mxu0 0
        %2451 = vmatpush1.bf16.msra.mxu0 %v2369
        %2452 = vmatprep.subr.bf16.mxu0 0
        %2453 = vmatpush1.bf16.msra.mxu0 %v2370
        %2454 = vmatprep.subr.bf16.mxu0 0
        %2455 = vmatpush1.bf16.msra.mxu0 %v2371
        %2456 = vmatprep.subr.bf16.mxu0 0
        %2457 = vmatpush1.bf16.msra.mxu0 0
        %2458 = vmatprep.subr.bf16.mxu0 0
        %2459 = vmatpush1.bf16.msra.mxu0 0
        %2460 = vmatprep.subr.bf16.mxu0 0
        %2461 = vmatpush1.bf16.msra.mxu0 0
        %2462 = vmatprep.subr.bf16.mxu0 0
        %2463 = vmatpush1.bf16.msra.mxu0 0
        %2464 = vmatprep.mubr.bf16.mxu0 %v2385
        %2465 = vmatmul.mubr.bf16.gmra.mrb[0].mxu0 %v2244
        %v2466 = vpop.f32.mrb[0].mxu0
        %v2467 = vadd.f32 %v2310, %v2466
        %v2468 = vpop.f32.mrb[0].mxu0
        %v2469 = vpop.f32.mrb[0].mxu0
        %v2470 = vadd.f32 %v2310, %v2469
        %v2471 = vpop.f32.mrb[0].mxu0
        %2472 = vmatprep.mubr.bf16.mxu0 %v2388
        %2473 = vmatmul.mubr.bf16.gmra.mrb[0].mxu0 %v2248
        %v2474 = vpop.f32.mrb[0].mxu0
        %v2475 = vadd.f32 %v2310, %v2474
        %v2476 = vpop.f32.mrb[0].mxu0
        %v2477 = vpop.f32.mrb[0].mxu0
        %v2478 = vadd.f32 %v2310, %v2477
        %v2479 = vpop.f32.mrb[0].mxu0
        %2480 = vmatprep.mubr.bf16.mxu0 %v2391
        %2481 = vmatmul.mubr.bf16.gmra.mrb[0].mxu0 %v2252
        %v2482 = vpop.f32.mrb[0].mxu0
        %v2483 = vadd.f32 %v2310, %v2482
        %v2484 = vpop.f32.mrb[0].mxu0
        %v2485 = vpop.f32.mrb[0].mxu0
        %v2486 = vadd.f32 %v2310, %v2485
        %v2487 = vpop.f32.mrb[0].mxu0
        %2488 = vmatprep.mubr.bf16.mxu0 %v2394
        %2489 = vmatmul.mubr.bf16.gmra.mrb[0].mxu0 %v2256
        %v2490 = vpop.f32.mrb[0].mxu0
        %v2491 = vadd.f32 %v2310, %v2490
        %v2492 = vpop.f32.mrb[0].mxu0
        %v2493 = vpop.f32.mrb[0].mxu0
        %v2494 = vadd.f32 %v2310, %v2493
        %v2495 = vpop.f32.mrb[0].mxu0
        %2496 = vmatprep.mubr.bf16.mxu0 %v2397
        %2497 = vmatmul.mubr.bf16.gmra.mrb[0].mxu0 %v2260
        %v2498 = vpop.f32.mrb[0].mxu0
        %v2499 = vadd.f32 %v2310, %v2498
        %v2500 = vpop.f32.mrb[0].mxu0
        %v2501 = vpop.f32.mrb[0].mxu0
        %v2502 = vadd.f32 %v2310, %v2501
        %v2503 = vpop.f32.mrb[0].mxu0
        %2504 = vmatprep.mubr.bf16.mxu0 %v2400
        %2505 = vmatmul.mubr.bf16.gmra.mrb[0].mxu0 %v2264
        %v2506 = vpop.f32.mrb[0].mxu0
        %v2507 = vadd.f32 %v2310, %v2506
        %v2508 = vpop.f32.mrb[0].mxu0
        %v2509 = vpop.f32.mrb[0].mxu0
        %v2510 = vadd.f32 %v2310, %v2509
        %v2511 = vpop.f32.mrb[0].mxu0
        %2512 = vmatprep.mubr.bf16.mxu0 %v2403
        %2513 = vmatmul.mubr.bf16.gmra.mrb[0].mxu0 %v2268
        %v2514 = vpop.f32.mrb[0].mxu0
        %v2515 = vadd.f32 %v2310, %v2514
        %v2516 = vpop.f32.mrb[0].mxu0
        %v2517 = vpop.f32.mrb[0].mxu0
        %v2518 = vadd.f32 %v2310, %v2517
        %v2519 = vpop.f32.mrb[0].mxu0
        %2520 = vmatprep.mubr.bf16.mxu0 %v2406
        %2521 = vmatmul.mubr.bf16.gmra.mrb[0].mxu0 %v2272
        %v2522 = vpop.f32.mrb[0].mxu0
        %v2523 = vadd.f32 %v2310, %v2522
        %v2524 = vpop.f32.mrb[0].mxu0
        %v2525 = vpop.f32.mrb[0].mxu0
        %v2526 = vadd.f32 %v2310, %v2525
        %v2527 = vpop.f32.mrb[0].mxu0
        %2528 = vmatprep.mubr.bf16.mxu0 %v2409
        %2529 = vmatmul.mubr.bf16.gmra.mrb[0].mxu0 %v2276
        %v2530 = vpop.f32.mrb[0].mxu0
        %v2531 = vadd.f32 %v2310, %v2530
        %v2532 = vpop.f32.mrb[0].mxu0
        %v2533 = vpop.f32.mrb[0].mxu0
        %v2534 = vadd.f32 %v2310, %v2533
        %v2535 = vpop.f32.mrb[0].mxu0
        %2536 = vmatprep.mubr.bf16.mxu0 %v2412
        %2537 = vmatmul.mubr.bf16.gmra.mrb[0].mxu0 %v2280
        %v2538 = vpop.f32.mrb[0].mxu0
        %v2539 = vadd.f32 %v2310, %v2538
        %v2540 = vpop.f32.mrb[0].mxu0
        %v2541 = vpop.f32.mrb[0].mxu0
        %v2542 = vadd.f32 %v2310, %v2541
        %v2543 = vpop.f32.mrb[0].mxu0
        %2544 = vmatprep.mubr.bf16.mxu0 %v2415
        %2545 = vmatmul.mubr.bf16.gmra.mrb[0].mxu0 %v2284
        %v2546 = vpop.f32.mrb[0].mxu0
        %v2547 = vadd.f32 %v2310, %v2546
        %v2548 = vpop.f32.mrb[0].mxu0
        %v2549 = vpop.f32.mrb[0].mxu0
        %v2550 = vadd.f32 %v2310, %v2549
        %v2551 = vpop.f32.mrb[0].mxu0
        %2552 = vmatprep.mubr.bf16.mxu0 %v2418
        %2553 = vmatmul.mubr.bf16.gmra.mrb[0].mxu0 %v2288
        %v2554 = vpop.f32.mrb[0].mxu0
        %v2555 = vadd.f32 %v2310, %v2554
        %v2556 = vpop.f32.mrb[0].mxu0
        %v2557 = vpop.f32.mrb[0].mxu0
        %v2558 = vadd.f32 %v2310, %v2557
        %v2559 = vpop.f32.mrb[0].mxu0
        %2560 = vmatprep.mubr.bf16.mxu0 %v2421
        %2561 = vmatmul.mubr.bf16.gmra.mrb[0].mxu0 %v2292
        %v2562 = vpop.f32.mrb[0].mxu0
        %v2563 = vadd.f32 %v2310, %v2562
        %v2564 = vpop.f32.mrb[0].mxu0
        %v2565 = vpop.f32.mrb[0].mxu0
        %v2566 = vadd.f32 %v2310, %v2565
        %v2567 = vpop.f32.mrb[0].mxu0
        %2568 = vmatprep.mubr.bf16.mxu0 %v2424
        %2569 = vmatmul.mubr.bf16.gmra.mrb[0].mxu0 %v2296
        %v2570 = vpop.f32.mrb[0].mxu0
        %v2571 = vadd.f32 %v2310, %v2570
        %v2572 = vpop.f32.mrb[0].mxu0
        %v2573 = vpop.f32.mrb[0].mxu0
        %v2574 = vadd.f32 %v2310, %v2573
        %v2575 = vpop.f32.mrb[0].mxu0
        %2576 = vmatprep.mubr.bf16.mxu0 %v2427
        %2577 = vmatmul.mubr.bf16.gmra.mrb[0].mxu0 %v2300
        %v2578 = vpop.f32.mrb[0].mxu0
        %v2579 = vadd.f32 %v2310, %v2578
        %v2580 = vpop.f32.mrb[0].mxu0
        %v2581 = vpop.f32.mrb[0].mxu0
        %v2582 = vadd.f32 %v2310, %v2581
        %v2583 = vpop.f32.mrb[0].mxu0
        %2584 = vmatprep.mubr.bf16.mxu0 %v2430
        %2585 = vmatmul.mubr.bf16.gmra.mrb[0].mxu0 %v2304
        %v2586 = vpop.f32.mrb[0].mxu0
        %v2587 = vadd.f32 %v2310, %v2586
        %v2588 = vpop.f32.mrb[0].mxu0
        %v2589 = vpop.f32.mrb[0].mxu0
        %v2590 = vadd.f32 %v2310, %v2589
        %v2591 = vpop.f32.mrb[0].mxu0
        %2592 = vdwg.mxu0
        %v2593 = vmax.f32 %v2467, 0.0
        %v2594 = vmax.f32 %v2470, 0.0
        %v2595 = vmax.f32 %v2475, 0.0
        %v2596 = vmax.f32 %v2478, 0.0
        %v2597 = vmax.f32 %v2483, 0.0
        %v2598 = vmax.f32 %v2486, 0.0
        %v2599 = vmax.f32 %v2491, 0.0
        %v2600 = vmax.f32 %v2494, 0.0
        %v2601 = vmax.f32 %v2499, 0.0
        %v2602 = vmax.f32 %v2502, 0.0
        %v2603 = vmax.f32 %v2507, 0.0
        %v2604 = vmax.f32 %v2510, 0.0
        %v2605 = vmax.f32 %v2515, 0.0
        %v2606 = vmax.f32 %v2518, 0.0
        %v2607 = vmax.f32 %v2523, 0.0
        %v2608 = vmax.f32 %v2526, 0.0
        %v2609 = vmax.f32 %v2531, 0.0
        %v2610 = vmax.f32 %v2534, 0.0
        %v2611 = vmax.f32 %v2539, 0.0
        %v2612 = vmax.f32 %v2542, 0.0
        %v2613 = vmax.f32 %v2547, 0.0
        %v2614 = vmax.f32 %v2550, 0.0
        %v2615 = vmax.f32 %v2555, 0.0
        %v2616 = vmax.f32 %v2558, 0.0
        %v2617 = vmax.f32 %v2563, 0.0
        %v2618 = vmax.f32 %v2566, 0.0
        %v2619 = vmax.f32 %v2571, 0.0
        %v2620 = vmax.f32 %v2574, 0.0
        %v2621 = vmax.f32 %v2579, 0.0
        %v2622 = vmax.f32 %v2582, 0.0
        %v2623 = vmax.f32 %v2587, 0.0
        %v2624 = vmax.f32 %v2590, 0.0
        %s2625 = smul.u32 %s1923, 24
        %s2626 = smul.addr %s2625, 4
        %s2627 = scalar_lea.vmem %s3, %s2626
        %v2628 = vld [vmem:[%s2627] sm:$0xf]
        %v2629 = vld [vmem:[%s2627 + $0x4] sm:$0xf]
        %v2630 = vld [vmem:[%s2627 + $0x8] sm:$0xf]
        %v2631 = vld [vmem:[%s2627 + $0xc] sm:$0xf]
        %v2632 = vld [vmem:[%s2627 + $0x10] sm:$0xf]
        %v2633 = vld [vmem:[%s2627 + $0x14] sm:$0xf]
        %v2634 = vld [vmem:[%s2627 + $0x18] sm:$0xf]
        %v2635 = vld [vmem:[%s2627 + $0x1c] sm:$0xf]
        %v2636 = vld [vmem:[%s2627 + $0x20] sm:$0xf]
        %v2637 = vld [vmem:[%s2627 + $0x24] sm:$0xf]
        %v2638 = vld [vmem:[%s2627 + $0x28] sm:$0xf]
        %v2639 = vld [vmem:[%s2627 + $0x2c] sm:$0xf]
        %v2640 = vld [vmem:[%s2627 + $0x30] sm:$0xf]
        %v2641 = vld [vmem:[%s2627 + $0x34] sm:$0xf]
        %v2642 = vld [vmem:[%s2627 + $0x38] sm:$0xf]
        %v2643 = vld [vmem:[%s2627 + $0x3c] sm:$0xf]
        %v2644 = vld [vmem:[%s2627 + $0x40] sm:$0xf]
        %v2645 = vld [vmem:[%s2627 + $0x44] sm:$0xf]
        %v2646 = vld [vmem:[%s2627 + $0x48] sm:$0xf]
        %v2647 = vld [vmem:[%s2627 + $0x4c] sm:$0xf]
        %v2648 = vld [vmem:[%s2627 + $0x50] sm:$0xf]
        %v2649 = vld [vmem:[%s2627 + $0x54] sm:$0xf]
        %v2650 = vld [vmem:[%s2627 + $0x58] sm:$0xf]
        %v2651 = vld [vmem:[%s2627 + $0x5c] sm:$0xf]
        %s2652 = scalar_lea.vmem %s4, %s1923
        %v2653 = vld [vmem:[%s2652] sm:$0x1]
        %v2654 = vrot.slane %v2593, 7
        %v2655 = vrot.slane %v2594, 7
        %v2656 = vrot.slane %v2595, 7
        %v2657 = vrot.slane %v2596, 7
        %v2658 = vrot.slane %v2597, 7
        %v2659 = vrot.slane %v2598, 7
        %v2660 = vrot.slane %v2599, 7
        %v2661 = vrot.slane %v2600, 7
        %v2662 = vrot.slane %v2601, 7
        %v2663 = vrot.slane %v2602, 7
        %v2664 = vrot.slane %v2603, 7
        %v2665 = vrot.slane %v2604, 7
        %v2666 = vrot.slane %v2605, 7
        %v2667 = vrot.slane %v2606, 7
        %v2668 = vrot.slane %v2607, 7
        %v2669 = vrot.slane %v2608, 7
        %v2670 = vrot.slane %v2609, 7
        %v2671 = vrot.slane %v2610, 7
        %v2672 = vrot.slane %v2611, 7
        %v2673 = vrot.slane %v2612, 7
        %v2674 = vrot.slane %v2613, 7
        %v2675 = vrot.slane %v2614, 7
        %v2676 = vrot.slane %v2615, 7
        %v2677 = vrot.slane %v2616, 7
        %v2678 = vrot.slane %v2617, 7
        %v2679 = vrot.slane %v2618, 7
        %v2680 = vrot.slane %v2619, 7
        %v2681 = vrot.slane %v2620, 7
        %v2682 = vrot.slane %v2621, 7
        %v2683 = vrot.slane %v2622, 7
        %v2684 = vrot.slane %v2623, 7
        %v2685 = vrot.slane %v2624, 7
        %v2686 = vsel %vm958, %v2684, %v2685
        %v2687 = vsel %vm958, %v2683, %v2684
        %v2688 = vsel %vm958, %v2682, %v2683
        %v2689 = vsel %vm958, %v2681, %v2682
        %v2690 = vsel %vm958, %v2680, %v2681
        %v2691 = vsel %vm958, %v2679, %v2680
        %v2692 = vsel %vm958, %v2678, %v2679
        %v2693 = vsel %vm958, %v2677, %v2678
        %v2694 = vsel %vm958, %v2676, %v2677
        %v2695 = vsel %vm958, %v2675, %v2676
        %v2696 = vsel %vm958, %v2674, %v2675
        %v2697 = vsel %vm958, %v2673, %v2674
        %v2698 = vsel %vm958, %v2672, %v2673
        %v2699 = vsel %vm958, %v2671, %v2672
        %v2700 = vsel %vm958, %v2670, %v2671
        %v2701 = vsel %vm958, %v2669, %v2670
        %v2702 = vsel %vm958, %v2668, %v2669
        %v2703 = vsel %vm958, %v2667, %v2668
        %v2704 = vsel %vm958, %v2666, %v2667
        %v2705 = vsel %vm958, %v2665, %v2666
        %v2706 = vsel %vm958, %v2664, %v2665
        %v2707 = vsel %vm958, %v2663, %v2664
        %v2708 = vsel %vm958, %v2662, %v2663
        %v2709 = vsel %vm958, %v2661, %v2662
        %v2710 = vsel %vm958, %v2660, %v2661
        %v2711 = vsel %vm958, %v2659, %v2660
        %v2712 = vsel %vm958, %v2658, %v2659
        %v2713 = vsel %vm958, %v2657, %v2658
        %v2714 = vsel %vm958, %v2656, %v2657
        %v2715 = vsel %vm958, %v2655, %v2656
        %v2716 = vsel %vm958, %v2654, %v2655
        %v2717 = vsel %vm958, %v2685, %v2654
        %v2718 = vmul.f32 %v2717, %v798
        %v2719 = vmul.f32 %v2716, %v799
        %v2720 = vmul.f32 %v2715, %v800
        %v2721 = vmul.f32 %v2714, %v801
        %v2722 = vmul.f32 %v2713, %v802
        %v2723 = vmul.f32 %v2712, %v803
        %v2724 = vmul.f32 %v2711, %v804
        %v2725 = vmul.f32 %v2710, %v805
        %v2726 = vmul.f32 %v2709, %v806
        %v2727 = vmul.f32 %v2708, %v807
        %v2728 = vmul.f32 %v2707, %v808
        %v2729 = vmul.f32 %v2706, %v809
        %v2730 = vmul.f32 %v2705, %v810
        %v2731 = vmul.f32 %v2704, %v811
        %v2732 = vmul.f32 %v2703, %v812
        %v2733 = vmul.f32 %v2702, %v813
        %v2734 = vmul.f32 %v2701, %v814
        %v2735 = vmul.f32 %v2700, %v815
        %v2736 = vmul.f32 %v2699, %v816
        %v2737 = vmul.f32 %v2698, %v817
        %v2738 = vmul.f32 %v2697, %v818
        %v2739 = vmul.f32 %v2696, %v819
        %v2740 = vmul.f32 %v2695, %v820
        %v2741 = vmul.f32 %v2694, %v821
        %v2742 = vmul.f32 %v2693, %v822
        %v2743 = vmul.f32 %v2692, %v823
        %v2744 = vmul.f32 %v2691, %v824
        %v2745 = vmul.f32 %v2690, %v825
        %v2746 = vmul.f32 %v2689, %v826
        %v2747 = vmul.f32 %v2688, %v827
        %v2748 = vmul.f32 %v2687, %v828
        %v2749 = vmul.f32 %v2686, %v829
        %v2750 = vrot.slane %v2593, 1
        %v2751 = vrot.slane %v2594, 1
        %v2752 = vrot.slane %v2595, 1
        %v2753 = vrot.slane %v2596, 1
        %v2754 = vrot.slane %v2597, 1
        %v2755 = vrot.slane %v2598, 1
        %v2756 = vrot.slane %v2599, 1
        %v2757 = vrot.slane %v2600, 1
        %v2758 = vrot.slane %v2601, 1
        %v2759 = vrot.slane %v2602, 1
        %v2760 = vrot.slane %v2603, 1
        %v2761 = vrot.slane %v2604, 1
        %v2762 = vrot.slane %v2605, 1
        %v2763 = vrot.slane %v2606, 1
        %v2764 = vrot.slane %v2607, 1
        %v2765 = vrot.slane %v2608, 1
        %v2766 = vrot.slane %v2609, 1
        %v2767 = vrot.slane %v2610, 1
        %v2768 = vrot.slane %v2611, 1
        %v2769 = vrot.slane %v2612, 1
        %v2770 = vrot.slane %v2613, 1
        %v2771 = vrot.slane %v2614, 1
        %v2772 = vrot.slane %v2615, 1
        %v2773 = vrot.slane %v2616, 1
        %v2774 = vrot.slane %v2617, 1
        %v2775 = vrot.slane %v2618, 1
        %v2776 = vrot.slane %v2619, 1
        %v2777 = vrot.slane %v2620, 1
        %v2778 = vrot.slane %v2621, 1
        %v2779 = vrot.slane %v2622, 1
        %v2780 = vrot.slane %v2623, 1
        %v2781 = vrot.slane %v2624, 1
        %v2782 = vsel %vm1055, %v2780, %v2781
        %v2783 = vsel %vm1055, %v2779, %v2780
        %v2784 = vsel %vm1055, %v2778, %v2779
        %v2785 = vsel %vm1055, %v2777, %v2778
        %v2786 = vsel %vm1055, %v2776, %v2777
        %v2787 = vsel %vm1055, %v2775, %v2776
        %v2788 = vsel %vm1055, %v2774, %v2775
        %v2789 = vsel %vm1055, %v2773, %v2774
        %v2790 = vsel %vm1055, %v2772, %v2773
        %v2791 = vsel %vm1055, %v2771, %v2772
        %v2792 = vsel %vm1055, %v2770, %v2771
        %v2793 = vsel %vm1055, %v2769, %v2770
        %v2794 = vsel %vm1055, %v2768, %v2769
        %v2795 = vsel %vm1055, %v2767, %v2768
        %v2796 = vsel %vm1055, %v2766, %v2767
        %v2797 = vsel %vm1055, %v2765, %v2766
        %v2798 = vsel %vm1055, %v2764, %v2765
        %v2799 = vsel %vm1055, %v2763, %v2764
        %v2800 = vsel %vm1055, %v2762, %v2763
        %v2801 = vsel %vm1055, %v2761, %v2762
        %v2802 = vsel %vm1055, %v2760, %v2761
        %v2803 = vsel %vm1055, %v2759, %v2760
        %v2804 = vsel %vm1055, %v2758, %v2759
        %v2805 = vsel %vm1055, %v2757, %v2758
        %v2806 = vsel %vm1055, %v2756, %v2757
        %v2807 = vsel %vm1055, %v2755, %v2756
        %v2808 = vsel %vm1055, %v2754, %v2755
        %v2809 = vsel %vm1055, %v2753, %v2754
        %v2810 = vsel %vm1055, %v2752, %v2753
        %v2811 = vsel %vm1055, %v2751, %v2752
        %v2812 = vsel %vm1055, %v2750, %v2751
        %v2813 = vsel %vm1055, %v2781, %v2750
        %v2814 = vmul.f32 %v2812, %v862
        %v2815 = vmul.f32 %v2811, %v863
        %v2816 = vmul.f32 %v2810, %v864
        %v2817 = vmul.f32 %v2809, %v865
        %v2818 = vmul.f32 %v2808, %v866
        %v2819 = vmul.f32 %v2807, %v867
        %v2820 = vmul.f32 %v2806, %v868
        %v2821 = vmul.f32 %v2805, %v869
        %v2822 = vmul.f32 %v2804, %v870
        %v2823 = vmul.f32 %v2803, %v871
        %v2824 = vmul.f32 %v2802, %v872
        %v2825 = vmul.f32 %v2801, %v873
        %v2826 = vmul.f32 %v2800, %v874
        %v2827 = vmul.f32 %v2799, %v875
        %v2828 = vmul.f32 %v2798, %v876
        %v2829 = vmul.f32 %v2797, %v877
        %v2830 = vmul.f32 %v2796, %v878
        %v2831 = vmul.f32 %v2795, %v879
        %v2832 = vmul.f32 %v2794, %v880
        %v2833 = vmul.f32 %v2793, %v881
        %v2834 = vmul.f32 %v2792, %v882
        %v2835 = vmul.f32 %v2791, %v883
        %v2836 = vmul.f32 %v2790, %v884
        %v2837 = vmul.f32 %v2789, %v885
        %v2838 = vmul.f32 %v2788, %v886
        %v2839 = vmul.f32 %v2787, %v887
        %v2840 = vmul.f32 %v2786, %v888
        %v2841 = vmul.f32 %v2785, %v889
        %v2842 = vmul.f32 %v2784, %v890
        %v2843 = vmul.f32 %v2783, %v891
        %v2844 = vmul.f32 %v2782, %v892
        %v2845 = vmul.f32 %v2813, %v893
        %v2846 = vpack.c.bf16 %v2719, %v2718
        %v2847 = vpack.c.bf16 %v2721, %v2720
        %v2848 = vpack.c.bf16 %v2723, %v2722
        %v2849 = vpack.c.bf16 %v2725, %v2724
        %v2850 = vpack.c.bf16 %v2727, %v2726
        %v2851 = vpack.c.bf16 %v2729, %v2728
        %v2852 = vpack.c.bf16 %v2731, %v2730
        %v2853 = vpack.c.bf16 %v2733, %v2732
        %v2854 = vpack.c.bf16 %v2735, %v2734
        %v2855 = vpack.c.bf16 %v2737, %v2736
        %v2856 = vpack.c.bf16 %v2739, %v2738
        %v2857 = vpack.c.bf16 %v2741, %v2740
        %v2858 = vpack.c.bf16 %v2743, %v2742
        %v2859 = vpack.c.bf16 %v2745, %v2744
        %v2860 = vpack.c.bf16 %v2747, %v2746
        %v2861 = vpack.c.bf16 %v2749, %v2748
        %v2862 = vpack.c.bf16 %v2594, %v2593
        %v2863 = vpack.c.bf16 %v2596, %v2595
        %v2864 = vpack.c.bf16 %v2598, %v2597
        %v2865 = vpack.c.bf16 %v2600, %v2599
        %v2866 = vpack.c.bf16 %v2602, %v2601
        %v2867 = vpack.c.bf16 %v2604, %v2603
        %v2868 = vpack.c.bf16 %v2606, %v2605
        %v2869 = vpack.c.bf16 %v2608, %v2607
        %v2870 = vpack.c.bf16 %v2610, %v2609
        %v2871 = vpack.c.bf16 %v2612, %v2611
        %v2872 = vpack.c.bf16 %v2614, %v2613
        %v2873 = vpack.c.bf16 %v2616, %v2615
        %v2874 = vpack.c.bf16 %v2618, %v2617
        %v2875 = vpack.c.bf16 %v2620, %v2619
        %v2876 = vpack.c.bf16 %v2622, %v2621
        %v2877 = vpack.c.bf16 %v2624, %v2623
        %v2878 = vpack.c.bf16 %v2815, %v2814
        %v2879 = vpack.c.bf16 %v2817, %v2816
        %v2880 = vpack.c.bf16 %v2819, %v2818
        %v2881 = vpack.c.bf16 %v2821, %v2820
        %v2882 = vpack.c.bf16 %v2823, %v2822
        %v2883 = vpack.c.bf16 %v2825, %v2824
        %v2884 = vpack.c.bf16 %v2827, %v2826
        %v2885 = vpack.c.bf16 %v2829, %v2828
        %v2886 = vpack.c.bf16 %v2831, %v2830
        %v2887 = vpack.c.bf16 %v2833, %v2832
        %v2888 = vpack.c.bf16 %v2835, %v2834
        %v2889 = vpack.c.bf16 %v2837, %v2836
        %v2890 = vpack.c.bf16 %v2839, %v2838
        %v2891 = vpack.c.bf16 %v2841, %v2840
        %v2892 = vpack.c.bf16 %v2843, %v2842
        %v2893 = vpack.c.bf16 %v2845, %v2844
        %2910 = vrot.lane.b32.xlu0 %v2862, 64
        %v2911 = vpop.permute.xlu0 %2910
        %2912 = vrot.lane.b32.xlu0 %v2863, 64
        %v2913 = vpop.permute.xlu0 %2912
        %2914 = vrot.lane.b32.xlu0 %v2864, 64
        %v2915 = vpop.permute.xlu0 %2914
        %2916 = vrot.lane.b32.xlu0 %v2865, 64
        %v2917 = vpop.permute.xlu0 %2916
        %2918 = vrot.lane.b32.xlu0 %v2866, 64
        %v2919 = vpop.permute.xlu0 %2918
        %2920 = vrot.lane.b32.xlu0 %v2867, 64
        %v2921 = vpop.permute.xlu0 %2920
        %2922 = vrot.lane.b32.xlu0 %v2868, 64
        %v2923 = vpop.permute.xlu0 %2922
        %2924 = vrot.lane.b32.xlu0 %v2869, 64
        %v2925 = vpop.permute.xlu0 %2924
        %2926 = vrot.lane.b32.xlu0 %v2870, 64
        %v2927 = vpop.permute.xlu0 %2926
        %2928 = vrot.lane.b32.xlu0 %v2871, 64
        %v2929 = vpop.permute.xlu0 %2928
        %2930 = vrot.lane.b32.xlu0 %v2872, 64
        %v2931 = vpop.permute.xlu0 %2930
        %2932 = vrot.lane.b32.xlu0 %v2873, 64
        %v2933 = vpop.permute.xlu0 %2932
        %2934 = vrot.lane.b32.xlu0 %v2874, 64
        %v2935 = vpop.permute.xlu0 %2934
        %2936 = vrot.lane.b32.xlu0 %v2875, 64
        %v2937 = vpop.permute.xlu0 %2936
        %2938 = vrot.lane.b32.xlu0 %v2876, 64
        %v2939 = vpop.permute.xlu0 %2938
        %2940 = vrot.lane.b32.xlu0 %v2877, 64
        %v2941 = vpop.permute.xlu0 %2940
        %v2944 = vsel %vm2241, %v2846, %v2911
        %v2948 = vsel %vm2241, %v2847, %v2913
        %v2952 = vsel %vm2241, %v2848, %v2915
        %v2956 = vsel %vm2241, %v2849, %v2917
        %v2960 = vsel %vm2241, %v2850, %v2919
        %v2964 = vsel %vm2241, %v2851, %v2921
        %v2968 = vsel %vm2241, %v2852, %v2923
        %v2972 = vsel %vm2241, %v2853, %v2925
        %v2976 = vsel %vm2241, %v2854, %v2927
        %v2980 = vsel %vm2241, %v2855, %v2929
        %v2984 = vsel %vm2241, %v2856, %v2931
        %v2988 = vsel %vm2241, %v2857, %v2933
        %v2992 = vsel %vm2241, %v2858, %v2935
        %v2996 = vsel %vm2241, %v2859, %v2937
        %v3000 = vsel %vm2241, %v2860, %v2939
        %v3004 = vsel %vm2241, %v2861, %v2941
        %v3007 = vlaneseq
        %v3008 = vshrl.u32 %v3007, 7
        %v3009 = vsub.s32 0, %v3008
        %v3010 = vrot.slane %v2653, %v3009
        %v3036 = vunpack.c.l.b16 %v2628
        %v3037 = vunpack.c.l.b16 %v2629
        %v3038 = vunpack.c.l.b16 %v2630
        %v3039 = vunpack.c.l.b16 %v2631
        %v3040 = vunpack.c.l.b16 %v2632
        %v3041 = vunpack.c.l.b16 %v2633
        %v3042 = vunpack.c.l.b16 %v2634
        %v3043 = vunpack.c.l.b16 %v2635
        %v3044 = vunpack.c.l.b16 %v2636
        %v3045 = vunpack.c.l.b16 %v2637
        %v3046 = vunpack.c.l.b16 %v2638
        %v3047 = vunpack.c.l.b16 %v2639
        %v3048 = vunpack.c.l.b16 %v2640
        %v3049 = vunpack.c.l.b16 %v2641
        %v3050 = vunpack.c.l.b16 %v2642
        %v3051 = vunpack.c.l.b16 %v2643
        %v3052 = vunpack.c.l.b16 %v2644
        %v3053 = vunpack.c.l.b16 %v2645
        %v3054 = vunpack.c.l.b16 %v2646
        %v3055 = vunpack.c.l.b16 %v2647
        %v3056 = vunpack.c.l.b16 %v2648
        %v3057 = vunpack.c.l.b16 %v2649
        %v3058 = vunpack.c.l.b16 %v2650
        %v3059 = vunpack.c.l.b16 %v2651
        %v3060 = vpack.c.b16 %v3037, %v3036
        %v3061 = vpack.c.b16 %v3039, %v3038
        %v3062 = vpack.c.b16 %v3041, %v3040
        %v3063 = vpack.c.b16 %v3043, %v3042
        %v3064 = vpack.c.b16 %v3045, %v3044
        %v3065 = vpack.c.b16 %v3047, %v3046
        %v3066 = vpack.c.b16 %v3049, %v3048
        %v3067 = vpack.c.b16 %v3051, %v3050
        %v3068 = vpack.c.b16 %v3053, %v3052
        %v3069 = vpack.c.b16 %v3055, %v3054
        %v3070 = vpack.c.b16 %v3057, %v3056
        %v3071 = vpack.c.b16 %v3059, %v3058
        %v3085 = vsel %vm2241, %v2878, 0
        %v3088 = vsel %vm2241, %v2879, 0
        %v3091 = vsel %vm2241, %v2880, 0
        %v3094 = vsel %vm2241, %v2881, 0
        %v3097 = vsel %vm2241, %v2882, 0
        %v3100 = vsel %vm2241, %v2883, 0
        %v3103 = vsel %vm2241, %v2884, 0
        %v3106 = vsel %vm2241, %v2885, 0
        %v3109 = vsel %vm2241, %v2886, 0
        %v3112 = vsel %vm2241, %v2887, 0
        %v3115 = vsel %vm2241, %v2888, 0
        %v3118 = vsel %vm2241, %v2889, 0
        %v3121 = vsel %vm2241, %v2890, 0
        %v3124 = vsel %vm2241, %v2891, 0
        %v3127 = vsel %vm2241, %v2892, 0
        %v3130 = vsel %vm2241, %v2893, 0
        %3132 = vmatprep.subr.bf16.mxu0 0
        %3133 = vmatpush1.bf16.msra.mxu0 %v3060
        %3134 = vmatprep.subr.bf16.mxu0 0
        %3135 = vmatpush1.bf16.msra.mxu0 %v3061
        %3136 = vmatprep.subr.bf16.mxu0 0
        %3137 = vmatpush1.bf16.msra.mxu0 %v3062
        %3138 = vmatprep.subr.bf16.mxu0 0
        %3139 = vmatpush1.bf16.msra.mxu0 %v3063
        %3140 = vmatprep.subr.bf16.mxu0 0
        %3141 = vmatpush1.bf16.msra.mxu0 %v3064
        %3142 = vmatprep.subr.bf16.mxu0 0
        %3143 = vmatpush1.bf16.msra.mxu0 %v3065
        %3144 = vmatprep.subr.bf16.mxu0 0
        %3145 = vmatpush1.bf16.msra.mxu0 %v3066
        %3146 = vmatprep.subr.bf16.mxu0 0
        %3147 = vmatpush1.bf16.msra.mxu0 %v3067
        %3148 = vmatprep.subr.bf16.mxu0 0
        %3149 = vmatpush1.bf16.msra.mxu0 %v3068
        %3150 = vmatprep.subr.bf16.mxu0 0
        %3151 = vmatpush1.bf16.msra.mxu0 %v3069
        %3152 = vmatprep.subr.bf16.mxu0 0
        %3153 = vmatpush1.bf16.msra.mxu0 %v3070
        %3154 = vmatprep.subr.bf16.mxu0 0
        %3155 = vmatpush1.bf16.msra.mxu0 %v3071
        %3156 = vmatprep.subr.bf16.mxu0 0
        %3157 = vmatpush1.bf16.msra.mxu0 0
        %3158 = vmatprep.subr.bf16.mxu0 0
        %3159 = vmatpush1.bf16.msra.mxu0 0
        %3160 = vmatprep.subr.bf16.mxu0 0
        %3161 = vmatpush1.bf16.msra.mxu0 0
        %3162 = vmatprep.subr.bf16.mxu0 0
        %3163 = vmatpush1.bf16.msra.mxu0 0
        %3164 = vmatprep.mubr.bf16.mxu0 %v3085
        %3165 = vmatmul.mubr.bf16.gmra.mrb[0].mxu0 %v2944
        %v3166 = vpop.f32.mrb[0].mxu0
        %v3167 = vadd.f32 %v3010, %v3166
        %v3168 = vpop.f32.mrb[0].mxu0
        %v3169 = vpop.f32.mrb[0].mxu0
        %v3170 = vadd.f32 %v3010, %v3169
        %v3171 = vpop.f32.mrb[0].mxu0
        %3172 = vmatprep.mubr.bf16.mxu0 %v3088
        %3173 = vmatmul.mubr.bf16.gmra.mrb[0].mxu0 %v2948
        %v3174 = vpop.f32.mrb[0].mxu0
        %v3175 = vadd.f32 %v3010, %v3174
        %v3176 = vpop.f32.mrb[0].mxu0
        %v3177 = vpop.f32.mrb[0].mxu0
        %v3178 = vadd.f32 %v3010, %v3177
        %v3179 = vpop.f32.mrb[0].mxu0
        %3180 = vmatprep.mubr.bf16.mxu0 %v3091
        %3181 = vmatmul.mubr.bf16.gmra.mrb[0].mxu0 %v2952
        %v3182 = vpop.f32.mrb[0].mxu0
        %v3183 = vadd.f32 %v3010, %v3182
        %v3184 = vpop.f32.mrb[0].mxu0
        %v3185 = vpop.f32.mrb[0].mxu0
        %v3186 = vadd.f32 %v3010, %v3185
        %v3187 = vpop.f32.mrb[0].mxu0
        %3188 = vmatprep.mubr.bf16.mxu0 %v3094
        %3189 = vmatmul.mubr.bf16.gmra.mrb[0].mxu0 %v2956
        %v3190 = vpop.f32.mrb[0].mxu0
        %v3191 = vadd.f32 %v3010, %v3190
        %v3192 = vpop.f32.mrb[0].mxu0
        %v3193 = vpop.f32.mrb[0].mxu0
        %v3194 = vadd.f32 %v3010, %v3193
        %v3195 = vpop.f32.mrb[0].mxu0
        %3196 = vmatprep.mubr.bf16.mxu0 %v3097
        %3197 = vmatmul.mubr.bf16.gmra.mrb[0].mxu0 %v2960
        %v3198 = vpop.f32.mrb[0].mxu0
        %v3199 = vadd.f32 %v3010, %v3198
        %v3200 = vpop.f32.mrb[0].mxu0
        %v3201 = vpop.f32.mrb[0].mxu0
        %v3202 = vadd.f32 %v3010, %v3201
        %v3203 = vpop.f32.mrb[0].mxu0
        %3204 = vmatprep.mubr.bf16.mxu0 %v3100
        %3205 = vmatmul.mubr.bf16.gmra.mrb[0].mxu0 %v2964
        %v3206 = vpop.f32.mrb[0].mxu0
        %v3207 = vadd.f32 %v3010, %v3206
        %v3208 = vpop.f32.mrb[0].mxu0
        %v3209 = vpop.f32.mrb[0].mxu0
        %v3210 = vadd.f32 %v3010, %v3209
        %v3211 = vpop.f32.mrb[0].mxu0
        %3212 = vmatprep.mubr.bf16.mxu0 %v3103
        %3213 = vmatmul.mubr.bf16.gmra.mrb[0].mxu0 %v2968
        %v3214 = vpop.f32.mrb[0].mxu0
        %v3215 = vadd.f32 %v3010, %v3214
        %v3216 = vpop.f32.mrb[0].mxu0
        %v3217 = vpop.f32.mrb[0].mxu0
        %v3218 = vadd.f32 %v3010, %v3217
        %v3219 = vpop.f32.mrb[0].mxu0
        %3220 = vmatprep.mubr.bf16.mxu0 %v3106
        %3221 = vmatmul.mubr.bf16.gmra.mrb[0].mxu0 %v2972
        %v3222 = vpop.f32.mrb[0].mxu0
        %v3223 = vadd.f32 %v3010, %v3222
        %v3224 = vpop.f32.mrb[0].mxu0
        %v3225 = vpop.f32.mrb[0].mxu0
        %v3226 = vadd.f32 %v3010, %v3225
        %v3227 = vpop.f32.mrb[0].mxu0
        %3228 = vmatprep.mubr.bf16.mxu0 %v3109
        %3229 = vmatmul.mubr.bf16.gmra.mrb[0].mxu0 %v2976
        %v3230 = vpop.f32.mrb[0].mxu0
        %v3231 = vadd.f32 %v3010, %v3230
        %v3232 = vpop.f32.mrb[0].mxu0
        %v3233 = vpop.f32.mrb[0].mxu0
        %v3234 = vadd.f32 %v3010, %v3233
        %v3235 = vpop.f32.mrb[0].mxu0
        %3236 = vmatprep.mubr.bf16.mxu0 %v3112
        %3237 = vmatmul.mubr.bf16.gmra.mrb[0].mxu0 %v2980
        %v3238 = vpop.f32.mrb[0].mxu0
        %v3239 = vadd.f32 %v3010, %v3238
        %v3240 = vpop.f32.mrb[0].mxu0
        %v3241 = vpop.f32.mrb[0].mxu0
        %v3242 = vadd.f32 %v3010, %v3241
        %v3243 = vpop.f32.mrb[0].mxu0
        %3244 = vmatprep.mubr.bf16.mxu0 %v3115
        %3245 = vmatmul.mubr.bf16.gmra.mrb[0].mxu0 %v2984
        %v3246 = vpop.f32.mrb[0].mxu0
        %v3247 = vadd.f32 %v3010, %v3246
        %v3248 = vpop.f32.mrb[0].mxu0
        %v3249 = vpop.f32.mrb[0].mxu0
        %v3250 = vadd.f32 %v3010, %v3249
        %v3251 = vpop.f32.mrb[0].mxu0
        %3252 = vmatprep.mubr.bf16.mxu0 %v3118
        %3253 = vmatmul.mubr.bf16.gmra.mrb[0].mxu0 %v2988
        %v3254 = vpop.f32.mrb[0].mxu0
        %v3255 = vadd.f32 %v3010, %v3254
        %v3256 = vpop.f32.mrb[0].mxu0
        %v3257 = vpop.f32.mrb[0].mxu0
        %v3258 = vadd.f32 %v3010, %v3257
        %v3259 = vpop.f32.mrb[0].mxu0
        %3260 = vmatprep.mubr.bf16.mxu0 %v3121
        %3261 = vmatmul.mubr.bf16.gmra.mrb[0].mxu0 %v2992
        %v3262 = vpop.f32.mrb[0].mxu0
        %v3263 = vadd.f32 %v3010, %v3262
        %v3264 = vpop.f32.mrb[0].mxu0
        %v3265 = vpop.f32.mrb[0].mxu0
        %v3266 = vadd.f32 %v3010, %v3265
        %v3267 = vpop.f32.mrb[0].mxu0
        %3268 = vmatprep.mubr.bf16.mxu0 %v3124
        %3269 = vmatmul.mubr.bf16.gmra.mrb[0].mxu0 %v2996
        %v3270 = vpop.f32.mrb[0].mxu0
        %v3271 = vadd.f32 %v3010, %v3270
        %v3272 = vpop.f32.mrb[0].mxu0
        %v3273 = vpop.f32.mrb[0].mxu0
        %v3274 = vadd.f32 %v3010, %v3273
        %v3275 = vpop.f32.mrb[0].mxu0
        %3276 = vmatprep.mubr.bf16.mxu0 %v3127
        %3277 = vmatmul.mubr.bf16.gmra.mrb[0].mxu0 %v3000
        %v3278 = vpop.f32.mrb[0].mxu0
        %v3279 = vadd.f32 %v3010, %v3278
        %v3280 = vpop.f32.mrb[0].mxu0
        %v3281 = vpop.f32.mrb[0].mxu0
        %v3282 = vadd.f32 %v3010, %v3281
        %v3283 = vpop.f32.mrb[0].mxu0
        %3284 = vmatprep.mubr.bf16.mxu0 %v3130
        %3285 = vmatmul.mubr.bf16.gmra.mrb[0].mxu0 %v3004
        %v3286 = vpop.f32.mrb[0].mxu0
        %v3287 = vadd.f32 %v3010, %v3286
        %v3288 = vpop.f32.mrb[0].mxu0
        %v3289 = vpop.f32.mrb[0].mxu0
        %v3290 = vadd.f32 %v3010, %v3289
        %v3291 = vpop.f32.mrb[0].mxu0
        %3292 = vdwg.mxu0
      $region53: #{tpu_custom_call.1} parent=47 // loop_footer
        %s1889 = sadd.s32 1, %s1885
      $region54: #{tpu_custom_call.1} parent=47 // loop_footer_branch
        %1884 = sbr.rel target = $region50
      $region55: #{tpu_custom_call.1} parent=47 // loop_exit
        _
      %v3293 = vadd.f32 %v1890, %v1852
      %v3294 = vadd.f32 %v1891, %v1853
      %v3295 = vadd.f32 %v1892, %v1854
      %v3296 = vadd.f32 %v1893, %v1855
      %v3297 = vadd.f32 %v1894, %v1856
      %v3298 = vadd.f32 %v1895, %v1857
      %v3299 = vadd.f32 %v1896, %v1858
      %v3300 = vadd.f32 %v1897, %v1859
      %v3301 = vadd.f32 %v1898, %v1860
      %v3302 = vadd.f32 %v1899, %v1861
      %v3303 = vadd.f32 %v1900, %v1862
      %v3304 = vadd.f32 %v1901, %v1863
      %v3305 = vadd.f32 %v1902, %v1864
      %v3306 = vadd.f32 %v1903, %v1865
      %v3307 = vadd.f32 %v1904, %v1866
      %v3308 = vadd.f32 %v1905, %v1867
      %v3309 = vadd.f32 %v1906, %v1868
      %v3310 = vadd.f32 %v1907, %v1869
      %v3311 = vadd.f32 %v1908, %v1870
      %v3312 = vadd.f32 %v1909, %v1871
      %v3313 = vadd.f32 %v1910, %v1872
      %v3314 = vadd.f32 %v1911, %v1873
      %v3315 = vadd.f32 %v1912, %v1874
      %v3316 = vadd.f32 %v1913, %v1875
      %v3317 = vadd.f32 %v1914, %v1876
      %v3318 = vadd.f32 %v1915, %v1877
      %v3319 = vadd.f32 %v1916, %v1878
      %v3320 = vadd.f32 %v1917, %v1879
      %v3321 = vadd.f32 %v1918, %v1880
      %v3322 = vadd.f32 %v1919, %v1881
      %v3323 = vadd.f32 %v1920, %v1882
      %v3324 = vadd.f32 %v1921, %v1883
      %v3325 = vrot.slane %v3293, 7
      %v3326 = vrot.slane %v3294, 7
      %v3327 = vrot.slane %v3295, 7
      %v3328 = vrot.slane %v3296, 7
      %v3329 = vrot.slane %v3297, 7
      %v3330 = vrot.slane %v3298, 7
      %v3331 = vrot.slane %v3299, 7
      %v3332 = vrot.slane %v3300, 7
      %v3333 = vrot.slane %v3301, 7
      %v3334 = vrot.slane %v3302, 7
      %v3335 = vrot.slane %v3303, 7
      %v3336 = vrot.slane %v3304, 7
      %v3337 = vrot.slane %v3305, 7
      %v3338 = vrot.slane %v3306, 7
      %v3339 = vrot.slane %v3307, 7
      %v3340 = vrot.slane %v3308, 7
      %v3341 = vrot.slane %v3309, 7
      %v3342 = vrot.slane %v3310, 7
      %v3343 = vrot.slane %v3311, 7
      %v3344 = vrot.slane %v3312, 7
      %v3345 = vrot.slane %v3313, 7
      %v3346 = vrot.slane %v3314, 7
      %v3347 = vrot.slane %v3315, 7
      %v3348 = vrot.slane %v3316, 7
      %v3349 = vrot.slane %v3317, 7
      %v3350 = vrot.slane %v3318, 7
      %v3351 = vrot.slane %v3319, 7
      %v3352 = vrot.slane %v3320, 7
      %v3353 = vrot.slane %v3321, 7
      %v3354 = vrot.slane %v3322, 7
      %v3355 = vrot.slane %v3323, 7
      %v3356 = vrot.slane %v3324, 7
      %v3357 = vsel %vm958, %v3355, %v3356
      %v3358 = vsel %vm958, %v3354, %v3355
      %v3359 = vsel %vm958, %v3353, %v3354
      %v3360 = vsel %vm958, %v3352, %v3353
      %v3361 = vsel %vm958, %v3351, %v3352
      %v3362 = vsel %vm958, %v3350, %v3351
      %v3363 = vsel %vm958, %v3349, %v3350
      %v3364 = vsel %vm958, %v3348, %v3349
      %v3365 = vsel %vm958, %v3347, %v3348
      %v3366 = vsel %vm958, %v3346, %v3347
      %v3367 = vsel %vm958, %v3345, %v3346
      %v3368 = vsel %vm958, %v3344, %v3345
      %v3369 = vsel %vm958, %v3343, %v3344
      %v3370 = vsel %vm958, %v3342, %v3343
      %v3371 = vsel %vm958, %v3341, %v3342
      %v3372 = vsel %vm958, %v3340, %v3341
      %v3373 = vsel %vm958, %v3339, %v3340
      %v3374 = vsel %vm958, %v3338, %v3339
      %v3375 = vsel %vm958, %v3337, %v3338
      %v3376 = vsel %vm958, %v3336, %v3337
      %v3377 = vsel %vm958, %v3335, %v3336
      %v3378 = vsel %vm958, %v3334, %v3335
      %v3379 = vsel %vm958, %v3333, %v3334
      %v3380 = vsel %vm958, %v3332, %v3333
      %v3381 = vsel %vm958, %v3331, %v3332
      %v3382 = vsel %vm958, %v3330, %v3331
      %v3383 = vsel %vm958, %v3329, %v3330
      %v3384 = vsel %vm958, %v3328, %v3329
      %v3385 = vsel %vm958, %v3327, %v3328
      %v3386 = vsel %vm958, %v3326, %v3327
      %v3387 = vsel %vm958, %v3325, %v3326
      %v3388 = vsel %vm958, %v3356, %v3325
      %v3389 = vmul.f32 %v3388, %v798
      %v3390 = vmul.f32 %v3387, %v799
      %v3391 = vmul.f32 %v3386, %v800
      %v3392 = vmul.f32 %v3385, %v801
      %v3393 = vmul.f32 %v3384, %v802
      %v3394 = vmul.f32 %v3383, %v803
      %v3395 = vmul.f32 %v3382, %v804
      %v3396 = vmul.f32 %v3381, %v805
      %v3397 = vmul.f32 %v3380, %v806
      %v3398 = vmul.f32 %v3379, %v807
      %v3399 = vmul.f32 %v3378, %v808
      %v3400 = vmul.f32 %v3377, %v809
      %v3401 = vmul.f32 %v3376, %v810
      %v3402 = vmul.f32 %v3375, %v811
      %v3403 = vmul.f32 %v3374, %v812
      %v3404 = vmul.f32 %v3373, %v813
      %v3405 = vmul.f32 %v3372, %v814
      %v3406 = vmul.f32 %v3371, %v815
      %v3407 = vmul.f32 %v3370, %v816
      %v3408 = vmul.f32 %v3369, %v817
      %v3409 = vmul.f32 %v3368, %v818
      %v3410 = vmul.f32 %v3367, %v819
      %v3411 = vmul.f32 %v3366, %v820
      %v3412 = vmul.f32 %v3365, %v821
      %v3413 = vmul.f32 %v3364, %v822
      %v3414 = vmul.f32 %v3363, %v823
      %v3415 = vmul.f32 %v3362, %v824
      %v3416 = vmul.f32 %v3361, %v825
      %v3417 = vmul.f32 %v3360, %v826
      %v3418 = vmul.f32 %v3359, %v827
      %v3419 = vmul.f32 %v3358, %v828
      %v3420 = vmul.f32 %v3357, %v829
      %v3421 = vrot.slane %v3293, 1
      %v3422 = vrot.slane %v3294, 1
      %v3423 = vrot.slane %v3295, 1
      %v3424 = vrot.slane %v3296, 1
      %v3425 = vrot.slane %v3297, 1
      %v3426 = vrot.slane %v3298, 1
      %v3427 = vrot.slane %v3299, 1
      %v3428 = vrot.slane %v3300, 1
      %v3429 = vrot.slane %v3301, 1
      %v3430 = vrot.slane %v3302, 1
      %v3431 = vrot.slane %v3303, 1
      %v3432 = vrot.slane %v3304, 1
      %v3433 = vrot.slane %v3305, 1
      %v3434 = vrot.slane %v3306, 1
      %v3435 = vrot.slane %v3307, 1
      %v3436 = vrot.slane %v3308, 1
      %v3437 = vrot.slane %v3309, 1
      %v3438 = vrot.slane %v3310, 1
      %v3439 = vrot.slane %v3311, 1
      %v3440 = vrot.slane %v3312, 1
      %v3441 = vrot.slane %v3313, 1
      %v3442 = vrot.slane %v3314, 1
      %v3443 = vrot.slane %v3315, 1
      %v3444 = vrot.slane %v3316, 1
      %v3445 = vrot.slane %v3317, 1
      %v3446 = vrot.slane %v3318, 1
      %v3447 = vrot.slane %v3319, 1
      %v3448 = vrot.slane %v3320, 1
      %v3449 = vrot.slane %v3321, 1
      %v3450 = vrot.slane %v3322, 1
      %v3451 = vrot.slane %v3323, 1
      %v3452 = vrot.slane %v3324, 1
      %v3453 = vsel %vm1055, %v3451, %v3452
      %v3454 = vsel %vm1055, %v3450, %v3451
      %v3455 = vsel %vm1055, %v3449, %v3450
      %v3456 = vsel %vm1055, %v3448, %v3449
      %v3457 = vsel %vm1055, %v3447, %v3448
      %v3458 = vsel %vm1055, %v3446, %v3447
      %v3459 = vsel %vm1055, %v3445, %v3446
      %v3460 = vsel %vm1055, %v3444, %v3445
      %v3461 = vsel %vm1055, %v3443, %v3444
      %v3462 = vsel %vm1055, %v3442, %v3443
      %v3463 = vsel %vm1055, %v3441, %v3442
      %v3464 = vsel %vm1055, %v3440, %v3441
      %v3465 = vsel %vm1055, %v3439, %v3440
      %v3466 = vsel %vm1055, %v3438, %v3439
      %v3467 = vsel %vm1055, %v3437, %v3438
      %v3468 = vsel %vm1055, %v3436, %v3437
      %v3469 = vsel %vm1055, %v3435, %v3436
      %v3470 = vsel %vm1055, %v3434, %v3435
      %v3471 = vsel %vm1055, %v3433, %v3434
      %v3472 = vsel %vm1055, %v3432, %v3433
      %v3473 = vsel %vm1055, %v3431, %v3432
      %v3474 = vsel %vm1055, %v3430, %v3431
      %v3475 = vsel %vm1055, %v3429, %v3430
      %v3476 = vsel %vm1055, %v3428, %v3429
      %v3477 = vsel %vm1055, %v3427, %v3428
      %v3478 = vsel %vm1055, %v3426, %v3427
      %v3479 = vsel %vm1055, %v3425, %v3426
      %v3480 = vsel %vm1055, %v3424, %v3425
      %v3481 = vsel %vm1055, %v3423, %v3424
      %v3482 = vsel %vm1055, %v3422, %v3423
      %v3483 = vsel %vm1055, %v3421, %v3422
      %v3484 = vsel %vm1055, %v3452, %v3421
      %v3485 = vmul.f32 %v3483, %v862
      %v3486 = vmul.f32 %v3482, %v863
      %v3487 = vmul.f32 %v3481, %v864
      %v3488 = vmul.f32 %v3480, %v865
      %v3489 = vmul.f32 %v3479, %v866
      %v3490 = vmul.f32 %v3478, %v867
      %v3491 = vmul.f32 %v3477, %v868
      %v3492 = vmul.f32 %v3476, %v869
      %v3493 = vmul.f32 %v3475, %v870
      %v3494 = vmul.f32 %v3474, %v871
      %v3495 = vmul.f32 %v3473, %v872
      %v3496 = vmul.f32 %v3472, %v873
      %v3497 = vmul.f32 %v3471, %v874
      %v3498 = vmul.f32 %v3470, %v875
      %v3499 = vmul.f32 %v3469, %v876
      %v3500 = vmul.f32 %v3468, %v877
      %v3501 = vmul.f32 %v3467, %v878
      %v3502 = vmul.f32 %v3466, %v879
      %v3503 = vmul.f32 %v3465, %v880
      %v3504 = vmul.f32 %v3464, %v881
      %v3505 = vmul.f32 %v3463, %v882
      %v3506 = vmul.f32 %v3462, %v883
      %v3507 = vmul.f32 %v3461, %v884
      %v3508 = vmul.f32 %v3460, %v885
      %v3509 = vmul.f32 %v3459, %v886
      %v3510 = vmul.f32 %v3458, %v887
      %v3511 = vmul.f32 %v3457, %v888
      %v3512 = vmul.f32 %v3456, %v889
      %v3513 = vmul.f32 %v3455, %v890
      %v3514 = vmul.f32 %v3454, %v891
      %v3515 = vmul.f32 %v3453, %v892
      %v3516 = vmul.f32 %v3484, %v893
      %v3517 = vld [vmem:[%s5] sm:$0x1]
      %v3518 = vld [vmem:[%s5 + $0x1] sm:$0x1]
      %v3519 = vld [vmem:[%s5 + $0x2] sm:$0x1]
      %v3521 = vlaneseq
      %v3522 = vshrl.u32 %v3521, 7
      %v3523 = vsub.s32 0, %v3522
      %v3524 = vrot.slane %v3517, %v3523
      %v3526 = vmul.f32 %v3389, %v3524
      %v3527 = vmul.f32 %v3390, %v3524
      %v3528 = vmul.f32 %v3391, %v3524
      %v3529 = vmul.f32 %v3392, %v3524
      %v3530 = vmul.f32 %v3393, %v3524
      %v3531 = vmul.f32 %v3394, %v3524
      %v3532 = vmul.f32 %v3395, %v3524
      %v3533 = vmul.f32 %v3396, %v3524
      %v3534 = vmul.f32 %v3397, %v3524
      %v3535 = vmul.f32 %v3398, %v3524
      %v3536 = vmul.f32 %v3399, %v3524
      %v3537 = vmul.f32 %v3400, %v3524
      %v3538 = vmul.f32 %v3401, %v3524
      %v3539 = vmul.f32 %v3402, %v3524
      %v3540 = vmul.f32 %v3403, %v3524
      %v3541 = vmul.f32 %v3404, %v3524
      %v3542 = vmul.f32 %v3405, %v3524
      %v3543 = vmul.f32 %v3406, %v3524
      %v3544 = vmul.f32 %v3407, %v3524
      %v3545 = vmul.f32 %v3408, %v3524
      %v3546 = vmul.f32 %v3409, %v3524
      %v3547 = vmul.f32 %v3410, %v3524
      %v3548 = vmul.f32 %v3411, %v3524
      %v3549 = vmul.f32 %v3412, %v3524
      %v3550 = vmul.f32 %v3413, %v3524
      %v3551 = vmul.f32 %v3414, %v3524
      %v3552 = vmul.f32 %v3415, %v3524
      %v3553 = vmul.f32 %v3416, %v3524
      %v3554 = vmul.f32 %v3417, %v3524
      %v3555 = vmul.f32 %v3418, %v3524
      %v3556 = vmul.f32 %v3419, %v3524
      %v3557 = vmul.f32 %v3420, %v3524
      %v3559 = vlaneseq
      %v3560 = vshrl.u32 %v3559, 7
      %v3561 = vsub.s32 0, %v3560
      %v3562 = vrot.slane %v3518, %v3561
      %v3564 = vmul.f32 %v3293, %v3562
      %v3565 = vmul.f32 %v3294, %v3562
      %v3566 = vmul.f32 %v3295, %v3562
      %v3567 = vmul.f32 %v3296, %v3562
      %v3568 = vmul.f32 %v3297, %v3562
      %v3569 = vmul.f32 %v3298, %v3562
      %v3570 = vmul.f32 %v3299, %v3562
      %v3571 = vmul.f32 %v3300, %v3562
      %v3572 = vmul.f32 %v3301, %v3562
      %v3573 = vmul.f32 %v3302, %v3562
      %v3574 = vmul.f32 %v3303, %v3562
      %v3575 = vmul.f32 %v3304, %v3562
      %v3576 = vmul.f32 %v3305, %v3562
      %v3577 = vmul.f32 %v3306, %v3562
      %v3578 = vmul.f32 %v3307, %v3562
      %v3579 = vmul.f32 %v3308, %v3562
      %v3580 = vmul.f32 %v3309, %v3562
      %v3581 = vmul.f32 %v3310, %v3562
      %v3582 = vmul.f32 %v3311, %v3562
      %v3583 = vmul.f32 %v3312, %v3562
      %v3584 = vmul.f32 %v3313, %v3562
      %v3585 = vmul.f32 %v3314, %v3562
      %v3586 = vmul.f32 %v3315, %v3562
      %v3587 = vmul.f32 %v3316, %v3562
      %v3588 = vmul.f32 %v3317, %v3562
      %v3589 = vmul.f32 %v3318, %v3562
      %v3590 = vmul.f32 %v3319, %v3562
      %v3591 = vmul.f32 %v3320, %v3562
      %v3592 = vmul.f32 %v3321, %v3562
      %v3593 = vmul.f32 %v3322, %v3562
      %v3594 = vmul.f32 %v3323, %v3562
      %v3595 = vmul.f32 %v3324, %v3562
      %v3596 = vadd.f32 %v3526, %v3564
      %v3597 = vadd.f32 %v3527, %v3565
      %v3598 = vadd.f32 %v3528, %v3566
      %v3599 = vadd.f32 %v3529, %v3567
      %v3600 = vadd.f32 %v3530, %v3568
      %v3601 = vadd.f32 %v3531, %v3569
      %v3602 = vadd.f32 %v3532, %v3570
      %v3603 = vadd.f32 %v3533, %v3571
      %v3604 = vadd.f32 %v3534, %v3572
      %v3605 = vadd.f32 %v3535, %v3573
      %v3606 = vadd.f32 %v3536, %v3574
      %v3607 = vadd.f32 %v3537, %v3575
      %v3608 = vadd.f32 %v3538, %v3576
      %v3609 = vadd.f32 %v3539, %v3577
      %v3610 = vadd.f32 %v3540, %v3578
      %v3611 = vadd.f32 %v3541, %v3579
      %v3612 = vadd.f32 %v3542, %v3580
      %v3613 = vadd.f32 %v3543, %v3581
      %v3614 = vadd.f32 %v3544, %v3582
      %v3615 = vadd.f32 %v3545, %v3583
      %v3616 = vadd.f32 %v3546, %v3584
      %v3617 = vadd.f32 %v3547, %v3585
      %v3618 = vadd.f32 %v3548, %v3586
      %v3619 = vadd.f32 %v3549, %v3587
      %v3620 = vadd.f32 %v3550, %v3588
      %v3621 = vadd.f32 %v3551, %v3589
      %v3622 = vadd.f32 %v3552, %v3590
      %v3623 = vadd.f32 %v3553, %v3591
      %v3624 = vadd.f32 %v3554, %v3592
      %v3625 = vadd.f32 %v3555, %v3593
      %v3626 = vadd.f32 %v3556, %v3594
      %v3627 = vadd.f32 %v3557, %v3595
      %v3629 = vlaneseq
      %v3630 = vshrl.u32 %v3629, 7
      %v3631 = vsub.s32 0, %v3630
      %v3632 = vrot.slane %v3519, %v3631
      %v3634 = vmul.f32 %v3485, %v3632
      %v3635 = vmul.f32 %v3486, %v3632
      %v3636 = vmul.f32 %v3487, %v3632
      %v3637 = vmul.f32 %v3488, %v3632
      %v3638 = vmul.f32 %v3489, %v3632
      %v3639 = vmul.f32 %v3490, %v3632
      %v3640 = vmul.f32 %v3491, %v3632
      %v3641 = vmul.f32 %v3492, %v3632
      %v3642 = vmul.f32 %v3493, %v3632
      %v3643 = vmul.f32 %v3494, %v3632
      %v3644 = vmul.f32 %v3495, %v3632
      %v3645 = vmul.f32 %v3496, %v3632
      %v3646 = vmul.f32 %v3497, %v3632
      %v3647 = vmul.f32 %v3498, %v3632
      %v3648 = vmul.f32 %v3499, %v3632
      %v3649 = vmul.f32 %v3500, %v3632
      %v3650 = vmul.f32 %v3501, %v3632
      %v3651 = vmul.f32 %v3502, %v3632
      %v3652 = vmul.f32 %v3503, %v3632
      %v3653 = vmul.f32 %v3504, %v3632
      %v3654 = vmul.f32 %v3505, %v3632
      %v3655 = vmul.f32 %v3506, %v3632
      %v3656 = vmul.f32 %v3507, %v3632
      %v3657 = vmul.f32 %v3508, %v3632
      %v3658 = vmul.f32 %v3509, %v3632
      %v3659 = vmul.f32 %v3510, %v3632
      %v3660 = vmul.f32 %v3511, %v3632
      %v3661 = vmul.f32 %v3512, %v3632
      %v3662 = vmul.f32 %v3513, %v3632
      %v3663 = vmul.f32 %v3514, %v3632
      %v3664 = vmul.f32 %v3515, %v3632
      %v3665 = vmul.f32 %v3516, %v3632
      %v3666 = vadd.f32 %v3596, %v3634
      %v3667 = vadd.f32 %v3597, %v3635
      %v3668 = vadd.f32 %v3598, %v3636
      %v3669 = vadd.f32 %v3599, %v3637
      %v3670 = vadd.f32 %v3600, %v3638
      %v3671 = vadd.f32 %v3601, %v3639
      %v3672 = vadd.f32 %v3602, %v3640
      %v3673 = vadd.f32 %v3603, %v3641
      %v3674 = vadd.f32 %v3604, %v3642
      %v3675 = vadd.f32 %v3605, %v3643
      %v3676 = vadd.f32 %v3606, %v3644
      %v3677 = vadd.f32 %v3607, %v3645
      %v3678 = vadd.f32 %v3608, %v3646
      %v3679 = vadd.f32 %v3609, %v3647
      %v3680 = vadd.f32 %v3610, %v3648
      %v3681 = vadd.f32 %v3611, %v3649
      %v3682 = vadd.f32 %v3612, %v3650
      %v3683 = vadd.f32 %v3613, %v3651
      %v3684 = vadd.f32 %v3614, %v3652
      %v3685 = vadd.f32 %v3615, %v3653
      %v3686 = vadd.f32 %v3616, %v3654
      %v3687 = vadd.f32 %v3617, %v3655
      %v3688 = vadd.f32 %v3618, %v3656
      %v3689 = vadd.f32 %v3619, %v3657
      %v3690 = vadd.f32 %v3620, %v3658
      %v3691 = vadd.f32 %v3621, %v3659
      %v3692 = vadd.f32 %v3622, %v3660
      %v3693 = vadd.f32 %v3623, %v3661
      %v3694 = vadd.f32 %v3624, %v3662
      %v3695 = vadd.f32 %v3625, %v3663
      %v3696 = vadd.f32 %v3626, %v3664
      %v3697 = vadd.f32 %v3627, %v3665
      %vm3698 = vcmask 523264
      %v3699 = vsel %vm3698, %v3666, 0.0
      %3700 = vadd.xlane.f32.xlu0 %v3699
      %v3701 = vpop.xlane.xlu0 %3700
      %v3702 = vsel %vm3698, %v3667, 0.0
      %3703 = vadd.xlane.f32.xlu0 %v3702
      %v3704 = vpop.xlane.xlu0 %3703
      %v3705 = vsel %vm3698, %v3668, 0.0
      %3706 = vadd.xlane.f32.xlu0 %v3705
      %v3707 = vpop.xlane.xlu0 %3706
      %v3708 = vsel %vm3698, %v3669, 0.0
      %3709 = vadd.xlane.f32.xlu0 %v3708
      %v3710 = vpop.xlane.xlu0 %3709
      %v3711 = vsel %vm3698, %v3670, 0.0
      %3712 = vadd.xlane.f32.xlu0 %v3711
      %v3713 = vpop.xlane.xlu0 %3712
      %v3714 = vsel %vm3698, %v3671, 0.0
      %3715 = vadd.xlane.f32.xlu0 %v3714
      %v3716 = vpop.xlane.xlu0 %3715
      %v3717 = vsel %vm3698, %v3672, 0.0
      %3718 = vadd.xlane.f32.xlu0 %v3717
      %v3719 = vpop.xlane.xlu0 %3718
      %v3720 = vsel %vm3698, %v3673, 0.0
      %3721 = vadd.xlane.f32.xlu0 %v3720
      %v3722 = vpop.xlane.xlu0 %3721
      %v3723 = vsel %vm3698, %v3674, 0.0
      %3724 = vadd.xlane.f32.xlu0 %v3723
      %v3725 = vpop.xlane.xlu0 %3724
      %v3726 = vsel %vm3698, %v3675, 0.0
      %3727 = vadd.xlane.f32.xlu0 %v3726
      %v3728 = vpop.xlane.xlu0 %3727
      %v3729 = vsel %vm3698, %v3676, 0.0
      %3730 = vadd.xlane.f32.xlu0 %v3729
      %v3731 = vpop.xlane.xlu0 %3730
      %v3732 = vsel %vm3698, %v3677, 0.0
      %3733 = vadd.xlane.f32.xlu0 %v3732
      %v3734 = vpop.xlane.xlu0 %3733
      %v3735 = vsel %vm3698, %v3678, 0.0
      %3736 = vadd.xlane.f32.xlu0 %v3735
      %v3737 = vpop.xlane.xlu0 %3736
      %v3738 = vsel %vm3698, %v3679, 0.0
      %3739 = vadd.xlane.f32.xlu0 %v3738
      %v3740 = vpop.xlane.xlu0 %3739
      %v3741 = vsel %vm3698, %v3680, 0.0
      %3742 = vadd.xlane.f32.xlu0 %v3741
      %v3743 = vpop.xlane.xlu0 %3742
      %v3744 = vsel %vm3698, %v3681, 0.0
      %3745 = vadd.xlane.f32.xlu0 %v3744
      %v3746 = vpop.xlane.xlu0 %3745
      %v3747 = vsel %vm3698, %v3682, 0.0
      %3748 = vadd.xlane.f32.xlu0 %v3747
      %v3749 = vpop.xlane.xlu0 %3748
      %v3750 = vsel %vm3698, %v3683, 0.0
      %3751 = vadd.xlane.f32.xlu0 %v3750
      %v3752 = vpop.xlane.xlu0 %3751
      %v3753 = vsel %vm3698, %v3684, 0.0
      %3754 = vadd.xlane.f32.xlu0 %v3753
      %v3755 = vpop.xlane.xlu0 %3754
      %v3756 = vsel %vm3698, %v3685, 0.0
      %3757 = vadd.xlane.f32.xlu0 %v3756
      %v3758 = vpop.xlane.xlu0 %3757
      %v3759 = vsel %vm3698, %v3686, 0.0
      %3760 = vadd.xlane.f32.xlu0 %v3759
      %v3761 = vpop.xlane.xlu0 %3760
      %v3762 = vsel %vm3698, %v3687, 0.0
      %3763 = vadd.xlane.f32.xlu0 %v3762
      %v3764 = vpop.xlane.xlu0 %3763
      %v3765 = vsel %vm3698, %v3688, 0.0
      %3766 = vadd.xlane.f32.xlu0 %v3765
      %v3767 = vpop.xlane.xlu0 %3766
      %v3768 = vsel %vm3698, %v3689, 0.0
      %3769 = vadd.xlane.f32.xlu0 %v3768
      %v3770 = vpop.xlane.xlu0 %3769
      %v3771 = vsel %vm3698, %v3690, 0.0
      %3772 = vadd.xlane.f32.xlu0 %v3771
      %v3773 = vpop.xlane.xlu0 %3772
      %v3774 = vsel %vm3698, %v3691, 0.0
      %3775 = vadd.xlane.f32.xlu0 %v3774
      %v3776 = vpop.xlane.xlu0 %3775
      %v3777 = vsel %vm3698, %v3692, 0.0
      %3778 = vadd.xlane.f32.xlu0 %v3777
      %v3779 = vpop.xlane.xlu0 %3778
      %v3780 = vsel %vm3698, %v3693, 0.0
      %3781 = vadd.xlane.f32.xlu0 %v3780
      %v3782 = vpop.xlane.xlu0 %3781
      %v3783 = vsel %vm3698, %v3694, 0.0
      %3784 = vadd.xlane.f32.xlu0 %v3783
      %v3785 = vpop.xlane.xlu0 %3784
      %v3786 = vsel %vm3698, %v3695, 0.0
      %3787 = vadd.xlane.f32.xlu0 %v3786
      %v3788 = vpop.xlane.xlu0 %3787
      %v3789 = vsel %vm3698, %v3696, 0.0
      %3790 = vadd.xlane.f32.xlu0 %v3789
      %v3791 = vpop.xlane.xlu0 %3790
      %v3792 = vsel %vm3698, %v3697, 0.0
      %3793 = vadd.xlane.f32.xlu0 %v3792
      %v3794 = vpop.xlane.xlu0 %3793
      %v3795 = vld [vmem:[#allocation2] sm:$0x1]
      %v3797 = vlaneseq
      %v3798 = vshrl.u32 %v3797, 7
      %v3799 = vsub.s32 0, %v3798
      %v3800 = vrot.slane %v3795, %v3799
      %v3802 = vadd.f32 %v3701, %v3800
      %v3803 = vadd.f32 %v3704, %v3800
      %v3804 = vadd.f32 %v3707, %v3800
      %v3805 = vadd.f32 %v3710, %v3800
      %v3806 = vadd.f32 %v3713, %v3800
      %v3807 = vadd.f32 %v3716, %v3800
      %v3808 = vadd.f32 %v3719, %v3800
      %v3809 = vadd.f32 %v3722, %v3800
      %v3810 = vadd.f32 %v3725, %v3800
      %v3811 = vadd.f32 %v3728, %v3800
      %v3812 = vadd.f32 %v3731, %v3800
      %v3813 = vadd.f32 %v3734, %v3800
      %v3814 = vadd.f32 %v3737, %v3800
      %v3815 = vadd.f32 %v3740, %v3800
      %v3816 = vadd.f32 %v3743, %v3800
      %v3817 = vadd.f32 %v3746, %v3800
      %v3818 = vadd.f32 %v3749, %v3800
      %v3819 = vadd.f32 %v3752, %v3800
      %v3820 = vadd.f32 %v3755, %v3800
      %v3821 = vadd.f32 %v3758, %v3800
      %v3822 = vadd.f32 %v3761, %v3800
      %v3823 = vadd.f32 %v3764, %v3800
      %v3824 = vadd.f32 %v3767, %v3800
      %v3825 = vadd.f32 %v3770, %v3800
      %v3826 = vadd.f32 %v3773, %v3800
      %v3827 = vadd.f32 %v3776, %v3800
      %v3828 = vadd.f32 %v3779, %v3800
      %v3829 = vadd.f32 %v3782, %v3800
      %v3830 = vadd.f32 %v3785, %v3800
      %v3831 = vadd.f32 %v3788, %v3800
      %v3832 = vadd.f32 %v3791, %v3800
      %v3833 = vadd.f32 %v3794, %v3800
      %v3834 = vxor.u32 %v3802, 2147483648
      %v3835 = vxor.u32 %v3803, 2147483648
      %v3836 = vxor.u32 %v3804, 2147483648
      %v3837 = vxor.u32 %v3805, 2147483648
      %v3838 = vxor.u32 %v3806, 2147483648
      %v3839 = vxor.u32 %v3807, 2147483648
      %v3840 = vxor.u32 %v3808, 2147483648
      %v3841 = vxor.u32 %v3809, 2147483648
      %v3842 = vxor.u32 %v3810, 2147483648
      %v3843 = vxor.u32 %v3811, 2147483648
      %v3844 = vxor.u32 %v3812, 2147483648
      %v3845 = vxor.u32 %v3813, 2147483648
      %v3846 = vxor.u32 %v3814, 2147483648
      %v3847 = vxor.u32 %v3815, 2147483648
      %v3848 = vxor.u32 %v3816, 2147483648
      %v3849 = vxor.u32 %v3817, 2147483648
      %v3850 = vxor.u32 %v3818, 2147483648
      %v3851 = vxor.u32 %v3819, 2147483648
      %v3852 = vxor.u32 %v3820, 2147483648
      %v3853 = vxor.u32 %v3821, 2147483648
      %v3854 = vxor.u32 %v3822, 2147483648
      %v3855 = vxor.u32 %v3823, 2147483648
      %v3856 = vxor.u32 %v3824, 2147483648
      %v3857 = vxor.u32 %v3825, 2147483648
      %v3858 = vxor.u32 %v3826, 2147483648
      %v3859 = vxor.u32 %v3827, 2147483648
      %v3860 = vxor.u32 %v3828, 2147483648
      %v3861 = vxor.u32 %v3829, 2147483648
      %v3862 = vxor.u32 %v3830, 2147483648
      %v3863 = vxor.u32 %v3831, 2147483648
      %v3864 = vxor.u32 %v3832, 2147483648
      %v3865 = vxor.u32 %v3833, 2147483648
      %v3866 = vmul.f32 %v3834, 1.442695
      %v3867 = vpow.pop %v3866
      %v3868 = vmul.f32 %v3835, 1.442695
      %v3869 = vpow.pop %v3868
      %v3870 = vmul.f32 %v3836, 1.442695
      %v3871 = vpow.pop %v3870
      %v3872 = vmul.f32 %v3837, 1.442695
      %v3873 = vpow.pop %v3872
      %v3874 = vmul.f32 %v3838, 1.442695
      %v3875 = vpow.pop %v3874
      %v3876 = vmul.f32 %v3839, 1.442695
      %v3877 = vpow.pop %v3876
      %v3878 = vmul.f32 %v3840, 1.442695
      %v3879 = vpow.pop %v3878
      %v3880 = vmul.f32 %v3841, 1.442695
      %v3881 = vpow.pop %v3880
      %v3882 = vmul.f32 %v3842, 1.442695
      %v3883 = vpow.pop %v3882
      %v3884 = vmul.f32 %v3843, 1.442695
      %v3885 = vpow.pop %v3884
      %v3886 = vmul.f32 %v3844, 1.442695
      %v3887 = vpow.pop %v3886
      %v3888 = vmul.f32 %v3845, 1.442695
      %v3889 = vpow.pop %v3888
      %v3890 = vmul.f32 %v3846, 1.442695
      %v3891 = vpow.pop %v3890
      %v3892 = vmul.f32 %v3847, 1.442695
      %v3893 = vpow.pop %v3892
      %v3894 = vmul.f32 %v3848, 1.442695
      %v3895 = vpow.pop %v3894
      %v3896 = vmul.f32 %v3849, 1.442695
      %v3897 = vpow.pop %v3896
      %v3898 = vmul.f32 %v3850, 1.442695
      %v3899 = vpow.pop %v3898
      %v3900 = vmul.f32 %v3851, 1.442695
      %v3901 = vpow.pop %v3900
      %v3902 = vmul.f32 %v3852, 1.442695
      %v3903 = vpow.pop %v3902
      %v3904 = vmul.f32 %v3853, 1.442695
      %v3905 = vpow.pop %v3904
      %v3906 = vmul.f32 %v3854, 1.442695
      %v3907 = vpow.pop %v3906
      %v3908 = vmul.f32 %v3855, 1.442695
      %v3909 = vpow.pop %v3908
      %v3910 = vmul.f32 %v3856, 1.442695
      %v3911 = vpow.pop %v3910
      %v3912 = vmul.f32 %v3857, 1.442695
      %v3913 = vpow.pop %v3912
      %v3914 = vmul.f32 %v3858, 1.442695
      %v3915 = vpow.pop %v3914
      %v3916 = vmul.f32 %v3859, 1.442695
      %v3917 = vpow.pop %v3916
      %v3918 = vmul.f32 %v3860, 1.442695
      %v3919 = vpow.pop %v3918
      %v3920 = vmul.f32 %v3861, 1.442695
      %v3921 = vpow.pop %v3920
      %v3922 = vmul.f32 %v3862, 1.442695
      %v3923 = vpow.pop %v3922
      %v3924 = vmul.f32 %v3863, 1.442695
      %v3925 = vpow.pop %v3924
      %v3926 = vmul.f32 %v3864, 1.442695
      %v3927 = vpow.pop %v3926
      %v3928 = vmul.f32 %v3865, 1.442695
      %v3929 = vpow.pop %v3928
      %v3930 = vadd.f32 %v3867, 1.0
      %v3931 = vadd.f32 %v3869, 1.0
      %v3932 = vadd.f32 %v3871, 1.0
      %v3933 = vadd.f32 %v3873, 1.0
      %v3934 = vadd.f32 %v3875, 1.0
      %v3935 = vadd.f32 %v3877, 1.0
      %v3936 = vadd.f32 %v3879, 1.0
      %v3937 = vadd.f32 %v3881, 1.0
      %v3938 = vadd.f32 %v3883, 1.0
      %v3939 = vadd.f32 %v3885, 1.0
      %v3940 = vadd.f32 %v3887, 1.0
      %v3941 = vadd.f32 %v3889, 1.0
      %v3942 = vadd.f32 %v3891, 1.0
      %v3943 = vadd.f32 %v3893, 1.0
      %v3944 = vadd.f32 %v3895, 1.0
      %v3945 = vadd.f32 %v3897, 1.0
      %v3946 = vadd.f32 %v3899, 1.0
      %v3947 = vadd.f32 %v3901, 1.0
      %v3948 = vadd.f32 %v3903, 1.0
      %v3949 = vadd.f32 %v3905, 1.0
      %v3950 = vadd.f32 %v3907, 1.0
      %v3951 = vadd.f32 %v3909, 1.0
      %v3952 = vadd.f32 %v3911, 1.0
      %v3953 = vadd.f32 %v3913, 1.0
      %v3954 = vadd.f32 %v3915, 1.0
      %v3955 = vadd.f32 %v3917, 1.0
      %v3956 = vadd.f32 %v3919, 1.0
      %v3957 = vadd.f32 %v3921, 1.0
      %v3958 = vadd.f32 %v3923, 1.0
      %v3959 = vadd.f32 %v3925, 1.0
      %v3960 = vadd.f32 %v3927, 1.0
      %v3961 = vadd.f32 %v3929, 1.0
      %v3962 = vrcp.pop %v3930
      %v3963 = vmul.f32 1.0, %v3962
      %v3964 = vrcp.pop %v3931
      %v3965 = vmul.f32 1.0, %v3964
      %v3966 = vrcp.pop %v3932
      %v3967 = vmul.f32 1.0, %v3966
      %v3968 = vrcp.pop %v3933
      %v3969 = vmul.f32 1.0, %v3968
      %v3970 = vrcp.pop %v3934
      %v3971 = vmul.f32 1.0, %v3970
      %v3972 = vrcp.pop %v3935
      %v3973 = vmul.f32 1.0, %v3972
      %v3974 = vrcp.pop %v3936
      %v3975 = vmul.f32 1.0, %v3974
      %v3976 = vrcp.pop %v3937
      %v3977 = vmul.f32 1.0, %v3976
      %v3978 = vrcp.pop %v3938
      %v3979 = vmul.f32 1.0, %v3978
      %v3980 = vrcp.pop %v3939
      %v3981 = vmul.f32 1.0, %v3980
      %v3982 = vrcp.pop %v3940
      %v3983 = vmul.f32 1.0, %v3982
      %v3984 = vrcp.pop %v3941
      %v3985 = vmul.f32 1.0, %v3984
      %v3986 = vrcp.pop %v3942
      %v3987 = vmul.f32 1.0, %v3986
      %v3988 = vrcp.pop %v3943
      %v3989 = vmul.f32 1.0, %v3988
      %v3990 = vrcp.pop %v3944
      %v3991 = vmul.f32 1.0, %v3990
      %v3992 = vrcp.pop %v3945
      %v3993 = vmul.f32 1.0, %v3992
      %v3994 = vrcp.pop %v3946
      %v3995 = vmul.f32 1.0, %v3994
      %v3996 = vrcp.pop %v3947
      %v3997 = vmul.f32 1.0, %v3996
      %v3998 = vrcp.pop %v3948
      %v3999 = vmul.f32 1.0, %v3998
      %v4000 = vrcp.pop %v3949
      %v4001 = vmul.f32 1.0, %v4000
      %v4002 = vrcp.pop %v3950
      %v4003 = vmul.f32 1.0, %v4002
      %v4004 = vrcp.pop %v3951
      %v4005 = vmul.f32 1.0, %v4004
      %v4006 = vrcp.pop %v3952
      %v4007 = vmul.f32 1.0, %v4006
      %v4008 = vrcp.pop %v3953
      %v4009 = vmul.f32 1.0, %v4008
      %v4010 = vrcp.pop %v3954
      %v4011 = vmul.f32 1.0, %v4010
      %v4012 = vrcp.pop %v3955
      %v4013 = vmul.f32 1.0, %v4012
      %v4014 = vrcp.pop %v3956
      %v4015 = vmul.f32 1.0, %v4014
      %v4016 = vrcp.pop %v3957
      %v4017 = vmul.f32 1.0, %v4016
      %v4018 = vrcp.pop %v3958
      %v4019 = vmul.f32 1.0, %v4018
      %v4020 = vrcp.pop %v3959
      %v4021 = vmul.f32 1.0, %v4020
      %v4022 = vrcp.pop %v3960
      %v4023 = vmul.f32 1.0, %v4022
      %v4024 = vrcp.pop %v3961
      %v4025 = vmul.f32 1.0, %v4024
      %vm4026 = vcmask 7168
      %4027 = vst.msk [vmem:[%s282] sm:$0xff] %vm4026, %v3963
      %4028 = vst.msk [vmem:[%s282 + $0x8] sm:$0xff] %vm4026, %v3965
      %4029 = vst.msk [vmem:[%s282 + $0x10] sm:$0xff] %vm4026, %v3967
      %4030 = vst.msk [vmem:[%s282 + $0x18] sm:$0xff] %vm4026, %v3969
      %4031 = vst.msk [vmem:[%s282 + $0x20] sm:$0xff] %vm4026, %v3971
      %4032 = vst.msk [vmem:[%s282 + $0x28] sm:$0xff] %vm4026, %v3973
      %4033 = vst.msk [vmem:[%s282 + $0x30] sm:$0xff] %vm4026, %v3975
      %4034 = vst.msk [vmem:[%s282 + $0x38] sm:$0xff] %vm4026, %v3977
      %4035 = vst.msk [vmem:[%s282 + $0x40] sm:$0xff] %vm4026, %v3979
      %4036 = vst.msk [vmem:[%s282 + $0x48] sm:$0xff] %vm4026, %v3981
      %4037 = vst.msk [vmem:[%s282 + $0x50] sm:$0xff] %vm4026, %v3983
      %4038 = vst.msk [vmem:[%s282 + $0x58] sm:$0xff] %vm4026, %v3985
      %4039 = vst.msk [vmem:[%s282 + $0x60] sm:$0xff] %vm4026, %v3987
      %4040 = vst.msk [vmem:[%s282 + $0x68] sm:$0xff] %vm4026, %v3989
      %4041 = vst.msk [vmem:[%s282 + $0x70] sm:$0xff] %vm4026, %v3991
      %4042 = vst.msk [vmem:[%s282 + $0x78] sm:$0xff] %vm4026, %v3993
      %4043 = vst.msk [vmem:[%s282 + $0x80] sm:$0xff] %vm4026, %v3995
      %4044 = vst.msk [vmem:[%s282 + $0x88] sm:$0xff] %vm4026, %v3997
      %4045 = vst.msk [vmem:[%s282 + $0x90] sm:$0xff] %vm4026, %v3999
      %4046 = vst.msk [vmem:[%s282 + $0x98] sm:$0xff] %vm4026, %v4001
      %4047 = vst.msk [vmem:[%s282 + $0xa0] sm:$0xff] %vm4026, %v4003
      %4048 = vst.msk [vmem:[%s282 + $0xa8] sm:$0xff] %vm4026, %v4005
      %4049 = vst.msk [vmem:[%s282 + $0xb0] sm:$0xff] %vm4026, %v4007
      %4050 = vst.msk [vmem:[%s282 + $0xb8] sm:$0xff] %vm4026, %v4009
      %4051 = vst.msk [vmem:[%s282 + $0xc0] sm:$0xff] %vm4026, %v4011
      %4052 = vst.msk [vmem:[%s282 + $0xc8] sm:$0xff] %vm4026, %v4013
      %4053 = vst.msk [vmem:[%s282 + $0xd0] sm:$0xff] %vm4026, %v4015
      %4054 = vst.msk [vmem:[%s282 + $0xd8] sm:$0xff] %vm4026, %v4017
      %4055 = vst.msk [vmem:[%s282 + $0xe0] sm:$0xff] %vm4026, %v4019
      %4056 = vst.msk [vmem:[%s282 + $0xe8] sm:$0xff] %vm4026, %v4021
      %4057 = vst.msk [vmem:[%s282 + $0xf0] sm:$0xff] %vm4026, %v4023
      %4058 = vst.msk [vmem:[%s282 + $0xf8] sm:$0xff] %vm4026, %v4025
      %s4059 = smul.u32 32, %s20
      %p4060 = scmp.lt.s32.totalorder %s4059, 63
      %s4061 = scalar_select %p4060, %s4059, 63
      %s4062 = smul.addr %s4061, 8
      %s4063 = scalar_lea.vmem %s7, %s4062
      // Predicated region
      $region56: #{tpu_custom_call.1} parent=47 // pred_check
        %p4064 = pneg %p190
      $region57: #{tpu_custom_call.1} parent=47 // pred_check_branch
        %4066 = sbr.rel (%p4064) target = $region59
      $region58: #{tpu_custom_call.1} parent=47 // pred_region
        %s4067 = smul.u32 32, %s20
      $region59: #{tpu_custom_call.1} parent=47 // pred_fallthru
        _
    $region48: #{tpu_custom_call.1} parent=5 // pred_fallthru
      _
    %p4068 = scmp.le.s32.totalorder 2, %s15
    // Predicated region
    $region60: #{tpu_custom_call.1} parent=5 // pred_check
      %p4069 = pneg %p4068
    $region61: #{tpu_custom_call.1} parent=5 // pred_check_branch
      %4071 = sbr.rel (%p4069) target = $region63
    $region62: #{tpu_custom_call.1} parent=5 // pred_region
      %s4072 = ssub.s32 %s15, 2
      // Predicated region
      $region64: #{tpu_custom_call.1} parent=62 // pred_check
        %p4073 = pneg %p196
      $region65: #{tpu_custom_call.1} parent=62 // pred_check_branch
        %4075 = sbr.rel (%p4073) target = $region67
      $region66: #{tpu_custom_call.1} parent=62 // pred_region
        %s4076 = smul.u32 32, %s21
        %p4077 = scmp.lt.s32.totalorder %s4076, 63
        %s4078 = scalar_select %p4077, %s4076, 63
        %s4079 = smul.addr %s4078, 8
        %s4080 = scalar_lea.vmem %s7, %s4079
      $region67: #{tpu_custom_call.1} parent=62 // pred_fallthru
        _
    $region63: #{tpu_custom_call.1} parent=5 // pred_fallthru
      _
  $region6: #{tpu_custom_call.1} parent=0 // loop_footer
    %s19 = sadd.s32 1, %s15
  $region7: #{tpu_custom_call.1} parent=0 // loop_footer_branch
    %14 = sbr.rel target = $region3
  $region8: #{tpu_custom_call.1} parent=0 // loop_exit
    _

</llo_original>
